<compile_context>
chip_gen: v7x
topology: tpu7x:2x2x1
jax: 0.10.0
libtpu: 0.0.40
codegen_flags: <defaults>
</compile_context>

<pallas_src>
import math

import jax
import jax.numpy as jnp
from jax.experimental import pallas as pl
from jax.experimental.pallas import tpu as pltpu

NEG = -1.0e12  # '-inf' replacement used by sequence_masking


# ---------------------------------------------------------------------------
# Kernel: one grid step = (batch b, query-row tile i).
#   out[b, o, x, y] = sum_{a,c} x[x,a] W1[a,o,c] x[y,c]
#                     + x[x]·W2[:H,o] + x[y]·W2[H:2H,o] + W2[2H,o]
#   then fused sequence masking on both axes and strict-lower-tri 1e12 penalty.
# ---------------------------------------------------------------------------
def biaffine_kernel(xq_ref, xkt_ref, w1_ref, w2q_ref, w2kt_ref, bias_ref,
                    mrow_ref, mcol_ref, out_ref):
    xq = xq_ref[0]            # (TM, H)   compute dtype (bf16)
    xkt = xkt_ref[0]          # (H, L)    compute dtype, keys already transposed
    w1 = w1_ref[...]          # (H, O*H)  lane-dense weight1
    w2q = w2q_ref[...]        # (H, O)    query half of weight2
    w2kt = w2kt_ref[...]      # (O, H)    key half of weight2 (pre-transposed)
    bias = bias_ref[...]      # (1, O)    f32 bias row of weight2

    TM, H = xq.shape
    L = xkt.shape[1]
    O = w2q.shape[1]

    # ---- t[x, o*H + c] = sum_a xq[x,a] * W1[a,o,c]  (one wide MXU dot) -----
    t = jnp.dot(xq, w1, preferred_element_type=jnp.float32)        # (TM, O*H) f32
    t_lo = t.astype(xq.dtype)                                      # bf16 for MXU reuse

    # ---- affine terms, already in output-friendly layouts ------------------
    left = jnp.dot(xq, w2q, preferred_element_type=jnp.float32) + bias    # (TM, O)
    right_t = jnp.dot(w2kt, xkt, preferred_element_type=jnp.float32)      # (O, L)

    # ---- masking terms: computed once per tile, reused for every o ---------
    valid = (mcol_ref[0] * mrow_ref[0]) > 0.5                      # (TM,1)*(1,L) -> (TM,L) bool
    row = jax.lax.broadcasted_iota(jnp.int32, (TM, L), 0) + pl.program_id(1) * TM
    col = jax.lax.broadcasted_iota(jnp.int32, (TM, L), 1)
    tril_pen = jnp.where(row > col, jnp.float32(1.0e12), jnp.float32(0.0))

    # ---- per-o slab: MXU dot in output layout, masked, stored immediately --
    for o in range(O):        # O is static; each slab is stored right away
        s = jnp.dot(t_lo[:, o * H:(o + 1) * H], xkt,
                    preferred_element_type=jnp.float32)            # (TM, L) f32
        s = s + left[:, o:o + 1] + right_t[o:o + 1, :]
        out_ref[0, o] = jnp.where(valid, s, NEG) - tril_pen


# ---------------------------------------------------------------------------
# Glue: optional sinusoidal position embedding + pallas_call wrapper.
# ---------------------------------------------------------------------------
def sinusoidal_position_embedding(seq_len, output_dim):
    pos = jnp.arange(seq_len, dtype=jnp.float32)
    idx = jnp.arange(output_dim // 2, dtype=jnp.float32)
    idx = jnp.power(10000.0, -2.0 * idx / output_dim)
    emb = pos[:, None] * idx[None, :]
    emb = jnp.stack([jnp.sin(emb), jnp.cos(emb)], axis=-1)
    return emb.reshape(seq_len, output_dim)


def biaffine_forward(inputs, weight1, weight2, mask, position=False,
                     compute_dtype=jnp.bfloat16):
    """inputs (B,L,H), weight1 (H,O,H), weight2 (2H+1,O), mask (B,L)."""
    B, L, H = inputs.shape
    O = weight1.shape[1]

    x = inputs.astype(jnp.float32)
    if position:
        x = x + sinusoidal_position_embedding(L, H)[None]

    # query-axis tile (sweepable); untiled when L is not a multiple of 128.
    TM = 128 if (L % 128 == 0 and L > 128) else L
    n_i = L // TM

    # Operands pre-shaped in the wrapper (free XLA-side layout plumbing):
    xq = x.astype(compute_dtype)                                   # (B, L, H)
    xkt = jnp.swapaxes(x, 1, 2).astype(compute_dtype)              # (B, H, L)
    w1_2d = weight1.astype(compute_dtype).reshape(H, O * H)        # lane-dense W1
    w2f = weight2.astype(jnp.float32)
    w2_q = w2f[:H, :].astype(compute_dtype)                        # (H, O)
    w2_kt = jnp.transpose(w2f[H:2 * H, :]).astype(compute_dtype)   # (O, H)
    w2_bias = w2f[2 * H:2 * H + 1, :]                              # (1, O) exact f32

    maskf = mask.astype(jnp.float32)
    mask_row = maskf.reshape(B, 1, L)
    mask_col = maskf.reshape(B, L, 1)

    # Rough working-set estimate -> explicit scoped-VMEM limit with headroom.
    isz = jnp.dtype(compute_dtype).itemsize
    weight_bytes = (H * O * H + 2 * H * O) * isz + O * 4
    stream_bytes = 2 * ((TM * H + H * L) * isz + (L + TM) * 4 + O * TM * L * 4)
    scratch_bytes = TM * O * H * (4 + isz) + 4 * TM * L * 4
    est = 2 * weight_bytes + stream_bytes + scratch_bytes
    vmem_limit = int(min(max(est * 5 // 4, 32 * 1024 * 1024), 112 * 1024 * 1024))

    const2 = lambda b, i: (0, 0)

    def make_call(single_buffer_weights):
        wkwargs = {}
        if single_buffer_weights:
            # constant-index weight blocks: no point double-buffering them
            wkwargs["pipeline_mode"] = pl.Buffered(1)
        grid_spec = pltpu.PrefetchScalarGridSpec(
            num_scalar_prefetch=0,
            grid=(B, n_i),
            in_specs=[
                pl.BlockSpec((1, TM, H), lambda b, i: (b, i, 0)),     # query tile
                pl.BlockSpec((1, H, L), lambda b, i: (b, 0, 0)),      # keys (transposed)
                pl.BlockSpec((H, O * H), const2, **wkwargs),          # W1 (2-D)
                pl.BlockSpec((H, O), const2, **wkwargs),              # W2 query half
                pl.BlockSpec((O, H), const2, **wkwargs),              # W2 key half^T
                pl.BlockSpec((1, O), const2, **wkwargs),              # W2 bias row
                pl.BlockSpec((1, 1, L), lambda b, i: (b, 0, 0)),      # mask as row
                pl.BlockSpec((1, TM, 1), lambda b, i: (b, i, 0)),     # mask as column
            ],
            out_specs=pl.BlockSpec((1, O, TM, L), lambda b, i: (b, 0, i, 0)),
        )
        return pl.pallas_call(
            biaffine_kernel,
            out_shape=jax.ShapeDtypeStruct((B, O, L, L), jnp.float32),
            grid_spec=grid_spec,
            compiler_params=pltpu.CompilerParams(
                dimension_semantics=("parallel", "parallel"),
                vmem_limit_bytes=vmem_limit,
            ),
        )(xq, xkt, w1_2d, w2_q, w2_kt, w2_bias, mask_row, mask_col)

    try:
        return make_call(True)
    except Exception:
        # Fallback: this JAX/Mosaic build rejected pipeline_mode=pl.Buffered(1);
        # run with default double-buffered weight blocks (correct, slightly more VMEM).
        return make_call(False)


# ---------------------------------------------------------------------------
# Pure-JAX f32 reference (mirrors the torch forward verbatim) for validation.
# ---------------------------------------------------------------------------
def biaffine_reference(inputs, weight1, weight2, mask, position=False):
    B, L, H = inputs.shape
    x = inputs.astype(jnp.float32)
    if position:
        x = x + sinusoidal_position_embedding(L, H)[None]

    x1 = jnp.broadcast_to(x[:, None, :, :], (B, L, L, H))
    x2 = jnp.broadcast_to(x[:, :, None, :], (B, L, L, H))
    concat_x = jnp.concatenate([x2, x1, jnp.ones((B, L, L, 1), x.dtype)], axis=-1)

    logits_1 = jnp.einsum("bxi,ioj,byj->bxyo", x, weight1.astype(jnp.float32), x)
    logits_2 = jnp.einsum("bijy,yo->bijo", concat_x, weight2.astype(jnp.float32))
    logits = (logits_1 + logits_2).transpose(0, 3, 1, 2)           # (B, O, L, L)

    m = mask.astype(logits.dtype)
    mi = m[:, None, :, None]
    mj = m[:, None, None, :]
    logits = logits * mi + NEG * (1.0 - mi)
    logits = logits * mj + NEG * (1.0 - mj)

    tril = jnp.tril(jnp.ones((L, L), logits.dtype), k=-1)
    return logits - tril * 1.0e12


def kaiming_uniform(key, shape, fan_in, a=math.sqrt(5)):
    gain = math.sqrt(2.0 / (1.0 + a * a))
    bound = gain * math.sqrt(3.0 / fan_in)
    return jax.random.uniform(key, shape, jnp.float32, -bound, bound)


if __name__ == "__main__":
    B, L, H, O = 2, 16, 32, 8  # batch, seq_len, in_size, out_size

    key = jax.random.PRNGKey(0)
    k_x, k_w1, k_w2 = jax.random.split(key, 3)

    inputs = jax.random.normal(k_x, (B, L, H), dtype=jnp.float32)
    weight1 = kaiming_uniform(k_w1, (H, O, H), fan_in=O * H)
    weight2 = kaiming_uniform(k_w2, (2 * H + 1, O), fan_in=O)

    lengths = jnp.array([16, 11], dtype=jnp.int32)
    mask = (jnp.arange(L)[None, :] < lengths[:, None]).astype(jnp.float32)

    out = biaffine_forward(inputs, weight1, weight2, mask, position=False)
    out = jax.block_until_ready(out)

    ref = biaffine_reference(inputs, weight1, weight2, mask, position=False)
    assert out.shape == (B, O, L, L), out.shape
    err = float(jnp.max(jnp.abs(out - ref)))
    # bf16 MXU inputs vs. f32 reference -> bf16-level tolerance.
    assert jnp.allclose(out, ref, rtol=2e-2, atol=5e-2), err

    print("KERNEL_OK")
</pallas_src>

<mosaic_0001>
module attributes {stable_mosaic.version = 11 : i64} {
  func.func @biaffine_kernel(%arg0: i32, %arg1: i32, %arg2: memref<1x16x32xbf16, #tpu.memory_space<vmem>>, %arg3: memref<1x32x16xbf16, #tpu.memory_space<vmem>>, %arg4: memref<32x256xbf16, #tpu.memory_space<vmem>>, %arg5: memref<32x8xbf16, #tpu.memory_space<vmem>>, %arg6: memref<8x32xbf16, #tpu.memory_space<vmem>>, %arg7: memref<1x8xf32, #tpu.memory_space<vmem>>, %arg8: memref<1x1x16xf32, #tpu.memory_space<vmem>>, %arg9: memref<1x16x1xf32, #tpu.memory_space<vmem>>, %arg10: memref<1x8x16x16xf32, #tpu.memory_space<vmem>>) attributes {dimension_semantics = [#tpu.dimension_semantics<parallel>, #tpu.dimension_semantics<parallel>], iteration_bounds = array<i64: 2, 1>, scalar_prefetch = 0 : i64, scratch_operands = 0 : i64, tpu.core_type = #tpu.core_type<tc>, window_params = [{transform_indices = @transform_0, window_bounds = array<i64: 1, 16, 32>}, {transform_indices = @transform_1, window_bounds = array<i64: 1, 32, 16>}, {pipeline_mode = #tpu.pipeline_mode<synchronous>, transform_indices = @transform_2, window_bounds = array<i64: 32, 256>}, {pipeline_mode = #tpu.pipeline_mode<synchronous>, transform_indices = @transform_3, window_bounds = array<i64: 32, 8>}, {pipeline_mode = #tpu.pipeline_mode<synchronous>, transform_indices = @transform_4, window_bounds = array<i64: 8, 32>}, {pipeline_mode = #tpu.pipeline_mode<synchronous>, transform_indices = @transform_5, window_bounds = array<i64: 1, 8>}, {transform_indices = @transform_6, window_bounds = array<i64: 1, 1, 16>}, {transform_indices = @transform_7, window_bounds = array<i64: 1, 16, 1>}, {transform_indices = @transform_8, window_bounds = array<i64: 1, 8, 16, 16>}]} {
    %c0 = arith.constant 0 : index
    %c0_0 = arith.constant 0 : index
    %c0_1 = arith.constant 0 : index
    %0 = vector.load %arg2[%c0, %c0_0, %c0_1] : memref<1x16x32xbf16, #tpu.memory_space<vmem>>, vector<1x16x32xbf16>
    %1 = vector.shape_cast %0 : vector<1x16x32xbf16> to vector<16x32xbf16>
    %c0_2 = arith.constant 0 : index
    %c0_3 = arith.constant 0 : index
    %c0_4 = arith.constant 0 : index
    %2 = vector.load %arg3[%c0_2, %c0_3, %c0_4] : memref<1x32x16xbf16, #tpu.memory_space<vmem>>, vector<1x32x16xbf16>
    %3 = vector.shape_cast %2 : vector<1x32x16xbf16> to vector<32x16xbf16>
    %c0_5 = arith.constant 0 : index
    %c0_6 = arith.constant 0 : index
    %4 = vector.load %arg4[%c0_5, %c0_6] : memref<32x256xbf16, #tpu.memory_space<vmem>>, vector<32x256xbf16>
    %c0_7 = arith.constant 0 : index
    %c0_8 = arith.constant 0 : index
    %5 = vector.load %arg5[%c0_7, %c0_8] : memref<32x8xbf16, #tpu.memory_space<vmem>>, vector<32x8xbf16>
    %c0_9 = arith.constant 0 : index
    %c0_10 = arith.constant 0 : index
    %6 = vector.load %arg6[%c0_9, %c0_10] : memref<8x32xbf16, #tpu.memory_space<vmem>>, vector<8x32xbf16>
    %c0_11 = arith.constant 0 : index
    %c0_12 = arith.constant 0 : index
    %7 = vector.load %arg7[%c0_11, %c0_12] : memref<1x8xf32, #tpu.memory_space<vmem>>, vector<1x8xf32>
    %cst = arith.constant dense<0.000000e+00> : vector<16x256xf32>
    %8 = tpu.matmul %1, %4, %cst {dimension_numbers = #tpu.dot_dimension_numbers<[1], [0], [0], [1], [0, 0, 1, 1], [], []>} : vector<16x32xbf16>, vector<32x256xbf16>, vector<16x256xf32> -> vector<16x256xf32>
    %9 = arith.truncf %8 : vector<16x256xf32> to vector<16x256xbf16>
    %cst_13 = arith.constant dense<0.000000e+00> : vector<16x8xf32>
    %10 = tpu.matmul %1, %5, %cst_13 {dimension_numbers = #tpu.dot_dimension_numbers<[1], [0], [0], [1], [0, 0, 1, 1], [], []>} : vector<16x32xbf16>, vector<32x8xbf16>, vector<16x8xf32> -> vector<16x8xf32>
    %11 = vector.broadcast %7 : vector<1x8xf32> to vector<16x8xf32>
    %12 = arith.addf %10, %11 : vector<16x8xf32>
    %cst_14 = arith.constant dense<0.000000e+00> : vector<8x16xf32>
    %13 = tpu.matmul %6, %3, %cst_14 {dimension_numbers = #tpu.dot_dimension_numbers<[1], [0], [0], [1], [0, 0, 1, 1], [], []>} : vector<8x32xbf16>, vector<32x16xbf16>, vector<8x16xf32> -> vector<8x16xf32>
    %c0_15 = arith.constant 0 : index
    %c0_16 = arith.constant 0 : index
    %c0_17 = arith.constant 0 : index
    %14 = vector.load %arg9[%c0_15, %c0_16, %c0_17] : memref<1x16x1xf32, #tpu.memory_space<vmem>>, vector<1x16x1xf32>
    %15 = vector.shape_cast %14 : vector<1x16x1xf32> to vector<16x1xf32>
    %c0_18 = arith.constant 0 : index
    %c0_19 = arith.constant 0 : index
    %c0_20 = arith.constant 0 : index
    %16 = vector.load %arg8[%c0_18, %c0_19, %c0_20] : memref<1x1x16xf32, #tpu.memory_space<vmem>>, vector<1x1x16xf32>
    %17 = vector.shape_cast %16 : vector<1x1x16xf32> to vector<1x16xf32>
    %18 = vector.broadcast %15 : vector<16x1xf32> to vector<16x16xf32>
    %19 = vector.broadcast %17 : vector<1x16xf32> to vector<16x16xf32>
    %20 = arith.mulf %18, %19 : vector<16x16xf32>
    %cst_21 = arith.constant 5.000000e-01 : f32
    %21 = vector.broadcast %cst_21 : f32 to vector<16x16xf32>
    %22 = arith.cmpf ogt, %20, %21 : vector<16x16xf32>
    %23 = tpu.iota {dimensions = array<i32: 0>} : vector<16x16xi32>
    %c16_i32 = arith.constant 16 : i32
    %24 = arith.muli %arg1, %c16_i32 : i32
    %25 = vector.broadcast %24 : i32 to vector<16x16xi32>
    %26 = arith.addi %23, %25 : vector<16x16xi32>
    %27 = tpu.iota {dimensions = array<i32: 1>} : vector<16x16xi32>
    %28 = arith.cmpi sgt, %26, %27 : vector<16x16xi32>
    %cst_22 = arith.constant 9.99999995E+11 : f32
    %cst_23 = arith.constant 0.000000e+00 : f32
    %29 = vector.broadcast %cst_22 : f32 to vector<16x16xf32>
    %30 = vector.broadcast %cst_23 : f32 to vector<16x16xf32>
    %31 = arith.select %28, %29, %30 : vector<16x16xi1>, vector<16x16xf32>
    %32 = vector.extract_strided_slice %9 {offsets = [0, 0], sizes = [16, 32], strides = [1, 1]} : vector<16x256xbf16> to vector<16x32xbf16>
    %cst_24 = arith.constant dense<0.000000e+00> : vector<16x16xf32>
    %33 = tpu.matmul %32, %3, %cst_24 {dimension_numbers = #tpu.dot_dimension_numbers<[1], [0], [0], [1], [0, 0, 1, 1], [], []>} : vector<16x32xbf16>, vector<32x16xbf16>, vector<16x16xf32> -> vector<16x16xf32>
    %34 = vector.extract_strided_slice %12 {offsets = [0, 0], sizes = [16, 1], strides = [1, 1]} : vector<16x8xf32> to vector<16x1xf32>
    %35 = vector.broadcast %34 : vector<16x1xf32> to vector<16x16xf32>
    %36 = arith.addf %33, %35 : vector<16x16xf32>
    %37 = vector.extract_strided_slice %13 {offsets = [0, 0], sizes = [1, 16], strides = [1, 1]} : vector<8x16xf32> to vector<1x16xf32>
    %38 = vector.broadcast %37 : vector<1x16xf32> to vector<16x16xf32>
    %39 = arith.addf %36, %38 : vector<16x16xf32>
    %cst_25 = arith.constant -9.99999995E+11 : f32
    %40 = vector.broadcast %cst_25 : f32 to vector<16x16xf32>
    %41 = arith.select %22, %39, %40 : vector<16x16xi1>, vector<16x16xf32>
    %42 = arith.subf %41, %31 : vector<16x16xf32>
    %c0_26 = arith.constant 0 : index
    %c0_27 = arith.constant 0 : index
    %c0_28 = arith.constant 0 : index
    %c0_29 = arith.constant 0 : index
    %43 = vector.load %arg10[%c0_26, %c0_27, %c0_28, %c0_29] : memref<1x8x16x16xf32, #tpu.memory_space<vmem>>, vector<1x1x16x16xf32>
    %44 = vector.shape_cast %43 : vector<1x1x16x16xf32> to vector<16x16xf32>
    %45 = vector.shape_cast %42 : vector<16x16xf32> to vector<1x1x16x16xf32>
    tpu.vector_store %arg10[%c0_26, %c0_27, %c0_28, %c0_29], %45 {strides = array<i32>} : memref<1x8x16x16xf32, #tpu.memory_space<vmem>>, vector<1x1x16x16xf32>,
    %46 = vector.extract_strided_slice %9 {offsets = [0, 32], sizes = [16, 32], strides = [1, 1]} : vector<16x256xbf16> to vector<16x32xbf16>
    %cst_30 = arith.constant dense<0.000000e+00> : vector<16x16xf32>
    %47 = tpu.matmul %46, %3, %cst_30 {dimension_numbers = #tpu.dot_dimension_numbers<[1], [0], [0], [1], [0, 0, 1, 1], [], []>} : vector<16x32xbf16>, vector<32x16xbf16>, vector<16x16xf32> -> vector<16x16xf32>
    %48 = vector.extract_strided_slice %12 {offsets = [0, 1], sizes = [16, 1], strides = [1, 1]} : vector<16x8xf32> to vector<16x1xf32>
    %49 = vector.broadcast %48 : vector<16x1xf32> to vector<16x16xf32>
    %50 = arith.addf %47, %49 : vector<16x16xf32>
    %51 = vector.extract_strided_slice %13 {offsets = [1, 0], sizes = [1, 16], strides = [1, 1]} : vector<8x16xf32> to vector<1x16xf32>
    %52 = vector.broadcast %51 : vector<1x16xf32> to vector<16x16xf32>
    %53 = arith.addf %50, %52 : vector<16x16xf32>
    %cst_31 = arith.constant -9.99999995E+11 : f32
    %54 = vector.broadcast %cst_31 : f32 to vector<16x16xf32>
    %55 = arith.select %22, %53, %54 : vector<16x16xi1>, vector<16x16xf32>
    %56 = arith.subf %55, %31 : vector<16x16xf32>
    %c0_32 = arith.constant 0 : index
    %c1 = arith.constant 1 : index
    %c0_33 = arith.constant 0 : index
    %c0_34 = arith.constant 0 : index
    %57 = vector.load %arg10[%c0_32, %c1, %c0_33, %c0_34] : memref<1x8x16x16xf32, #tpu.memory_space<vmem>>, vector<1x1x16x16xf32>
    %58 = vector.shape_cast %57 : vector<1x1x16x16xf32> to vector<16x16xf32>
    %59 = vector.shape_cast %56 : vector<16x16xf32> to vector<1x1x16x16xf32>
    tpu.vector_store %arg10[%c0_32, %c1, %c0_33, %c0_34], %59 {strides = array<i32>} : memref<1x8x16x16xf32, #tpu.memory_space<vmem>>, vector<1x1x16x16xf32>,
    %60 = vector.extract_strided_slice %9 {offsets = [0, 64], sizes = [16, 32], strides = [1, 1]} : vector<16x256xbf16> to vector<16x32xbf16>
    %cst_35 = arith.constant dense<0.000000e+00> : vector<16x16xf32>
    %61 = tpu.matmul %60, %3, %cst_35 {dimension_numbers = #tpu.dot_dimension_numbers<[1], [0], [0], [1], [0, 0, 1, 1], [], []>} : vector<16x32xbf16>, vector<32x16xbf16>, vector<16x16xf32> -> vector<16x16xf32>
    %62 = vector.extract_strided_slice %12 {offsets = [0, 2], sizes = [16, 1], strides = [1, 1]} : vector<16x8xf32> to vector<16x1xf32>
    %63 = vector.broadcast %62 : vector<16x1xf32> to vector<16x16xf32>
    %64 = arith.addf %61, %63 : vector<16x16xf32>
    %65 = vector.extract_strided_slice %13 {offsets = [2, 0], sizes = [1, 16], strides = [1, 1]} : vector<8x16xf32> to vector<1x16xf32>
    %66 = vector.broadcast %65 : vector<1x16xf32> to vector<16x16xf32>
    %67 = arith.addf %64, %66 : vector<16x16xf32>
    %cst_36 = arith.constant -9.99999995E+11 : f32
    %68 = vector.broadcast %cst_36 : f32 to vector<16x16xf32>
    %69 = arith.select %22, %67, %68 : vector<16x16xi1>, vector<16x16xf32>
    %70 = arith.subf %69, %31 : vector<16x16xf32>
    %c0_37 = arith.constant 0 : index
    %c2 = arith.constant 2 : index
    %c0_38 = arith.constant 0 : index
    %c0_39 = arith.constant 0 : index
    %71 = vector.load %arg10[%c0_37, %c2, %c0_38, %c0_39] : memref<1x8x16x16xf32, #tpu.memory_space<vmem>>, vector<1x1x16x16xf32>
    %72 = vector.shape_cast %71 : vector<1x1x16x16xf32> to vector<16x16xf32>
    %73 = vector.shape_cast %70 : vector<16x16xf32> to vector<1x1x16x16xf32>
    tpu.vector_store %arg10[%c0_37, %c2, %c0_38, %c0_39], %73 {strides = array<i32>} : memref<1x8x16x16xf32, #tpu.memory_space<vmem>>, vector<1x1x16x16xf32>,
    %74 = vector.extract_strided_slice %9 {offsets = [0, 96], sizes = [16, 32], strides = [1, 1]} : vector<16x256xbf16> to vector<16x32xbf16>
    %cst_40 = arith.constant dense<0.000000e+00> : vector<16x16xf32>
    %75 = tpu.matmul %74, %3, %cst_40 {dimension_numbers = #tpu.dot_dimension_numbers<[1], [0], [0], [1], [0, 0, 1, 1], [], []>} : vector<16x32xbf16>, vector<32x16xbf16>, vector<16x16xf32> -> vector<16x16xf32>
    %76 = vector.extract_strided_slice %12 {offsets = [0, 3], sizes = [16, 1], strides = [1, 1]} : vector<16x8xf32> to vector<16x1xf32>
    %77 = vector.broadcast %76 : vector<16x1xf32> to vector<16x16xf32>
    %78 = arith.addf %75, %77 : vector<16x16xf32>
    %79 = vector.extract_strided_slice %13 {offsets = [3, 0], sizes = [1, 16], strides = [1, 1]} : vector<8x16xf32> to vector<1x16xf32>
    %80 = vector.broadcast %79 : vector<1x16xf32> to vector<16x16xf32>
    %81 = arith.addf %78, %80 : vector<16x16xf32>
    %cst_41 = arith.constant -9.99999995E+11 : f32
    %82 = vector.broadcast %cst_41 : f32 to vector<16x16xf32>
    %83 = arith.select %22, %81, %82 : vector<16x16xi1>, vector<16x16xf32>
    %84 = arith.subf %83, %31 : vector<16x16xf32>
    %c0_42 = arith.constant 0 : index
    %c3 = arith.constant 3 : index
    %c0_43 = arith.constant 0 : index
    %c0_44 = arith.constant 0 : index
    %85 = vector.load %arg10[%c0_42, %c3, %c0_43, %c0_44] : memref<1x8x16x16xf32, #tpu.memory_space<vmem>>, vector<1x1x16x16xf32>
    %86 = vector.shape_cast %85 : vector<1x1x16x16xf32> to vector<16x16xf32>
    %87 = vector.shape_cast %84 : vector<16x16xf32> to vector<1x1x16x16xf32>
    tpu.vector_store %arg10[%c0_42, %c3, %c0_43, %c0_44], %87 {strides = array<i32>} : memref<1x8x16x16xf32, #tpu.memory_space<vmem>>, vector<1x1x16x16xf32>,
    %88 = vector.extract_strided_slice %9 {offsets = [0, 128], sizes = [16, 32], strides = [1, 1]} : vector<16x256xbf16> to vector<16x32xbf16>
    %cst_45 = arith.constant dense<0.000000e+00> : vector<16x16xf32>
    %89 = tpu.matmul %88, %3, %cst_45 {dimension_numbers = #tpu.dot_dimension_numbers<[1], [0], [0], [1], [0, 0, 1, 1], [], []>} : vector<16x32xbf16>, vector<32x16xbf16>, vector<16x16xf32> -> vector<16x16xf32>
    %90 = vector.extract_strided_slice %12 {offsets = [0, 4], sizes = [16, 1], strides = [1, 1]} : vector<16x8xf32> to vector<16x1xf32>
    %91 = vector.broadcast %90 : vector<16x1xf32> to vector<16x16xf32>
    %92 = arith.addf %89, %91 : vector<16x16xf32>
    %93 = vector.extract_strided_slice %13 {offsets = [4, 0], sizes = [1, 16], strides = [1, 1]} : vector<8x16xf32> to vector<1x16xf32>
    %94 = vector.broadcast %93 : vector<1x16xf32> to vector<16x16xf32>
    %95 = arith.addf %92, %94 : vector<16x16xf32>
    %cst_46 = arith.constant -9.99999995E+11 : f32
    %96 = vector.broadcast %cst_46 : f32 to vector<16x16xf32>
    %97 = arith.select %22, %95, %96 : vector<16x16xi1>, vector<16x16xf32>
    %98 = arith.subf %97, %31 : vector<16x16xf32>
    %c0_47 = arith.constant 0 : index
    %c4 = arith.constant 4 : index
    %c0_48 = arith.constant 0 : index
    %c0_49 = arith.constant 0 : index
    %99 = vector.load %arg10[%c0_47, %c4, %c0_48, %c0_49] : memref<1x8x16x16xf32, #tpu.memory_space<vmem>>, vector<1x1x16x16xf32>
    %100 = vector.shape_cast %99 : vector<1x1x16x16xf32> to vector<16x16xf32>
    %101 = vector.shape_cast %98 : vector<16x16xf32> to vector<1x1x16x16xf32>
    tpu.vector_store %arg10[%c0_47, %c4, %c0_48, %c0_49], %101 {strides = array<i32>} : memref<1x8x16x16xf32, #tpu.memory_space<vmem>>, vector<1x1x16x16xf32>,
    %102 = vector.extract_strided_slice %9 {offsets = [0, 160], sizes = [16, 32], strides = [1, 1]} : vector<16x256xbf16> to vector<16x32xbf16>
    %cst_50 = arith.constant dense<0.000000e+00> : vector<16x16xf32>
    %103 = tpu.matmul %102, %3, %cst_50 {dimension_numbers = #tpu.dot_dimension_numbers<[1], [0], [0], [1], [0, 0, 1, 1], [], []>} : vector<16x32xbf16>, vector<32x16xbf16>, vector<16x16xf32> -> vector<16x16xf32>
    %104 = vector.extract_strided_slice %12 {offsets = [0, 5], sizes = [16, 1], strides = [1, 1]} : vector<16x8xf32> to vector<16x1xf32>
    %105 = vector.broadcast %104 : vector<16x1xf32> to vector<16x16xf32>
    %106 = arith.addf %103, %105 : vector<16x16xf32>
    %107 = vector.extract_strided_slice %13 {offsets = [5, 0], sizes = [1, 16], strides = [1, 1]} : vector<8x16xf32> to vector<1x16xf32>
    %108 = vector.broadcast %107 : vector<1x16xf32> to vector<16x16xf32>
    %109 = arith.addf %106, %108 : vector<16x16xf32>
    %cst_51 = arith.constant -9.99999995E+11 : f32
    %110 = vector.broadcast %cst_51 : f32 to vector<16x16xf32>
    %111 = arith.select %22, %109, %110 : vector<16x16xi1>, vector<16x16xf32>
    %112 = arith.subf %111, %31 : vector<16x16xf32>
    %c0_52 = arith.constant 0 : index
    %c5 = arith.constant 5 : index
    %c0_53 = arith.constant 0 : index
    %c0_54 = arith.constant 0 : index
    %113 = vector.load %arg10[%c0_52, %c5, %c0_53, %c0_54] : memref<1x8x16x16xf32, #tpu.memory_space<vmem>>, vector<1x1x16x16xf32>
    %114 = vector.shape_cast %113 : vector<1x1x16x16xf32> to vector<16x16xf32>
    %115 = vector.shape_cast %112 : vector<16x16xf32> to vector<1x1x16x16xf32>
    tpu.vector_store %arg10[%c0_52, %c5, %c0_53, %c0_54], %115 {strides = array<i32>} : memref<1x8x16x16xf32, #tpu.memory_space<vmem>>, vector<1x1x16x16xf32>,
    %116 = vector.extract_strided_slice %9 {offsets = [0, 192], sizes = [16, 32], strides = [1, 1]} : vector<16x256xbf16> to vector<16x32xbf16>
    %cst_55 = arith.constant dense<0.000000e+00> : vector<16x16xf32>
    %117 = tpu.matmul %116, %3, %cst_55 {dimension_numbers = #tpu.dot_dimension_numbers<[1], [0], [0], [1], [0, 0, 1, 1], [], []>} : vector<16x32xbf16>, vector<32x16xbf16>, vector<16x16xf32> -> vector<16x16xf32>
    %118 = vector.extract_strided_slice %12 {offsets = [0, 6], sizes = [16, 1], strides = [1, 1]} : vector<16x8xf32> to vector<16x1xf32>
    %119 = vector.broadcast %118 : vector<16x1xf32> to vector<16x16xf32>
    %120 = arith.addf %117, %119 : vector<16x16xf32>
    %121 = vector.extract_strided_slice %13 {offsets = [6, 0], sizes = [1, 16], strides = [1, 1]} : vector<8x16xf32> to vector<1x16xf32>
    %122 = vector.broadcast %121 : vector<1x16xf32> to vector<16x16xf32>
    %123 = arith.addf %120, %122 : vector<16x16xf32>
    %cst_56 = arith.constant -9.99999995E+11 : f32
    %124 = vector.broadcast %cst_56 : f32 to vector<16x16xf32>
    %125 = arith.select %22, %123, %124 : vector<16x16xi1>, vector<16x16xf32>
    %126 = arith.subf %125, %31 : vector<16x16xf32>
    %c0_57 = arith.constant 0 : index
    %c6 = arith.constant 6 : index
    %c0_58 = arith.constant 0 : index
    %c0_59 = arith.constant 0 : index
    %127 = vector.load %arg10[%c0_57, %c6, %c0_58, %c0_59] : memref<1x8x16x16xf32, #tpu.memory_space<vmem>>, vector<1x1x16x16xf32>
    %128 = vector.shape_cast %127 : vector<1x1x16x16xf32> to vector<16x16xf32>
    %129 = vector.shape_cast %126 : vector<16x16xf32> to vector<1x1x16x16xf32>
    tpu.vector_store %arg10[%c0_57, %c6, %c0_58, %c0_59], %129 {strides = array<i32>} : memref<1x8x16x16xf32, #tpu.memory_space<vmem>>, vector<1x1x16x16xf32>,
    %130 = vector.extract_strided_slice %9 {offsets = [0, 224], sizes = [16, 32], strides = [1, 1]} : vector<16x256xbf16> to vector<16x32xbf16>
    %cst_60 = arith.constant dense<0.000000e+00> : vector<16x16xf32>
    %131 = tpu.matmul %130, %3, %cst_60 {dimension_numbers = #tpu.dot_dimension_numbers<[1], [0], [0], [1], [0, 0, 1, 1], [], []>} : vector<16x32xbf16>, vector<32x16xbf16>, vector<16x16xf32> -> vector<16x16xf32>
    %132 = vector.extract_strided_slice %12 {offsets = [0, 7], sizes = [16, 1], strides = [1, 1]} : vector<16x8xf32> to vector<16x1xf32>
    %133 = vector.broadcast %132 : vector<16x1xf32> to vector<16x16xf32>
    %134 = arith.addf %131, %133 : vector<16x16xf32>
    %135 = vector.extract_strided_slice %13 {offsets = [7, 0], sizes = [1, 16], strides = [1, 1]} : vector<8x16xf32> to vector<1x16xf32>
    %136 = vector.broadcast %135 : vector<1x16xf32> to vector<16x16xf32>
    %137 = arith.addf %134, %136 : vector<16x16xf32>
    %cst_61 = arith.constant -9.99999995E+11 : f32
    %138 = vector.broadcast %cst_61 : f32 to vector<16x16xf32>
    %139 = arith.select %22, %137, %138 : vector<16x16xi1>, vector<16x16xf32>
    %140 = arith.subf %139, %31 : vector<16x16xf32>
    %c0_62 = arith.constant 0 : index
    %c7 = arith.constant 7 : index
    %c0_63 = arith.constant 0 : index
    %c0_64 = arith.constant 0 : index
    %141 = vector.load %arg10[%c0_62, %c7, %c0_63, %c0_64] : memref<1x8x16x16xf32, #tpu.memory_space<vmem>>, vector<1x1x16x16xf32>
    %142 = vector.shape_cast %141 : vector<1x1x16x16xf32> to vector<16x16xf32>
    %143 = vector.shape_cast %140 : vector<16x16xf32> to vector<1x1x16x16xf32>
    tpu.vector_store %arg10[%c0_62, %c7, %c0_63, %c0_64], %143 {strides = array<i32>} : memref<1x8x16x16xf32, #tpu.memory_space<vmem>>, vector<1x1x16x16xf32>,
    return
  }
  func.func @transform_0(%arg0: i32, %arg1: i32) -> (i32, i32, i32) {
    %c0_i32 = arith.constant 0 : i32
    %c0_i32_0 = arith.constant 0 : i32
    return %arg0, %arg1, %c0_i32 : i32, i32, i32
  }
  func.func @transform_1(%arg0: i32, %arg1: i32) -> (i32, i32, i32) {
    %c0_i32 = arith.constant 0 : i32
    %c0_i32_0 = arith.constant 0 : i32
    %c0_i32_1 = arith.constant 0 : i32
    return %arg0, %c0_i32, %c0_i32_0 : i32, i32, i32
  }
  func.func @transform_2(%arg0: i32, %arg1: i32) -> (i32, i32) {
    %c0_i32 = arith.constant 0 : i32
    %c0_i32_0 = arith.constant 0 : i32
    %c0_i32_1 = arith.constant 0 : i32
    return %c0_i32, %c0_i32_0 : i32, i32
  }
  func.func @transform_3(%arg0: i32, %arg1: i32) -> (i32, i32) {
    %c0_i32 = arith.constant 0 : i32
    %c0_i32_0 = arith.constant 0 : i32
    %c0_i32_1 = arith.constant 0 : i32
    return %c0_i32, %c0_i32_0 : i32, i32
  }
  func.func @transform_4(%arg0: i32, %arg1: i32) -> (i32, i32) {
    %c0_i32 = arith.constant 0 : i32
    %c0_i32_0 = arith.constant 0 : i32
    %c0_i32_1 = arith.constant 0 : i32
    return %c0_i32, %c0_i32_0 : i32, i32
  }
  func.func @transform_5(%arg0: i32, %arg1: i32) -> (i32, i32) {
    %c0_i32 = arith.constant 0 : i32
    %c0_i32_0 = arith.constant 0 : i32
    %c0_i32_1 = arith.constant 0 : i32
    return %c0_i32, %c0_i32_0 : i32, i32
  }
  func.func @transform_6(%arg0: i32, %arg1: i32) -> (i32, i32, i32) {
    %c0_i32 = arith.constant 0 : i32
    %c0_i32_0 = arith.constant 0 : i32
    %c0_i32_1 = arith.constant 0 : i32
    return %arg0, %c0_i32, %c0_i32_0 : i32, i32, i32
  }
  func.func @transform_7(%arg0: i32, %arg1: i32) -> (i32, i32, i32) {
    %c0_i32 = arith.constant 0 : i32
    %c0_i32_0 = arith.constant 0 : i32
    return %arg0, %arg1, %c0_i32 : i32, i32, i32
  }
  func.func @transform_8(%arg0: i32, %arg1: i32) -> (i32, i32, i32, i32) {
    %c0_i32 = arith.constant 0 : i32
    %c0_i32_0 = arith.constant 0 : i32
    %c0_i32_1 = arith.constant 0 : i32
    return %arg0, %c0_i32, %arg1, %c0_i32_0 : i32, i32, i32, i32
  }
}

module attributes {stable_mosaic.version = 11 : i64} {
  func.func @biaffine_kernel(%arg0: i32, %arg1: i32, %arg2: memref<1x16x32xbf16, #tpu.memory_space<vmem>>, %arg3: memref<1x32x16xbf16, #tpu.memory_space<vmem>>, %arg4: memref<32x256xbf16, #tpu.memory_space<vmem>>, %arg5: memref<32x8xbf16, #tpu.memory_space<vmem>>, %arg6: memref<8x32xbf16, #tpu.memory_space<vmem>>, %arg7: memref<1x8xf32, #tpu.memory_space<vmem>>, %arg8: memref<1x1x16xf32, #tpu.memory_space<vmem>>, %arg9: memref<1x16x1xf32, #tpu.memory_space<vmem>>, %arg10: memref<1x8x16x16xf32, #tpu.memory_space<vmem>>) attributes {dimension_semantics = [#tpu.dimension_semantics<parallel>, #tpu.dimension_semantics<parallel>], iteration_bounds = array<i64: 2, 1>, scalar_prefetch = 0 : i64, scratch_operands = 0 : i64, tpu.core_type = #tpu.core_type<tc>, window_params = [{transform_indices = @transform_0, window_bounds = array<i64: 1, 16, 32>}, {transform_indices = @transform_1, window_bounds = array<i64: 1, 32, 16>}, {pipeline_mode = #tpu.pipeline_mode<synchronous>, transform_indices = @transform_2, window_bounds = array<i64: 32, 256>}, {pipeline_mode = #tpu.pipeline_mode<synchronous>, transform_indices = @transform_3, window_bounds = array<i64: 32, 8>}, {pipeline_mode = #tpu.pipeline_mode<synchronous>, transform_indices = @transform_4, window_bounds = array<i64: 8, 32>}, {pipeline_mode = #tpu.pipeline_mode<synchronous>, transform_indices = @transform_5, window_bounds = array<i64: 1, 8>}, {transform_indices = @transform_6, window_bounds = array<i64: 1, 1, 16>}, {transform_indices = @transform_7, window_bounds = array<i64: 1, 16, 1>}, {transform_indices = @transform_8, window_bounds = array<i64: 1, 8, 16, 16>}]} {
    %c0 = arith.constant 0 : index
    %c0_0 = arith.constant 0 : index
    %c0_1 = arith.constant 0 : index
    %0 = vector.load %arg2[%c0, %c0_0, %c0_1] : memref<1x16x32xbf16, #tpu.memory_space<vmem>>, vector<1x16x32xbf16>
    %1 = vector.shape_cast %0 : vector<1x16x32xbf16> to vector<16x32xbf16>
    %c0_2 = arith.constant 0 : index
    %c0_3 = arith.constant 0 : index
    %c0_4 = arith.constant 0 : index
    %2 = vector.load %arg3[%c0_2, %c0_3, %c0_4] : memref<1x32x16xbf16, #tpu.memory_space<vmem>>, vector<1x32x16xbf16>
    %3 = vector.shape_cast %2 : vector<1x32x16xbf16> to vector<32x16xbf16>
    %c0_5 = arith.constant 0 : index
    %c0_6 = arith.constant 0 : index
    %4 = vector.load %arg4[%c0_5, %c0_6] : memref<32x256xbf16, #tpu.memory_space<vmem>>, vector<32x256xbf16>
    %c0_7 = arith.constant 0 : index
    %c0_8 = arith.constant 0 : index
    %5 = vector.load %arg5[%c0_7, %c0_8] : memref<32x8xbf16, #tpu.memory_space<vmem>>, vector<32x8xbf16>
    %c0_9 = arith.constant 0 : index
    %c0_10 = arith.constant 0 : index
    %6 = vector.load %arg6[%c0_9, %c0_10] : memref<8x32xbf16, #tpu.memory_space<vmem>>, vector<8x32xbf16>
    %c0_11 = arith.constant 0 : index
    %c0_12 = arith.constant 0 : index
    %7 = vector.load %arg7[%c0_11, %c0_12] : memref<1x8xf32, #tpu.memory_space<vmem>>, vector<1x8xf32>
    %cst = arith.constant dense<0.000000e+00> : vector<16x256xf32>
    %8 = tpu.matmul %1, %4, %cst {dimension_numbers = #tpu.dot_dimension_numbers<[1], [0], [0], [1], [0, 0, 1, 1], [], []>} : vector<16x32xbf16>, vector<32x256xbf16>, vector<16x256xf32> -> vector<16x256xf32>
    %9 = arith.truncf %8 : vector<16x256xf32> to vector<16x256xbf16>
    %cst_13 = arith.constant dense<0.000000e+00> : vector<16x8xf32>
    %10 = tpu.matmul %1, %5, %cst_13 {dimension_numbers = #tpu.dot_dimension_numbers<[1], [0], [0], [1], [0, 0, 1, 1], [], []>} : vector<16x32xbf16>, vector<32x8xbf16>, vector<16x8xf32> -> vector<16x8xf32>
    %11 = vector.broadcast %7 : vector<1x8xf32> to vector<16x8xf32>
    %12 = arith.addf %10, %11 : vector<16x8xf32>
    %cst_14 = arith.constant dense<0.000000e+00> : vector<8x16xf32>
    %13 = tpu.matmul %6, %3, %cst_14 {dimension_numbers = #tpu.dot_dimension_numbers<[1], [0], [0], [1], [0, 0, 1, 1], [], []>} : vector<8x32xbf16>, vector<32x16xbf16>, vector<8x16xf32> -> vector<8x16xf32>
    %c0_15 = arith.constant 0 : index
    %c0_16 = arith.constant 0 : index
    %c0_17 = arith.constant 0 : index
    %14 = vector.load %arg9[%c0_15, %c0_16, %c0_17] : memref<1x16x1xf32, #tpu.memory_space<vmem>>, vector<1x16x1xf32>
    %15 = vector.shape_cast %14 : vector<1x16x1xf32> to vector<16x1xf32>
    %c0_18 = arith.constant 0 : index
    %c0_19 = arith.constant 0 : index
    %c0_20 = arith.constant 0 : index
    %16 = vector.load %arg8[%c0_18, %c0_19, %c0_20] : memref<1x1x16xf32, #tpu.memory_space<vmem>>, vector<1x1x16xf32>
    %17 = vector.shape_cast %16 : vector<1x1x16xf32> to vector<1x16xf32>
    %18 = vector.broadcast %15 : vector<16x1xf32> to vector<16x16xf32>
    %19 = vector.broadcast %17 : vector<1x16xf32> to vector<16x16xf32>
    %20 = arith.mulf %18, %19 : vector<16x16xf32>
    %cst_21 = arith.constant 5.000000e-01 : f32
    %21 = vector.broadcast %cst_21 : f32 to vector<16x16xf32>
    %22 = arith.cmpf ogt, %20, %21 : vector<16x16xf32>
    %23 = tpu.iota {dimensions = array<i32: 0>} : vector<16x16xi32>
    %c16_i32 = arith.constant 16 : i32
    %24 = arith.muli %arg1, %c16_i32 : i32
    %25 = vector.broadcast %24 : i32 to vector<16x16xi32>
    %26 = arith.addi %23, %25 : vector<16x16xi32>
    %27 = tpu.iota {dimensions = array<i32: 1>} : vector<16x16xi32>
    %28 = arith.cmpi sgt, %26, %27 : vector<16x16xi32>
    %cst_22 = arith.constant 9.99999995E+11 : f32
    %cst_23 = arith.constant 0.000000e+00 : f32
    %29 = vector.broadcast %cst_22 : f32 to vector<16x16xf32>
    %30 = vector.broadcast %cst_23 : f32 to vector<16x16xf32>
    %31 = arith.select %28, %29, %30 : vector<16x16xi1>, vector<16x16xf32>
    %32 = vector.extract_strided_slice %9 {offsets = [0, 0], sizes = [16, 32], strides = [1, 1]} : vector<16x256xbf16> to vector<16x32xbf16>
    %cst_24 = arith.constant dense<0.000000e+00> : vector<16x16xf32>
    %33 = tpu.matmul %32, %3, %cst_24 {dimension_numbers = #tpu.dot_dimension_numbers<[1], [0], [0], [1], [0, 0, 1, 1], [], []>} : vector<16x32xbf16>, vector<32x16xbf16>, vector<16x16xf32> -> vector<16x16xf32>
    %34 = vector.extract_strided_slice %12 {offsets = [0, 0], sizes = [16, 1], strides = [1, 1]} : vector<16x8xf32> to vector<16x1xf32>
    %35 = vector.broadcast %34 : vector<16x1xf32> to vector<16x16xf32>
    %36 = arith.addf %33, %35 : vector<16x16xf32>
    %37 = vector.extract_strided_slice %13 {offsets = [0, 0], sizes = [1, 16], strides = [1, 1]} : vector<8x16xf32> to vector<1x16xf32>
    %38 = vector.broadcast %37 : vector<1x16xf32> to vector<16x16xf32>
    %39 = arith.addf %36, %38 : vector<16x16xf32>
    %cst_25 = arith.constant -9.99999995E+11 : f32
    %40 = vector.broadcast %cst_25 : f32 to vector<16x16xf32>
    %41 = arith.select %22, %39, %40 : vector<16x16xi1>, vector<16x16xf32>
    %42 = arith.subf %41, %31 : vector<16x16xf32>
    %c0_26 = arith.constant 0 : index
    %c0_27 = arith.constant 0 : index
    %c0_28 = arith.constant 0 : index
    %c0_29 = arith.constant 0 : index
    %43 = vector.load %arg10[%c0_26, %c0_27, %c0_28, %c0_29] : memref<1x8x16x16xf32, #tpu.memory_space<vmem>>, vector<1x1x16x16xf32>
    %44 = vector.shape_cast %43 : vector<1x1x16x16xf32> to vector<16x16xf32>
    %45 = vector.shape_cast %42 : vector<16x16xf32> to vector<1x1x16x16xf32>
    tpu.vector_store %arg10[%c0_26, %c0_27, %c0_28, %c0_29], %45 {strides = array<i32>} : memref<1x8x16x16xf32, #tpu.memory_space<vmem>>, vector<1x1x16x16xf32>,
    %46 = vector.extract_strided_slice %9 {offsets = [0, 32], sizes = [16, 32], strides = [1, 1]} : vector<16x256xbf16> to vector<16x32xbf16>
    %cst_30 = arith.constant dense<0.000000e+00> : vector<16x16xf32>
    %47 = tpu.matmul %46, %3, %cst_30 {dimension_numbers = #tpu.dot_dimension_numbers<[1], [0], [0], [1], [0, 0, 1, 1], [], []>} : vector<16x32xbf16>, vector<32x16xbf16>, vector<16x16xf32> -> vector<16x16xf32>
    %48 = vector.extract_strided_slice %12 {offsets = [0, 1], sizes = [16, 1], strides = [1, 1]} : vector<16x8xf32> to vector<16x1xf32>
    %49 = vector.broadcast %48 : vector<16x1xf32> to vector<16x16xf32>
    %50 = arith.addf %47, %49 : vector<16x16xf32>
    %51 = vector.extract_strided_slice %13 {offsets = [1, 0], sizes = [1, 16], strides = [1, 1]} : vector<8x16xf32> to vector<1x16xf32>
    %52 = vector.broadcast %51 : vector<1x16xf32> to vector<16x16xf32>
    %53 = arith.addf %50, %52 : vector<16x16xf32>
    %cst_31 = arith.constant -9.99999995E+11 : f32
    %54 = vector.broadcast %cst_31 : f32 to vector<16x16xf32>
    %55 = arith.select %22, %53, %54 : vector<16x16xi1>, vector<16x16xf32>
    %56 = arith.subf %55, %31 : vector<16x16xf32>
    %c0_32 = arith.constant 0 : index
    %c1 = arith.constant 1 : index
    %c0_33 = arith.constant 0 : index
    %c0_34 = arith.constant 0 : index
    %57 = vector.load %arg10[%c0_32, %c1, %c0_33, %c0_34] : memref<1x8x16x16xf32, #tpu.memory_space<vmem>>, vector<1x1x16x16xf32>
    %58 = vector.shape_cast %57 : vector<1x1x16x16xf32> to vector<16x16xf32>
    %59 = vector.shape_cast %56 : vector<16x16xf32> to vector<1x1x16x16xf32>
    tpu.vector_store %arg10[%c0_32, %c1, %c0_33, %c0_34], %59 {strides = array<i32>} : memref<1x8x16x16xf32, #tpu.memory_space<vmem>>, vector<1x1x16x16xf32>,
    %60 = vector.extract_strided_slice %9 {offsets = [0, 64], sizes = [16, 32], strides = [1, 1]} : vector<16x256xbf16> to vector<16x32xbf16>
    %cst_35 = arith.constant dense<0.000000e+00> : vector<16x16xf32>
    %61 = tpu.matmul %60, %3, %cst_35 {dimension_numbers = #tpu.dot_dimension_numbers<[1], [0], [0], [1], [0, 0, 1, 1], [], []>} : vector<16x32xbf16>, vector<32x16xbf16>, vector<16x16xf32> -> vector<16x16xf32>
    %62 = vector.extract_strided_slice %12 {offsets = [0, 2], sizes = [16, 1], strides = [1, 1]} : vector<16x8xf32> to vector<16x1xf32>
    %63 = vector.broadcast %62 : vector<16x1xf32> to vector<16x16xf32>
    %64 = arith.addf %61, %63 : vector<16x16xf32>
    %65 = vector.extract_strided_slice %13 {offsets = [2, 0], sizes = [1, 16], strides = [1, 1]} : vector<8x16xf32> to vector<1x16xf32>
    %66 = vector.broadcast %65 : vector<1x16xf32> to vector<16x16xf32>
    %67 = arith.addf %64, %66 : vector<16x16xf32>
    %cst_36 = arith.constant -9.99999995E+11 : f32
    %68 = vector.broadcast %cst_36 : f32 to vector<16x16xf32>
    %69 = arith.select %22, %67, %68 : vector<16x16xi1>, vector<16x16xf32>
    %70 = arith.subf %69, %31 : vector<16x16xf32>
    %c0_37 = arith.constant 0 : index
    %c2 = arith.constant 2 : index
    %c0_38 = arith.constant 0 : index
    %c0_39 = arith.constant 0 : index
    %71 = vector.load %arg10[%c0_37, %c2, %c0_38, %c0_39] : memref<1x8x16x16xf32, #tpu.memory_space<vmem>>, vector<1x1x16x16xf32>
    %72 = vector.shape_cast %71 : vector<1x1x16x16xf32> to vector<16x16xf32>
    %73 = vector.shape_cast %70 : vector<16x16xf32> to vector<1x1x16x16xf32>
    tpu.vector_store %arg10[%c0_37, %c2, %c0_38, %c0_39], %73 {strides = array<i32>} : memref<1x8x16x16xf32, #tpu.memory_space<vmem>>, vector<1x1x16x16xf32>,
    %74 = vector.extract_strided_slice %9 {offsets = [0, 96], sizes = [16, 32], strides = [1, 1]} : vector<16x256xbf16> to vector<16x32xbf16>
    %cst_40 = arith.constant dense<0.000000e+00> : vector<16x16xf32>
    %75 = tpu.matmul %74, %3, %cst_40 {dimension_numbers = #tpu.dot_dimension_numbers<[1], [0], [0], [1], [0, 0, 1, 1], [], []>} : vector<16x32xbf16>, vector<32x16xbf16>, vector<16x16xf32> -> vector<16x16xf32>
    %76 = vector.extract_strided_slice %12 {offsets = [0, 3], sizes = [16, 1], strides = [1, 1]} : vector<16x8xf32> to vector<16x1xf32>
    %77 = vector.broadcast %76 : vector<16x1xf32> to vector<16x16xf32>
    %78 = arith.addf %75, %77 : vector<16x16xf32>
    %79 = vector.extract_strided_slice %13 {offsets = [3, 0], sizes = [1, 16], strides = [1, 1]} : vector<8x16xf32> to vector<1x16xf32>
    %80 = vector.broadcast %79 : vector<1x16xf32> to vector<16x16xf32>
    %81 = arith.addf %78, %80 : vector<16x16xf32>
    %cst_41 = arith.constant -9.99999995E+11 : f32
    %82 = vector.broadcast %cst_41 : f32 to vector<16x16xf32>
    %83 = arith.select %22, %81, %82 : vector<16x16xi1>, vector<16x16xf32>
    %84 = arith.subf %83, %31 : vector<16x16xf32>
    %c0_42 = arith.constant 0 : index
    %c3 = arith.constant 3 : index
    %c0_43 = arith.constant 0 : index
    %c0_44 = arith.constant 0 : index
    %85 = vector.load %arg10[%c0_42, %c3, %c0_43, %c0_44] : memref<1x8x16x16xf32, #tpu.memory_space<vmem>>, vector<1x1x16x16xf32>
    %86 = vector.shape_cast %85 : vector<1x1x16x16xf32> to vector<16x16xf32>
    %87 = vector.shape_cast %84 : vector<16x16xf32> to vector<1x1x16x16xf32>
    tpu.vector_store %arg10[%c0_42, %c3, %c0_43, %c0_44], %87 {strides = array<i32>} : memref<1x8x16x16xf32, #tpu.memory_space<vmem>>, vector<1x1x16x16xf32>,
    %88 = vector.extract_strided_slice %9 {offsets = [0, 128], sizes = [16, 32], strides = [1, 1]} : vector<16x256xbf16> to vector<16x32xbf16>
    %cst_45 = arith.constant dense<0.000000e+00> : vector<16x16xf32>
    %89 = tpu.matmul %88, %3, %cst_45 {dimension_numbers = #tpu.dot_dimension_numbers<[1], [0], [0], [1], [0, 0, 1, 1], [], []>} : vector<16x32xbf16>, vector<32x16xbf16>, vector<16x16xf32> -> vector<16x16xf32>
    %90 = vector.extract_strided_slice %12 {offsets = [0, 4], sizes = [16, 1], strides = [1, 1]} : vector<16x8xf32> to vector<16x1xf32>
    %91 = vector.broadcast %90 : vector<16x1xf32> to vector<16x16xf32>
    %92 = arith.addf %89, %91 : vector<16x16xf32>
    %93 = vector.extract_strided_slice %13 {offsets = [4, 0], sizes = [1, 16], strides = [1, 1]} : vector<8x16xf32> to vector<1x16xf32>
    %94 = vector.broadcast %93 : vector<1x16xf32> to vector<16x16xf32>
    %95 = arith.addf %92, %94 : vector<16x16xf32>
    %cst_46 = arith.constant -9.99999995E+11 : f32
    %96 = vector.broadcast %cst_46 : f32 to vector<16x16xf32>
    %97 = arith.select %22, %95, %96 : vector<16x16xi1>, vector<16x16xf32>
    %98 = arith.subf %97, %31 : vector<16x16xf32>
    %c0_47 = arith.constant 0 : index
    %c4 = arith.constant 4 : index
    %c0_48 = arith.constant 0 : index
    %c0_49 = arith.constant 0 : index
    %99 = vector.load %arg10[%c0_47, %c4, %c0_48, %c0_49] : memref<1x8x16x16xf32, #tpu.memory_space<vmem>>, vector<1x1x16x16xf32>
    %100 = vector.shape_cast %99 : vector<1x1x16x16xf32> to vector<16x16xf32>
    %101 = vector.shape_cast %98 : vector<16x16xf32> to vector<1x1x16x16xf32>
    tpu.vector_store %arg10[%c0_47, %c4, %c0_48, %c0_49], %101 {strides = array<i32>} : memref<1x8x16x16xf32, #tpu.memory_space<vmem>>, vector<1x1x16x16xf32>,
    %102 = vector.extract_strided_slice %9 {offsets = [0, 160], sizes = [16, 32], strides = [1, 1]} : vector<16x256xbf16> to vector<16x32xbf16>
    %cst_50 = arith.constant dense<0.000000e+00> : vector<16x16xf32>
    %103 = tpu.matmul %102, %3, %cst_50 {dimension_numbers = #tpu.dot_dimension_numbers<[1], [0], [0], [1], [0, 0, 1, 1], [], []>} : vector<16x32xbf16>, vector<32x16xbf16>, vector<16x16xf32> -> vector<16x16xf32>
    %104 = vector.extract_strided_slice %12 {offsets = [0, 5], sizes = [16, 1], strides = [1, 1]} : vector<16x8xf32> to vector<16x1xf32>
    %105 = vector.broadcast %104 : vector<16x1xf32> to vector<16x16xf32>
    %106 = arith.addf %103, %105 : vector<16x16xf32>
    %107 = vector.extract_strided_slice %13 {offsets = [5, 0], sizes = [1, 16], strides = [1, 1]} : vector<8x16xf32> to vector<1x16xf32>
    %108 = vector.broadcast %107 : vector<1x16xf32> to vector<16x16xf32>
    %109 = arith.addf %106, %108 : vector<16x16xf32>
    %cst_51 = arith.constant -9.99999995E+11 : f32
    %110 = vector.broadcast %cst_51 : f32 to vector<16x16xf32>
    %111 = arith.select %22, %109, %110 : vector<16x16xi1>, vector<16x16xf32>
    %112 = arith.subf %111, %31 : vector<16x16xf32>
    %c0_52 = arith.constant 0 : index
    %c5 = arith.constant 5 : index
    %c0_53 = arith.constant 0 : index
    %c0_54 = arith.constant 0 : index
    %113 = vector.load %arg10[%c0_52, %c5, %c0_53, %c0_54] : memref<1x8x16x16xf32, #tpu.memory_space<vmem>>, vector<1x1x16x16xf32>
    %114 = vector.shape_cast %113 : vector<1x1x16x16xf32> to vector<16x16xf32>
    %115 = vector.shape_cast %112 : vector<16x16xf32> to vector<1x1x16x16xf32>
    tpu.vector_store %arg10[%c0_52, %c5, %c0_53, %c0_54], %115 {strides = array<i32>} : memref<1x8x16x16xf32, #tpu.memory_space<vmem>>, vector<1x1x16x16xf32>,
    %116 = vector.extract_strided_slice %9 {offsets = [0, 192], sizes = [16, 32], strides = [1, 1]} : vector<16x256xbf16> to vector<16x32xbf16>
    %cst_55 = arith.constant dense<0.000000e+00> : vector<16x16xf32>
    %117 = tpu.matmul %116, %3, %cst_55 {dimension_numbers = #tpu.dot_dimension_numbers<[1], [0], [0], [1], [0, 0, 1, 1], [], []>} : vector<16x32xbf16>, vector<32x16xbf16>, vector<16x16xf32> -> vector<16x16xf32>
    %118 = vector.extract_strided_slice %12 {offsets = [0, 6], sizes = [16, 1], strides = [1, 1]} : vector<16x8xf32> to vector<16x1xf32>
    %119 = vector.broadcast %118 : vector<16x1xf32> to vector<16x16xf32>
    %120 = arith.addf %117, %119 : vector<16x16xf32>
    %121 = vector.extract_strided_slice %13 {offsets = [6, 0], sizes = [1, 16], strides = [1, 1]} : vector<8x16xf32> to vector<1x16xf32>
    %122 = vector.broadcast %121 : vector<1x16xf32> to vector<16x16xf32>
    %123 = arith.addf %120, %122 : vector<16x16xf32>
    %cst_56 = arith.constant -9.99999995E+11 : f32
    %124 = vector.broadcast %cst_56 : f32 to vector<16x16xf32>
    %125 = arith.select %22, %123, %124 : vector<16x16xi1>, vector<16x16xf32>
    %126 = arith.subf %125, %31 : vector<16x16xf32>
    %c0_57 = arith.constant 0 : index
    %c6 = arith.constant 6 : index
    %c0_58 = arith.constant 0 : index
    %c0_59 = arith.constant 0 : index
    %127 = vector.load %arg10[%c0_57, %c6, %c0_58, %c0_59] : memref<1x8x16x16xf32, #tpu.memory_space<vmem>>, vector<1x1x16x16xf32>
    %128 = vector.shape_cast %127 : vector<1x1x16x16xf32> to vector<16x16xf32>
    %129 = vector.shape_cast %126 : vector<16x16xf32> to vector<1x1x16x16xf32>
    tpu.vector_store %arg10[%c0_57, %c6, %c0_58, %c0_59], %129 {strides = array<i32>} : memref<1x8x16x16xf32, #tpu.memory_space<vmem>>, vector<1x1x16x16xf32>,
    %130 = vector.extract_strided_slice %9 {offsets = [0, 224], sizes = [16, 32], strides = [1, 1]} : vector<16x256xbf16> to vector<16x32xbf16>
    %cst_60 = arith.constant dense<0.000000e+00> : vector<16x16xf32>
    %131 = tpu.matmul %130, %3, %cst_60 {dimension_numbers = #tpu.dot_dimension_numbers<[1], [0], [0], [1], [0, 0, 1, 1], [], []>} : vector<16x32xbf16>, vector<32x16xbf16>, vector<16x16xf32> -> vector<16x16xf32>
    %132 = vector.extract_strided_slice %12 {offsets = [0, 7], sizes = [16, 1], strides = [1, 1]} : vector<16x8xf32> to vector<16x1xf32>
    %133 = vector.broadcast %132 : vector<16x1xf32> to vector<16x16xf32>
    %134 = arith.addf %131, %133 : vector<16x16xf32>
    %135 = vector.extract_strided_slice %13 {offsets = [7, 0], sizes = [1, 16], strides = [1, 1]} : vector<8x16xf32> to vector<1x16xf32>
    %136 = vector.broadcast %135 : vector<1x16xf32> to vector<16x16xf32>
    %137 = arith.addf %134, %136 : vector<16x16xf32>
    %cst_61 = arith.constant -9.99999995E+11 : f32
    %138 = vector.broadcast %cst_61 : f32 to vector<16x16xf32>
    %139 = arith.select %22, %137, %138 : vector<16x16xi1>, vector<16x16xf32>
    %140 = arith.subf %139, %31 : vector<16x16xf32>
    %c0_62 = arith.constant 0 : index
    %c7 = arith.constant 7 : index
    %c0_63 = arith.constant 0 : index
    %c0_64 = arith.constant 0 : index
    %141 = vector.load %arg10[%c0_62, %c7, %c0_63, %c0_64] : memref<1x8x16x16xf32, #tpu.memory_space<vmem>>, vector<1x1x16x16xf32>
    %142 = vector.shape_cast %141 : vector<1x1x16x16xf32> to vector<16x16xf32>
    %143 = vector.shape_cast %140 : vector<16x16xf32> to vector<1x1x16x16xf32>
    tpu.vector_store %arg10[%c0_62, %c7, %c0_63, %c0_64], %143 {strides = array<i32>} : memref<1x8x16x16xf32, #tpu.memory_space<vmem>>, vector<1x1x16x16xf32>,
    return
  }
  func.func @transform_0(%arg0: i32, %arg1: i32) -> (i32, i32, i32) {
    %c0_i32 = arith.constant 0 : i32
    %c0_i32_0 = arith.constant 0 : i32
    return %arg0, %arg1, %c0_i32 : i32, i32, i32
  }
  func.func @transform_1(%arg0: i32, %arg1: i32) -> (i32, i32, i32) {
    %c0_i32 = arith.constant 0 : i32
    %c0_i32_0 = arith.constant 0 : i32
    %c0_i32_1 = arith.constant 0 : i32
    return %arg0, %c0_i32, %c0_i32_0 : i32, i32, i32
  }
  func.func @transform_2(%arg0: i32, %arg1: i32) -> (i32, i32) {
    %c0_i32 = arith.constant 0 : i32
    %c0_i32_0 = arith.constant 0 : i32
    %c0_i32_1 = arith.constant 0 : i32
    return %c0_i32, %c0_i32_0 : i32, i32
  }
  func.func @transform_3(%arg0: i32, %arg1: i32) -> (i32, i32) {
    %c0_i32 = arith.constant 0 : i32
    %c0_i32_0 = arith.constant 0 : i32
    %c0_i32_1 = arith.constant 0 : i32
    return %c0_i32, %c0_i32_0 : i32, i32
  }
  func.func @transform_4(%arg0: i32, %arg1: i32) -> (i32, i32) {
    %c0_i32 = arith.constant 0 : i32
    %c0_i32_0 = arith.constant 0 : i32
    %c0_i32_1 = arith.constant 0 : i32
    return %c0_i32, %c0_i32_0 : i32, i32
  }
  func.func @transform_5(%arg0: i32, %arg1: i32) -> (i32, i32) {
    %c0_i32 = arith.constant 0 : i32
    %c0_i32_0 = arith.constant 0 : i32
    %c0_i32_1 = arith.constant 0 : i32
    return %c0_i32, %c0_i32_0 : i32, i32
  }
  func.func @transform_6(%arg0: i32, %arg1: i32) -> (i32, i32, i32) {
    %c0_i32 = arith.constant 0 : i32
    %c0_i32_0 = arith.constant 0 : i32
    %c0_i32_1 = arith.constant 0 : i32
    return %arg0, %c0_i32, %c0_i32_0 : i32, i32, i32
  }
  func.func @transform_7(%arg0: i32, %arg1: i32) -> (i32, i32, i32) {
    %c0_i32 = arith.constant 0 : i32
    %c0_i32_0 = arith.constant 0 : i32
    return %arg0, %arg1, %c0_i32 : i32, i32, i32
  }
  func.func @transform_8(%arg0: i32, %arg1: i32) -> (i32, i32, i32, i32) {
    %c0_i32 = arith.constant 0 : i32
    %c0_i32_0 = arith.constant 0 : i32
    %c0_i32_1 = arith.constant 0 : i32
    return %arg0, %c0_i32, %arg1, %c0_i32_0 : i32, i32, i32, i32
  }
}

</mosaic_0001>

<llo_original>
// kernel: tpu_custom_call.1
$region0: #{tpu_custom_call.1}
  #allocation0 [shape = 'u32[]', space=smem, size = 0x4, offset = 0x4, fixed_abs, tag = 'smem constant byte address 0x4 - core index']
  #allocation1 [shape = 'u32[144,128]{1,0:T(1,128)}', space=vmem, size = 0x12000, scoped, tag = 'internal scratch']
  %s0 = inlined_call_operand.vmem [shape: bf16[2,16,32], index: 0, kind: input, shape index: {}]
  %s1 = inlined_call_operand.vmem [shape: bf16[2,32,16], index: 1, kind: input, shape index: {}]
  %s2 = inlined_call_operand.vmem [shape: bf16[32,256], index: 2, kind: input, shape index: {}]
  %s3 = inlined_call_operand.vmem [shape: bf16[32,8], index: 3, kind: input, shape index: {}]
  %s4 = inlined_call_operand.vmem [shape: bf16[8,32], index: 4, kind: input, shape index: {}]
  %s5 = inlined_call_operand.vmem [shape: f32[1,8], index: 5, kind: input, shape index: {}]
  %s6 = inlined_call_operand.vmem [shape: f32[2,1,16], index: 6, kind: input, shape index: {}]
  %s7 = inlined_call_operand.vmem [shape: f32[2,16,1], index: 7, kind: input, shape index: {}]
  %s8 = inlined_call_operand.hbm [shape: f32[2,8,16,16], index: 8, kind: output, shape index: {}]
  %s9 = sld [smem:[#allocation0]]
  $region65: #{tpu_custom_call.1} parent=0
    _
  %s11 = ssub.s32 1, %s9
  %s12 = scalar_select 0, %s11, %s9
  $region1: #{tpu_custom_call.1} parent=0
    #allocation2 [shape = 'u8[131072]{0}', space=vmem, size = 0x20000, scoped, tag = 'output window, operand 0']
    #allocation3 [shape = 's32[2]{0}', space=sflag, size = 0x8, scoped, tag = 'scoped memory for tpu_custom_call.1']
    %13 = vsyncpa [#allocation3], 0
    %s14 = scalar_lea.sflag [#allocation3], 1
    %15 = vsyncpa %s14, 0
    loop: start=0, step=1, limit=4
    $region2: #{tpu_custom_call.1} parent=1 // loop_pre_header
      _
    $region3: #{tpu_custom_call.1} parent=1 // loop_header
      %s17 = sphi 0, %s21
      %p18 = scmp.ge.s32.totalorder %s17, 4
      %s24 = sphi 0, %s36
      %s25 = sphi 0, %s32
      %s26 = sphi 0, %s24
      %s27 = sphi 0, %s25
      %s28 = sphi 0, %s26
      %s29 = sphi 0, %s27
      %s41 = sphi 0, %s43
      %s44 = sphi 0, %s41
      %s45 = sphi 0, %s44
      %s61 = sphi 0, %s45
      %s67 = sphi 0, %s69
      %s70 = sphi 0, %s67
      %s71 = sphi 0, %s70
      %s87 = sphi 0, %s71
      %s91 = sphi 0, %s91
      %s93 = sphi 0, %s91
      %s94 = sphi 0, %s93
      %s108 = sphi 0, %s94
      %s112 = sphi 0, %s112
      %s114 = sphi 0, %s112
      %s115 = sphi 0, %s114
      %s129 = sphi 0, %s115
      %s133 = sphi 0, %s133
      %s135 = sphi 0, %s133
      %s136 = sphi 0, %s135
      %s150 = sphi 0, %s136
      %s154 = sphi 0, %s154
      %s156 = sphi 0, %s154
      %s157 = sphi 0, %s156
      %s171 = sphi 0, %s157
      %s177 = sphi 0, %s179
      %s180 = sphi 0, %s177
      %s181 = sphi 0, %s180
      %s197 = sphi 0, %s181
      %s205 = sphi 0, %s207
      %s208 = sphi 0, %s205
      %s209 = sphi 0, %s208
      %s225 = sphi 0, %s209
      %s233 = sphi 0, %s235
      %s236 = sphi 0, %s233
      %s237 = sphi 0, %s236
      %s253 = sphi 0, %s237
    $region4: #{tpu_custom_call.1} parent=1 // loop_header_branch
      %20 = sbr.rel (%p18) target = $region8
    $region5: #{tpu_custom_call.1} parent=1 // loop_body
      %s22 = ssub.s32 %s17, 1
      %s23 = ssub.s32 %s17, 2
      %s30 = sadd.s32 1, %s25
      %p31 = scmp.ge.s32.totalorder %s30, 1
      %s32 = scalar_select %p31, 0, %s30
      %s33 = sadd.s32 1, %s24
      %s34 = scalar_select %p31, %s33, %s24
      %p35 = scmp.ge.s32.totalorder %s34, 2
      %s36 = scalar_select %p35, 0, %s34
      %s37 = ssub.s32 %s24, %s36
      %s38 = ssub.s32 %s25, %s32
      %s39 = sor.u32 %s37, %s38
      %p40 = scmp.eq.s32.totalorder %s39, 0
      %s42 = sadd.s32 %s41, 1
      %s43 = scalar_select %p40, %s41, %s42
      %p46 = pneg %p40
      %p47 = scmp.eq.s32.totalorder %s17, 1
      %p48 = por %p46, %p47
      %p49 = scmp.ne.s32.totalorder %s41, %s44
      %p50 = scmp.eq.s32.totalorder %s17, 0
      %p51 = por %p49, %p50
      %p52 = scmp.ne.s32.totalorder %s41, %s44
      %p53 = scmp.eq.s32.totalorder %s22, 1
      %p54 = por %p52, %p53
      %p55 = scmp.ne.s32.totalorder %s44, %s45
      %p56 = scmp.eq.s32.totalorder %s22, 0
      %p57 = por %p55, %p56
      %p58 = scmp.ne.s32.totalorder %s44, %s45
      %p59 = scmp.eq.s32.totalorder %s23, 1
      %p60 = por %p58, %p59
      %p62 = scmp.ne.s32.totalorder %s45, %s61
      %p63 = scmp.eq.s32.totalorder %s23, 0
      %p64 = por %p62, %p63
      %s65 = ssub.s32 %s24, %s36
      %p66 = scmp.eq.s32.totalorder %s65, 0
      %s68 = sadd.s32 %s67, 1
      %s69 = scalar_select %p66, %s67, %s68
      %p72 = pneg %p66
      %p73 = scmp.eq.s32.totalorder %s17, 1
      %p74 = por %p72, %p73
      %p75 = scmp.ne.s32.totalorder %s67, %s70
      %p76 = scmp.eq.s32.totalorder %s17, 0
      %p77 = por %p75, %p76
      %p78 = scmp.ne.s32.totalorder %s67, %s70
      %p79 = scmp.eq.s32.totalorder %s22, 1
      %p80 = por %p78, %p79
      %p81 = scmp.ne.s32.totalorder %s70, %s71
      %p82 = scmp.eq.s32.totalorder %s22, 0
      %p83 = por %p81, %p82
      %p84 = scmp.ne.s32.totalorder %s70, %s71
      %p85 = scmp.eq.s32.totalorder %s23, 1
      %p86 = por %p84, %p85
      %p88 = scmp.ne.s32.totalorder %s71, %s87
      %p89 = scmp.eq.s32.totalorder %s23, 0
      %p90 = por %p88, %p89
      %s92 = sadd.s32 %s91, 1
      %p95 = scmp.eq.s32.totalorder %s17, 1
      %p96 = scmp.ne.s32.totalorder %s91, %s93
      %p97 = scmp.eq.s32.totalorder %s17, 0
      %p98 = por %p96, %p97
      %p99 = scmp.ne.s32.totalorder %s91, %s93
      %p100 = scmp.eq.s32.totalorder %s22, 1
      %p101 = por %p99, %p100
      %p102 = scmp.ne.s32.totalorder %s93, %s94
      %p103 = scmp.eq.s32.totalorder %s22, 0
      %p104 = por %p102, %p103
      %p105 = scmp.ne.s32.totalorder %s93, %s94
      %p106 = scmp.eq.s32.totalorder %s23, 1
      %p107 = por %p105, %p106
      %p109 = scmp.ne.s32.totalorder %s94, %s108
      %p110 = scmp.eq.s32.totalorder %s23, 0
      %p111 = por %p109, %p110
      %s113 = sadd.s32 %s112, 1
      %p116 = scmp.eq.s32.totalorder %s17, 1
      %p117 = scmp.ne.s32.totalorder %s112, %s114
      %p118 = scmp.eq.s32.totalorder %s17, 0
      %p119 = por %p117, %p118
      %p120 = scmp.ne.s32.totalorder %s112, %s114
      %p121 = scmp.eq.s32.totalorder %s22, 1
      %p122 = por %p120, %p121
      %p123 = scmp.ne.s32.totalorder %s114, %s115
      %p124 = scmp.eq.s32.totalorder %s22, 0
      %p125 = por %p123, %p124
      %p126 = scmp.ne.s32.totalorder %s114, %s115
      %p127 = scmp.eq.s32.totalorder %s23, 1
      %p128 = por %p126, %p127
      %p130 = scmp.ne.s32.totalorder %s115, %s129
      %p131 = scmp.eq.s32.totalorder %s23, 0
      %p132 = por %p130, %p131
      %s134 = sadd.s32 %s133, 1
      %p137 = scmp.eq.s32.totalorder %s17, 1
      %p138 = scmp.ne.s32.totalorder %s133, %s135
      %p139 = scmp.eq.s32.totalorder %s17, 0
      %p140 = por %p138, %p139
      %p141 = scmp.ne.s32.totalorder %s133, %s135
      %p142 = scmp.eq.s32.totalorder %s22, 1
      %p143 = por %p141, %p142
      %p144 = scmp.ne.s32.totalorder %s135, %s136
      %p145 = scmp.eq.s32.totalorder %s22, 0
      %p146 = por %p144, %p145
      %p147 = scmp.ne.s32.totalorder %s135, %s136
      %p148 = scmp.eq.s32.totalorder %s23, 1
      %p149 = por %p147, %p148
      %p151 = scmp.ne.s32.totalorder %s136, %s150
      %p152 = scmp.eq.s32.totalorder %s23, 0
      %p153 = por %p151, %p152
      %s155 = sadd.s32 %s154, 1
      %p158 = scmp.eq.s32.totalorder %s17, 1
      %p159 = scmp.ne.s32.totalorder %s154, %s156
      %p160 = scmp.eq.s32.totalorder %s17, 0
      %p161 = por %p159, %p160
      %p162 = scmp.ne.s32.totalorder %s154, %s156
      %p163 = scmp.eq.s32.totalorder %s22, 1
      %p164 = por %p162, %p163
      %p165 = scmp.ne.s32.totalorder %s156, %s157
      %p166 = scmp.eq.s32.totalorder %s22, 0
      %p167 = por %p165, %p166
      %p168 = scmp.ne.s32.totalorder %s156, %s157
      %p169 = scmp.eq.s32.totalorder %s23, 1
      %p170 = por %p168, %p169
      %p172 = scmp.ne.s32.totalorder %s157, %s171
      %p173 = scmp.eq.s32.totalorder %s23, 0
      %p174 = por %p172, %p173
      %s175 = ssub.s32 %s24, %s36
      %p176 = scmp.eq.s32.totalorder %s175, 0
      %s178 = sadd.s32 %s177, 1
      %s179 = scalar_select %p176, %s177, %s178
      %p182 = pneg %p176
      %p183 = scmp.eq.s32.totalorder %s17, 1
      %p184 = por %p182, %p183
      %p185 = scmp.ne.s32.totalorder %s177, %s180
      %p186 = scmp.eq.s32.totalorder %s17, 0
      %p187 = por %p185, %p186
      %p188 = scmp.ne.s32.totalorder %s177, %s180
      %p189 = scmp.eq.s32.totalorder %s22, 1
      %p190 = por %p188, %p189
      %p191 = scmp.ne.s32.totalorder %s180, %s181
      %p192 = scmp.eq.s32.totalorder %s22, 0
      %p193 = por %p191, %p192
      %p194 = scmp.ne.s32.totalorder %s180, %s181
      %p195 = scmp.eq.s32.totalorder %s23, 1
      %p196 = por %p194, %p195
      %p198 = scmp.ne.s32.totalorder %s181, %s197
      %p199 = scmp.eq.s32.totalorder %s23, 0
      %p200 = por %p198, %p199
      %s201 = ssub.s32 %s24, %s36
      %s202 = ssub.s32 %s25, %s32
      %s203 = sor.u32 %s201, %s202
      %p204 = scmp.eq.s32.totalorder %s203, 0
      %s206 = sadd.s32 %s205, 1
      %s207 = scalar_select %p204, %s205, %s206
      %p210 = pneg %p204
      %p211 = scmp.eq.s32.totalorder %s17, 1
      %p212 = por %p210, %p211
      %p213 = scmp.ne.s32.totalorder %s205, %s208
      %p214 = scmp.eq.s32.totalorder %s17, 0
      %p215 = por %p213, %p214
      %p216 = scmp.ne.s32.totalorder %s205, %s208
      %p217 = scmp.eq.s32.totalorder %s22, 1
      %p218 = por %p216, %p217
      %p219 = scmp.ne.s32.totalorder %s208, %s209
      %p220 = scmp.eq.s32.totalorder %s22, 0
      %p221 = por %p219, %p220
      %p222 = scmp.ne.s32.totalorder %s208, %s209
      %p223 = scmp.eq.s32.totalorder %s23, 1
      %p224 = por %p222, %p223
      %p226 = scmp.ne.s32.totalorder %s209, %s225
      %p227 = scmp.eq.s32.totalorder %s23, 0
      %p228 = por %p226, %p227
      %s229 = ssub.s32 %s24, %s36
      %s230 = ssub.s32 %s25, %s32
      %s231 = sor.u32 %s229, %s230
      %p232 = scmp.eq.s32.totalorder %s231, 0
      %s234 = sadd.s32 %s233, 1
      %s235 = scalar_select %p232, %s233, %s234
      %p238 = pneg %p232
      %p239 = scmp.eq.s32.totalorder %s17, 1
      %p240 = por %p238, %p239
      %p241 = scmp.ne.s32.totalorder %s233, %s236
      %p242 = scmp.eq.s32.totalorder %s17, 0
      %p243 = por %p241, %p242
      %p244 = scmp.ne.s32.totalorder %s233, %s236
      %p245 = scmp.eq.s32.totalorder %s22, 1
      %p246 = por %p244, %p245
      %p247 = scmp.ne.s32.totalorder %s236, %s237
      %p248 = scmp.eq.s32.totalorder %s22, 0
      %p249 = por %p247, %p248
      %p250 = scmp.ne.s32.totalorder %s236, %s237
      %p251 = scmp.eq.s32.totalorder %s23, 1
      %p252 = por %p250, %p251
      %p254 = scmp.ne.s32.totalorder %s237, %s253
      %p255 = scmp.eq.s32.totalorder %s23, 0
      %p256 = por %p254, %p255
      %p257 = scmp.le.s32.totalorder 1, %s17
      %p258 = scmp.lt.s32.totalorder %s17, 3
      %p259 = pnand %p257, %p258
      %p260 = pneg %p259
      // Predicated region
      $region9: #{tpu_custom_call.1} parent=5 // pred_check
        _
      $region10: #{tpu_custom_call.1} parent=5 // pred_check_branch
        %262 = sbr.rel (%p259) target = $region12
      $region11: #{tpu_custom_call.1} parent=5 // pred_region
        %s263 = ssub.s32 %s17, 1
        // Predicated region
        $region13: #{tpu_custom_call.1} parent=11 // pred_check
          %p264 = pneg %p104
        $region14: #{tpu_custom_call.1} parent=11 // pred_check_branch
          %266 = sbr.rel (%p264) target = $region16
        $region15: #{tpu_custom_call.1} parent=11 // pred_region
          _
        $region16: #{tpu_custom_call.1} parent=11 // pred_fallthru
          _
        // Predicated region
        $region17: #{tpu_custom_call.1} parent=11 // pred_check
          %p267 = pneg %p125
        $region18: #{tpu_custom_call.1} parent=11 // pred_check_branch
          %269 = sbr.rel (%p267) target = $region20
        $region19: #{tpu_custom_call.1} parent=11 // pred_region
          _
        $region20: #{tpu_custom_call.1} parent=11 // pred_fallthru
          _
        // Predicated region
        $region21: #{tpu_custom_call.1} parent=11 // pred_check
          %p270 = pneg %p146
        $region22: #{tpu_custom_call.1} parent=11 // pred_check_branch
          %272 = sbr.rel (%p270) target = $region24
        $region23: #{tpu_custom_call.1} parent=11 // pred_region
          _
        $region24: #{tpu_custom_call.1} parent=11 // pred_fallthru
          _
        // Predicated region
        $region25: #{tpu_custom_call.1} parent=11 // pred_check
          %p273 = pneg %p167
        $region26: #{tpu_custom_call.1} parent=11 // pred_check_branch
          %275 = sbr.rel (%p273) target = $region28
        $region27: #{tpu_custom_call.1} parent=11 // pred_region
          _
        $region28: #{tpu_custom_call.1} parent=11 // pred_fallthru
          _
      $region12: #{tpu_custom_call.1} parent=5 // pred_fallthru
        _
      %p276 = scmp.lt.s32.totalorder %s17, 2
      // Predicated region
      $region29: #{tpu_custom_call.1} parent=5 // pred_check
        %p277 = pneg %p276
      $region30: #{tpu_custom_call.1} parent=5 // pred_check_branch
        %279 = sbr.rel (%p277) target = $region32
      $region31: #{tpu_custom_call.1} parent=5 // pred_region
        // Predicated region
        $region33: #{tpu_custom_call.1} parent=31 // pred_check
          %p280 = pneg %p51
        $region34: #{tpu_custom_call.1} parent=31 // pred_check_branch
          %282 = sbr.rel (%p280) target = $region36
        $region35: #{tpu_custom_call.1} parent=31 // pred_region
          %s283 = smul.u32 2, %s25
          %p284 = scmp.lt.s32.totalorder %s24, 1
          %s285 = scalar_select %p284, %s24, 1
          %p286 = scmp.lt.s32.totalorder %s283, 1
          %s287 = scalar_select %p286, %s283, 1
          %s288 = smul.addr %s285, 2
          %s289 = sadd.s32 %s287, %s288
          %s290 = smul.addr %s289, 4
          %s291 = scalar_lea.vmem %s0, %s290
          %s292 = smul.u32 2, %s25
        $region36: #{tpu_custom_call.1} parent=31 // pred_fallthru
          _
        // Predicated region
        $region37: #{tpu_custom_call.1} parent=31 // pred_check
          %p293 = pneg %p77
        $region38: #{tpu_custom_call.1} parent=31 // pred_check_branch
          %295 = sbr.rel (%p293) target = $region40
        $region39: #{tpu_custom_call.1} parent=31 // pred_region
          %p296 = scmp.lt.s32.totalorder %s24, 1
          %s297 = scalar_select %p296, %s24, 1
          %s298 = smul.addr %s297, 4
          %s299 = smul.addr %s298, 4
          %s300 = scalar_lea.vmem %s1, %s299
        $region40: #{tpu_custom_call.1} parent=31 // pred_fallthru
          _
        // Predicated region
        $region41: #{tpu_custom_call.1} parent=31 // pred_check
          %p301 = pneg %p187
        $region42: #{tpu_custom_call.1} parent=31 // pred_check_branch
          %303 = sbr.rel (%p301) target = $region44
        $region43: #{tpu_custom_call.1} parent=31 // pred_region
          %p304 = scmp.lt.s32.totalorder %s24, 1
          %s305 = scalar_select %p304, %s24, 1
          %s306 = scalar_lea.vmem %s6, %s305
        $region44: #{tpu_custom_call.1} parent=31 // pred_fallthru
          _
        // Predicated region
        $region45: #{tpu_custom_call.1} parent=31 // pred_check
          %p307 = pneg %p215
        $region46: #{tpu_custom_call.1} parent=31 // pred_check_branch
          %309 = sbr.rel (%p307) target = $region48
        $region47: #{tpu_custom_call.1} parent=31 // pred_region
          %s310 = smul.u32 2, %s25
          %p311 = scmp.lt.s32.totalorder %s24, 1
          %s312 = scalar_select %p311, %s24, 1
          %p313 = scmp.lt.s32.totalorder %s310, 1
          %s314 = scalar_select %p313, %s310, 1
          %s315 = smul.addr %s312, 2
          %s316 = sadd.s32 %s314, %s315
          %s317 = smul.addr %s316, 8
          %s318 = scalar_lea.vmem %s7, %s317
          %s319 = smul.u32 2, %s25
        $region48: #{tpu_custom_call.1} parent=31 // pred_fallthru
          _
      $region32: #{tpu_custom_call.1} parent=5 // pred_fallthru
        _
      %p320 = scmp.le.s32.totalorder 1, %s17
      %p321 = scmp.lt.s32.totalorder %s17, 3
      %p322 = pnand %p320, %p321
      %p323 = pneg %p322
      // Predicated region
      $region49: #{tpu_custom_call.1} parent=5 // pred_check
        _
      $region50: #{tpu_custom_call.1} parent=5 // pred_check_branch
        %325 = sbr.rel (%p322) target = $region52
      $region51: #{tpu_custom_call.1} parent=5 // pred_region
        %s326 = ssub.s32 %s17, 1
        %s327 = smul.u32 2, %s27
        %p328 = scmp.lt.s32.totalorder %s26, 1
        %s329 = scalar_select %p328, %s26, 1
        %p330 = scmp.lt.s32.totalorder %s327, 1
        %s331 = scalar_select %p330, %s327, 1
        %s332 = smul.addr %s329, 2
        %s333 = sadd.s32 %s331, %s332
        %s334 = smul.addr %s333, 4
        %s335 = scalar_lea.vmem %s0, %s334
        %p336 = pneg %p57
        %p337 = pneg %p54
        %p338 = scmp.lt.s32.totalorder %s26, 1
        %s339 = scalar_select %p338, %s26, 1
        %s340 = smul.addr %s339, 4
        %s341 = smul.addr %s340, 4
        %s342 = scalar_lea.vmem %s1, %s341
        %p343 = pneg %p83
        %p344 = pneg %p80
        %p345 = pneg %p104
        %p346 = pneg %p101
        %p347 = pneg %p125
        %p348 = pneg %p122
        %p349 = pneg %p146
        %p350 = pneg %p143
        %p351 = pneg %p167
        %p352 = pneg %p164
        %p353 = scmp.lt.s32.totalorder %s26, 1
        %s354 = scalar_select %p353, %s26, 1
        %s355 = scalar_lea.vmem %s6, %s354
        %p356 = pneg %p193
        %p357 = pneg %p190
        %s358 = smul.u32 2, %s27
        %p359 = scmp.lt.s32.totalorder %s26, 1
        %s360 = scalar_select %p359, %s26, 1
        %p361 = scmp.lt.s32.totalorder %s358, 1
        %s362 = scalar_select %p361, %s358, 1
        %s363 = smul.addr %s360, 2
        %s364 = sadd.s32 %s362, %s363
        %s365 = smul.addr %s364, 8
        %s366 = scalar_lea.vmem %s7, %s365
        %p367 = pneg %p221
        %p368 = pneg %p218
        %p369 = pneg %p249
        %p370 = pneg %p246
        %s371 = sand.u32 %s236, 1
        %s372 = scalar_lea.sflag [#allocation3], %s371
        %s373 = sand.u32 %s236, 1
        %s374 = smul.addr %s373, 128
        %s375 = scalar_lea.vmem [#allocation2], %s374
        %s376 = smul.u32 2, %s27
        %p377 = scmp.lt.s32.totalorder %s26, 1
        %s378 = scalar_select %p377, %s26, 1
        %p379 = scmp.lt.s32.totalorder %s376, 1
        %s380 = scalar_select %p379, %s376, 1
        %s381 = smul.addr %s378, 2
        %s382 = sadd.s32 %s380, %s381
        %s383 = smul.addr %s382, 4
        %s384 = scalar_lea.vmem %s0, %s383
        %s385 = smul.u32 2, %s27
        %p386 = scmp.lt.s32.totalorder %s26, 1
        %s387 = scalar_select %p386, %s26, 1
        %s388 = smul.addr %s387, 4
        %s389 = smul.addr %s388, 4
        %s390 = scalar_lea.vmem %s1, %s389
        %p391 = scmp.lt.s32.totalorder %s26, 1
        %s392 = scalar_select %p391, %s26, 1
        %s393 = scalar_lea.vmem %s6, %s392
        %s394 = smul.u32 2, %s27
        %p395 = scmp.lt.s32.totalorder %s26, 1
        %s396 = scalar_select %p395, %s26, 1
        %p397 = scmp.lt.s32.totalorder %s394, 1
        %s398 = scalar_select %p397, %s394, 1
        %s399 = smul.addr %s396, 2
        %s400 = sadd.s32 %s398, %s399
        %s401 = smul.addr %s400, 8
        %s402 = scalar_lea.vmem %s7, %s401
        %s403 = smul.u32 2, %s27
        %s404 = smul.u32 2, %s27
        %v406 = vld [vmem:[%s384] sm:$0xf]
        %v407 = vld [vmem:[%s384 + $0x4] sm:$0xf]
        %v408 = vld [vmem:[%s390] sm:$0xf]
        %v409 = vld [vmem:[%s390 + $0x4] sm:$0xf]
        %v410 = vld [vmem:[%s390 + $0x8] sm:$0xf]
        %v411 = vld [vmem:[%s390 + $0xc] sm:$0xf]
        %v412 = vld [vmem:[%s2] sm:$0xff]
        %v413 = vld [vmem:[%s2 + $0x8] sm:$0xff]
        %v414 = vld [vmem:[%s2 + $0x10] sm:$0xff]
        %v415 = vld [vmem:[%s2 + $0x18] sm:$0xff]
        %v416 = vld [vmem:[%s3] sm:$0xf]
        %v417 = vld [vmem:[%s3 + $0x4] sm:$0xf]
        %v418 = vld [vmem:[%s3 + $0x8] sm:$0xf]
        %v419 = vld [vmem:[%s3 + $0xc] sm:$0xf]
        %v420 = vld [vmem:[%s4] sm:$0xf]
        %v421 = vld [vmem:[%s5] sm:$0x1]
        %v424 = vunpack.c.l.b16 %v406
        %v425 = vunpack.c.l.b16 %v407
        %v426 = vpack.c.b16 %v425, %v424
        %v431 = vunpack.c.l.b16 %v412
        %v432 = vunpack.c.h.b16 %v412
        %v433 = vunpack.c.l.b16 %v413
        %v434 = vunpack.c.h.b16 %v413
        %v435 = vunpack.c.l.b16 %v414
        %v436 = vunpack.c.h.b16 %v414
        %v437 = vunpack.c.l.b16 %v415
        %v438 = vunpack.c.h.b16 %v415
        %v439 = vpack.c.b16 %v433, %v431
        %v440 = vpack.c.b16 %v434, %v432
        %v441 = vpack.c.b16 %v437, %v435
        %v442 = vpack.c.b16 %v438, %v436
        %vm447 = vcmask 261120
        %v449 = vsel %vm447, %v426, 0
        %451 = vmatprep.subr.bf16.mxu0 %v440
        %452 = vmatpush1.bf16.msra.mxu0 %v439
        %453 = vmatprep.subr.bf16.mxu0 %v442
        %454 = vmatpush1.bf16.msra.mxu0 %v441
        %455 = vmatprep.subr.bf16.mxu0 0
        %456 = vmatpush1.bf16.msra.mxu0 0
        %457 = vmatprep.subr.bf16.mxu0 0
        %458 = vmatpush1.bf16.msra.mxu0 0
        %459 = vmatprep.subr.bf16.mxu0 0
        %460 = vmatpush1.bf16.msra.mxu0 0
        %461 = vmatprep.subr.bf16.mxu0 0
        %462 = vmatpush1.bf16.msra.mxu0 0
        %463 = vmatprep.subr.bf16.mxu0 0
        %464 = vmatpush1.bf16.msra.mxu0 0
        %465 = vmatprep.subr.bf16.mxu0 0
        %466 = vmatpush1.bf16.msra.mxu0 0
        %467 = vmatprep.subr.bf16.mxu0 0
        %468 = vmatpush1.bf16.msra.mxu0 0
        %469 = vmatprep.subr.bf16.mxu0 0
        %470 = vmatpush1.bf16.msra.mxu0 0
        %471 = vmatprep.subr.bf16.mxu0 0
        %472 = vmatpush1.bf16.msra.mxu0 0
        %473 = vmatprep.subr.bf16.mxu0 0
        %474 = vmatpush1.bf16.msra.mxu0 0
        %475 = vmatprep.subr.bf16.mxu0 0
        %476 = vmatpush1.bf16.msra.mxu0 0
        %477 = vmatprep.subr.bf16.mxu0 0
        %478 = vmatpush1.bf16.msra.mxu0 0
        %479 = vmatprep.subr.bf16.mxu0 0
        %480 = vmatpush1.bf16.msra.mxu0 0
        %481 = vmatprep.subr.bf16.mxu0 0
        %482 = vmatpush1.bf16.msra.mxu0 0
        %483 = vmatprep.mubr.bf16.mxu0 0
        %484 = vmatmul.mubr.bf16.gmra.mrb[0].mxu0 %v449
        %v485 = vpop.f32.mrb[0].mxu0
        %v486 = vadd.f32 0.0, %v485
        %v487 = vpop.f32.mrb[0].mxu0
        %v488 = vadd.f32 0.0, %v487
        %v489 = vpop.f32.mrb[0].mxu0
        %v490 = vadd.f32 0.0, %v489
        %v491 = vpop.f32.mrb[0].mxu0
        %v492 = vadd.f32 0.0, %v491
        %493 = vdwg.mxu0
        %v494 = vpack.c.bf16 %v490, %v486
        %v495 = vpack.c.bf16 %v492, %v488
        %v497 = vlaneseq
        %v498 = vshrl.u32 %v497, 7
        %v499 = vsub.s32 0, %v498
        %v500 = vrot.slane %v421, %v499
        %v506 = vunpack.c.l.b16 %v416
        %v507 = vunpack.c.l.b16 %v417
        %v508 = vunpack.c.l.b16 %v418
        %v509 = vunpack.c.l.b16 %v419
        %v510 = vpack.c.b16 %v507, %v506
        %v511 = vpack.c.b16 %v509, %v508
        %514 = vmatprep.subr.bf16.mxu0 0
        %515 = vmatpush1.bf16.msra.mxu0 %v510
        %516 = vmatprep.subr.bf16.mxu0 0
        %517 = vmatpush1.bf16.msra.mxu0 %v511
        %518 = vmatprep.subr.bf16.mxu0 0
        %519 = vmatpush1.bf16.msra.mxu0 0
        %520 = vmatprep.subr.bf16.mxu0 0
        %521 = vmatpush1.bf16.msra.mxu0 0
        %522 = vmatprep.subr.bf16.mxu0 0
        %523 = vmatpush1.bf16.msra.mxu0 0
        %524 = vmatprep.subr.bf16.mxu0 0
        %525 = vmatpush1.bf16.msra.mxu0 0
        %526 = vmatprep.subr.bf16.mxu0 0
        %527 = vmatpush1.bf16.msra.mxu0 0
        %528 = vmatprep.subr.bf16.mxu0 0
        %529 = vmatpush1.bf16.msra.mxu0 0
        %530 = vmatprep.subr.bf16.mxu0 0
        %531 = vmatpush1.bf16.msra.mxu0 0
        %532 = vmatprep.subr.bf16.mxu0 0
        %533 = vmatpush1.bf16.msra.mxu0 0
        %534 = vmatprep.subr.bf16.mxu0 0
        %535 = vmatpush1.bf16.msra.mxu0 0
        %536 = vmatprep.subr.bf16.mxu0 0
        %537 = vmatpush1.bf16.msra.mxu0 0
        %538 = vmatprep.subr.bf16.mxu0 0
        %539 = vmatpush1.bf16.msra.mxu0 0
        %540 = vmatprep.subr.bf16.mxu0 0
        %541 = vmatpush1.bf16.msra.mxu0 0
        %542 = vmatprep.subr.bf16.mxu0 0
        %543 = vmatpush1.bf16.msra.mxu0 0
        %544 = vmatprep.subr.bf16.mxu0 0
        %545 = vmatpush1.bf16.msra.mxu0 0
        %546 = vmatprep.mubr.bf16.mxu0 0
        %547 = vmatmul.mubr.bf16.gmra.mrb[0].mxu0 %v449
        %v548 = vpop.f32.mrb[0].mxu0
        %v549 = vadd.f32 %v500, %v548
        %v550 = vpop.f32.mrb[0].mxu0
        %v551 = vpop.f32.mrb[0].mxu0
        %v552 = vadd.f32 %v500, %v551
        %v553 = vpop.f32.mrb[0].mxu0
        %554 = vdwg.mxu0
        %v559 = vunpack.c.l.b16 %v408
        %v560 = vunpack.c.l.b16 %v409
        %v561 = vunpack.c.l.b16 %v410
        %v562 = vunpack.c.l.b16 %v411
        %v563 = vpack.c.b16 %v560, %v559
        %v564 = vpack.c.b16 %v562, %v561
        %v568 = vsel %vm447, %v420, 0
        %570 = vmatprep.subr.bf16.mxu0 0
        %571 = vmatpush1.bf16.msra.mxu0 %v563
        %572 = vmatprep.subr.bf16.mxu0 0
        %573 = vmatpush1.bf16.msra.mxu0 %v564
        %574 = vmatprep.subr.bf16.mxu0 0
        %575 = vmatpush1.bf16.msra.mxu0 0
        %576 = vmatprep.subr.bf16.mxu0 0
        %577 = vmatpush1.bf16.msra.mxu0 0
        %578 = vmatprep.subr.bf16.mxu0 0
        %579 = vmatpush1.bf16.msra.mxu0 0
        %580 = vmatprep.subr.bf16.mxu0 0
        %581 = vmatpush1.bf16.msra.mxu0 0
        %582 = vmatprep.subr.bf16.mxu0 0
        %583 = vmatpush1.bf16.msra.mxu0 0
        %584 = vmatprep.subr.bf16.mxu0 0
        %585 = vmatpush1.bf16.msra.mxu0 0
        %586 = vmatprep.subr.bf16.mxu0 0
        %587 = vmatpush1.bf16.msra.mxu0 0
        %588 = vmatprep.subr.bf16.mxu0 0
        %589 = vmatpush1.bf16.msra.mxu0 0
        %590 = vmatprep.subr.bf16.mxu0 0
        %591 = vmatpush1.bf16.msra.mxu0 0
        %592 = vmatprep.subr.bf16.mxu0 0
        %593 = vmatpush1.bf16.msra.mxu0 0
        %594 = vmatprep.subr.bf16.mxu0 0
        %595 = vmatpush1.bf16.msra.mxu0 0
        %596 = vmatprep.subr.bf16.mxu0 0
        %597 = vmatpush1.bf16.msra.mxu0 0
        %598 = vmatprep.subr.bf16.mxu0 0
        %599 = vmatpush1.bf16.msra.mxu0 0
        %600 = vmatprep.subr.bf16.mxu0 0
        %601 = vmatpush1.bf16.msra.mxu0 0
        %602 = vmatprep.mubr.bf16.mxu0 0
        %603 = vmatmul.mubr.bf16.gmra.mrb[0].mxu0 %v568
        %v604 = vpop.f32.mrb[0].mxu0
        %v605 = vadd.f32 0.0, %v604
        %v606 = vpop.f32.mrb[0].mxu0
        %v607 = vpop.f32.mrb[0].mxu0
        %v608 = vpop.f32.mrb[0].mxu0
        %609 = vdwg.mxu0
        %v610 = vld [vmem:[%s402] sm:$0xff]
        %v611 = vld [vmem:[%s402 + $0x8] sm:$0xff]
        %v612 = vld [vmem:[%s393] sm:$0x1]
        %614 = vset.pattern.permute.xlu0 0
        %615 = vperm.xlu0 %614, %v610
        %v616 = vpop.permute.xlu0 %615
        %619 = vset.pattern.permute.xlu0 0
        %620 = vperm.xlu0 %619, %v611
        %v621 = vpop.permute.xlu0 %620
        %v624 = vlaneseq
        %v625 = vshrl.u32 %v624, 7
        %v626 = vsub.s32 0, %v625
        %v627 = vrot.slane %v612, %v626
        %v629 = vmul.f32 %v616, %v627
        %v630 = vmul.f32 %v621, %v627
        %vm631 = vcmp.gt.f32.partialorder %v629, 0.5
        %vm632 = vcmp.gt.f32.partialorder %v630, 0.5
        %v633 = vlaneseq
        %v634 = vshrl.u32 %v633, 7
        %v635 = vadd.s32 %v634, 8
        %s636 = smul.u32 %s27, 16
        %v637 = vstv %s636
        %v638 = vadd.s32 %v634, %v637
        %v639 = vadd.s32 %v635, %v637
        %v640 = vlaneseq
        %v641 = vand.u32 %v640, 127
        %vm642 = vcmp.gt.s32.totalorder %v638, %v641
        %vm643 = vcmp.gt.s32.totalorder %v639, %v641
        %v644 = vsel %vm642, 1e+12, 0.0
        %v645 = vsel %vm643, 1e+12, 0.0
        %647 = vset.pattern.permute.xlu0 0
        %648 = vperm.xlu0 %647, %v549
        %v649 = vpop.permute.xlu0 %648
        %652 = vset.pattern.permute.xlu0 0
        %653 = vperm.xlu0 %652, %v552
        %v654 = vpop.permute.xlu0 %653
        %v657 = vsel %vm447, %v494, 0
        %659 = vmatprep.subr.bf16.mxu0 0
        %660 = vmatpush1.bf16.msra.mxu0 %v563
        %661 = vmatprep.subr.bf16.mxu0 0
        %662 = vmatpush1.bf16.msra.mxu0 %v564
        %663 = vmatprep.subr.bf16.mxu0 0
        %664 = vmatpush1.bf16.msra.mxu0 0
        %665 = vmatprep.subr.bf16.mxu0 0
        %666 = vmatpush1.bf16.msra.mxu0 0
        %667 = vmatprep.subr.bf16.mxu0 0
        %668 = vmatpush1.bf16.msra.mxu0 0
        %669 = vmatprep.subr.bf16.mxu0 0
        %670 = vmatpush1.bf16.msra.mxu0 0
        %671 = vmatprep.subr.bf16.mxu0 0
        %672 = vmatpush1.bf16.msra.mxu0 0
        %673 = vmatprep.subr.bf16.mxu0 0
        %674 = vmatpush1.bf16.msra.mxu0 0
        %675 = vmatprep.subr.bf16.mxu0 0
        %676 = vmatpush1.bf16.msra.mxu0 0
        %677 = vmatprep.subr.bf16.mxu0 0
        %678 = vmatpush1.bf16.msra.mxu0 0
        %679 = vmatprep.subr.bf16.mxu0 0
        %680 = vmatpush1.bf16.msra.mxu0 0
        %681 = vmatprep.subr.bf16.mxu0 0
        %682 = vmatpush1.bf16.msra.mxu0 0
        %683 = vmatprep.subr.bf16.mxu0 0
        %684 = vmatpush1.bf16.msra.mxu0 0
        %685 = vmatprep.subr.bf16.mxu0 0
        %686 = vmatpush1.bf16.msra.mxu0 0
        %687 = vmatprep.subr.bf16.mxu0 0
        %688 = vmatpush1.bf16.msra.mxu0 0
        %689 = vmatprep.subr.bf16.mxu0 0
        %690 = vmatpush1.bf16.msra.mxu0 0
        %691 = vmatprep.mubr.bf16.mxu0 0
        %692 = vmatmul.mubr.bf16.gmra.mrb[0].mxu0 %v657
        %v693 = vpop.f32.mrb[0].mxu0
        %v694 = vadd.f32 %v649, %v693
        %v695 = vpop.f32.mrb[0].mxu0
        %v696 = vpop.f32.mrb[0].mxu0
        %v697 = vadd.f32 %v654, %v696
        %v698 = vpop.f32.mrb[0].mxu0
        %699 = vdwg.mxu0
        %v700 = vlaneseq
        %v701 = vshrl.u32 %v700, 7
        %v702 = vsub.s32 0, %v701
        %v703 = vrot.slane %v605, %v702
        %v704 = vadd.f32 %v694, %v703
        %v705 = vadd.f32 %v697, %v703
        %v706 = vsel %vm631, %v704, -1e+12
        %v707 = vsel %vm632, %v705, -1e+12
        %v708 = vsub.f32 %v706, %v644
        %v709 = vsub.f32 %v707, %v645
        %vm710 = vcmask 130048
        %711 = vst.msk [vmem:[%s375] sm:$0xff] %vm710, %v708
        %712 = vst.msk [vmem:[%s375 + $0x8] sm:$0xff] %vm710, %v709
        %713 = vset.pattern.permute.xlu0 1
        %714 = vperm.xlu0 %713, %v549
        %v715 = vpop.permute.xlu0 %714
        %717 = vset.pattern.permute.xlu0 1
        %718 = vperm.xlu0 %717, %v552
        %v719 = vpop.permute.xlu0 %718
        %722 = vrot.lane.b32.xlu0 %v494, 96
        %v723 = vpop.permute.xlu0 %722
        %v725 = vsel %vm447, %v723, 0
        %727 = vmatprep.subr.bf16.mxu0 0
        %728 = vmatpush1.bf16.msra.mxu0 %v563
        %729 = vmatprep.subr.bf16.mxu0 0
        %730 = vmatpush1.bf16.msra.mxu0 %v564
        %731 = vmatprep.subr.bf16.mxu0 0
        %732 = vmatpush1.bf16.msra.mxu0 0
        %733 = vmatprep.subr.bf16.mxu0 0
        %734 = vmatpush1.bf16.msra.mxu0 0
        %735 = vmatprep.subr.bf16.mxu0 0
        %736 = vmatpush1.bf16.msra.mxu0 0
        %737 = vmatprep.subr.bf16.mxu0 0
        %738 = vmatpush1.bf16.msra.mxu0 0
        %739 = vmatprep.subr.bf16.mxu0 0
        %740 = vmatpush1.bf16.msra.mxu0 0
        %741 = vmatprep.subr.bf16.mxu0 0
        %742 = vmatpush1.bf16.msra.mxu0 0
        %743 = vmatprep.subr.bf16.mxu0 0
        %744 = vmatpush1.bf16.msra.mxu0 0
        %745 = vmatprep.subr.bf16.mxu0 0
        %746 = vmatpush1.bf16.msra.mxu0 0
        %747 = vmatprep.subr.bf16.mxu0 0
        %748 = vmatpush1.bf16.msra.mxu0 0
        %749 = vmatprep.subr.bf16.mxu0 0
        %750 = vmatpush1.bf16.msra.mxu0 0
        %751 = vmatprep.subr.bf16.mxu0 0
        %752 = vmatpush1.bf16.msra.mxu0 0
        %753 = vmatprep.subr.bf16.mxu0 0
        %754 = vmatpush1.bf16.msra.mxu0 0
        %755 = vmatprep.subr.bf16.mxu0 0
        %756 = vmatpush1.bf16.msra.mxu0 0
        %757 = vmatprep.subr.bf16.mxu0 0
        %758 = vmatpush1.bf16.msra.mxu0 0
        %759 = vmatprep.mubr.bf16.mxu0 0
        %760 = vmatmul.mubr.bf16.gmra.mrb[0].mxu0 %v725
        %v761 = vpop.f32.mrb[0].mxu0
        %v762 = vadd.f32 %v715, %v761
        %v763 = vpop.f32.mrb[0].mxu0
        %v764 = vpop.f32.mrb[0].mxu0
        %v765 = vadd.f32 %v719, %v764
        %v766 = vpop.f32.mrb[0].mxu0
        %767 = vdwg.mxu0
        %v768 = vlaneseq
        %v769 = vshrl.u32 %v768, 7
        %v770 = vsub.s32 1, %v769
        %v771 = vrot.slane %v605, %v770
        %v772 = vadd.f32 %v762, %v771
        %v773 = vadd.f32 %v765, %v771
        %v774 = vsel %vm631, %v772, -1e+12
        %v775 = vsel %vm632, %v773, -1e+12
        %v776 = vsub.f32 %v774, %v644
        %v777 = vsub.f32 %v775, %v645
        %s778 = scalar_lea.vmem %s375, 16 [#allocation2]
        %779 = vst.msk [vmem:[%s778] sm:$0xff] %vm710, %v776
        %780 = vst.msk [vmem:[%s778 + $0x8] sm:$0xff] %vm710, %v777
        %781 = vset.pattern.permute.xlu0 2
        %782 = vperm.xlu0 %781, %v549
        %v783 = vpop.permute.xlu0 %782
        %785 = vset.pattern.permute.xlu0 2
        %786 = vperm.xlu0 %785, %v552
        %v787 = vpop.permute.xlu0 %786
        %789 = vrot.lane.b32.xlu0 %v494, 64
        %v790 = vpop.permute.xlu0 %789
        %v792 = vsel %vm447, %v790, 0
        %794 = vmatprep.subr.bf16.mxu0 0
        %795 = vmatpush1.bf16.msra.mxu0 %v563
        %796 = vmatprep.subr.bf16.mxu0 0
        %797 = vmatpush1.bf16.msra.mxu0 %v564
        %798 = vmatprep.subr.bf16.mxu0 0
        %799 = vmatpush1.bf16.msra.mxu0 0
        %800 = vmatprep.subr.bf16.mxu0 0
        %801 = vmatpush1.bf16.msra.mxu0 0
        %802 = vmatprep.subr.bf16.mxu0 0
        %803 = vmatpush1.bf16.msra.mxu0 0
        %804 = vmatprep.subr.bf16.mxu0 0
        %805 = vmatpush1.bf16.msra.mxu0 0
        %806 = vmatprep.subr.bf16.mxu0 0
        %807 = vmatpush1.bf16.msra.mxu0 0
        %808 = vmatprep.subr.bf16.mxu0 0
        %809 = vmatpush1.bf16.msra.mxu0 0
        %810 = vmatprep.subr.bf16.mxu0 0
        %811 = vmatpush1.bf16.msra.mxu0 0
        %812 = vmatprep.subr.bf16.mxu0 0
        %813 = vmatpush1.bf16.msra.mxu0 0
        %814 = vmatprep.subr.bf16.mxu0 0
        %815 = vmatpush1.bf16.msra.mxu0 0
        %816 = vmatprep.subr.bf16.mxu0 0
        %817 = vmatpush1.bf16.msra.mxu0 0
        %818 = vmatprep.subr.bf16.mxu0 0
        %819 = vmatpush1.bf16.msra.mxu0 0
        %820 = vmatprep.subr.bf16.mxu0 0
        %821 = vmatpush1.bf16.msra.mxu0 0
        %822 = vmatprep.subr.bf16.mxu0 0
        %823 = vmatpush1.bf16.msra.mxu0 0
        %824 = vmatprep.subr.bf16.mxu0 0
        %825 = vmatpush1.bf16.msra.mxu0 0
        %826 = vmatprep.mubr.bf16.mxu0 0
        %827 = vmatmul.mubr.bf16.gmra.mrb[0].mxu0 %v792
        %v828 = vpop.f32.mrb[0].mxu0
        %v829 = vadd.f32 %v783, %v828
        %v830 = vpop.f32.mrb[0].mxu0
        %v831 = vpop.f32.mrb[0].mxu0
        %v832 = vadd.f32 %v787, %v831
        %v833 = vpop.f32.mrb[0].mxu0
        %834 = vdwg.mxu0
        %v835 = vlaneseq
        %v836 = vshrl.u32 %v835, 7
        %v837 = vsub.s32 2, %v836
        %v838 = vrot.slane %v605, %v837
        %v839 = vadd.f32 %v829, %v838
        %v840 = vadd.f32 %v832, %v838
        %v841 = vsel %vm631, %v839, -1e+12
        %v842 = vsel %vm632, %v840, -1e+12
        %v843 = vsub.f32 %v841, %v644
        %v844 = vsub.f32 %v842, %v645
        %s845 = scalar_lea.vmem %s375, 32 [#allocation2]
        %846 = vst.msk [vmem:[%s845] sm:$0xff] %vm710, %v843
        %847 = vst.msk [vmem:[%s845 + $0x8] sm:$0xff] %vm710, %v844
        %848 = vset.pattern.permute.xlu0 3
        %849 = vperm.xlu0 %848, %v549
        %v850 = vpop.permute.xlu0 %849
        %852 = vset.pattern.permute.xlu0 3
        %853 = vperm.xlu0 %852, %v552
        %v854 = vpop.permute.xlu0 %853
        %856 = vrot.lane.b32.xlu0 %v494, 32
        %v857 = vpop.permute.xlu0 %856
        %v859 = vsel %vm447, %v857, 0
        %861 = vmatprep.subr.bf16.mxu0 0
        %862 = vmatpush1.bf16.msra.mxu0 %v563
        %863 = vmatprep.subr.bf16.mxu0 0
        %864 = vmatpush1.bf16.msra.mxu0 %v564
        %865 = vmatprep.subr.bf16.mxu0 0
        %866 = vmatpush1.bf16.msra.mxu0 0
        %867 = vmatprep.subr.bf16.mxu0 0
        %868 = vmatpush1.bf16.msra.mxu0 0
        %869 = vmatprep.subr.bf16.mxu0 0
        %870 = vmatpush1.bf16.msra.mxu0 0
        %871 = vmatprep.subr.bf16.mxu0 0
        %872 = vmatpush1.bf16.msra.mxu0 0
        %873 = vmatprep.subr.bf16.mxu0 0
        %874 = vmatpush1.bf16.msra.mxu0 0
        %875 = vmatprep.subr.bf16.mxu0 0
        %876 = vmatpush1.bf16.msra.mxu0 0
        %877 = vmatprep.subr.bf16.mxu0 0
        %878 = vmatpush1.bf16.msra.mxu0 0
        %879 = vmatprep.subr.bf16.mxu0 0
        %880 = vmatpush1.bf16.msra.mxu0 0
        %881 = vmatprep.subr.bf16.mxu0 0
        %882 = vmatpush1.bf16.msra.mxu0 0
        %883 = vmatprep.subr.bf16.mxu0 0
        %884 = vmatpush1.bf16.msra.mxu0 0
        %885 = vmatprep.subr.bf16.mxu0 0
        %886 = vmatpush1.bf16.msra.mxu0 0
        %887 = vmatprep.subr.bf16.mxu0 0
        %888 = vmatpush1.bf16.msra.mxu0 0
        %889 = vmatprep.subr.bf16.mxu0 0
        %890 = vmatpush1.bf16.msra.mxu0 0
        %891 = vmatprep.subr.bf16.mxu0 0
        %892 = vmatpush1.bf16.msra.mxu0 0
        %893 = vmatprep.mubr.bf16.mxu0 0
        %894 = vmatmul.mubr.bf16.gmra.mrb[0].mxu0 %v859
        %v895 = vpop.f32.mrb[0].mxu0
        %v896 = vadd.f32 %v850, %v895
        %v897 = vpop.f32.mrb[0].mxu0
        %v898 = vpop.f32.mrb[0].mxu0
        %v899 = vadd.f32 %v854, %v898
        %v900 = vpop.f32.mrb[0].mxu0
        %901 = vdwg.mxu0
        %v902 = vlaneseq
        %v903 = vshrl.u32 %v902, 7
        %v904 = vsub.s32 3, %v903
        %v905 = vrot.slane %v605, %v904
        %v906 = vadd.f32 %v896, %v905
        %v907 = vadd.f32 %v899, %v905
        %v908 = vsel %vm631, %v906, -1e+12
        %v909 = vsel %vm632, %v907, -1e+12
        %v910 = vsub.f32 %v908, %v644
        %v911 = vsub.f32 %v909, %v645
        %s912 = scalar_lea.vmem %s375, 48 [#allocation2]
        %913 = vst.msk [vmem:[%s912] sm:$0xff] %vm710, %v910
        %914 = vst.msk [vmem:[%s912 + $0x8] sm:$0xff] %vm710, %v911
        %915 = vset.pattern.permute.xlu0 4
        %916 = vperm.xlu0 %915, %v549
        %v917 = vpop.permute.xlu0 %916
        %919 = vset.pattern.permute.xlu0 4
        %920 = vperm.xlu0 %919, %v552
        %v921 = vpop.permute.xlu0 %920
        %v924 = vsel %vm447, %v495, 0
        %926 = vmatprep.subr.bf16.mxu0 0
        %927 = vmatpush1.bf16.msra.mxu0 %v563
        %928 = vmatprep.subr.bf16.mxu0 0
        %929 = vmatpush1.bf16.msra.mxu0 %v564
        %930 = vmatprep.subr.bf16.mxu0 0
        %931 = vmatpush1.bf16.msra.mxu0 0
        %932 = vmatprep.subr.bf16.mxu0 0
        %933 = vmatpush1.bf16.msra.mxu0 0
        %934 = vmatprep.subr.bf16.mxu0 0
        %935 = vmatpush1.bf16.msra.mxu0 0
        %936 = vmatprep.subr.bf16.mxu0 0
        %937 = vmatpush1.bf16.msra.mxu0 0
        %938 = vmatprep.subr.bf16.mxu0 0
        %939 = vmatpush1.bf16.msra.mxu0 0
        %940 = vmatprep.subr.bf16.mxu0 0
        %941 = vmatpush1.bf16.msra.mxu0 0
        %942 = vmatprep.subr.bf16.mxu0 0
        %943 = vmatpush1.bf16.msra.mxu0 0
        %944 = vmatprep.subr.bf16.mxu0 0
        %945 = vmatpush1.bf16.msra.mxu0 0
        %946 = vmatprep.subr.bf16.mxu0 0
        %947 = vmatpush1.bf16.msra.mxu0 0
        %948 = vmatprep.subr.bf16.mxu0 0
        %949 = vmatpush1.bf16.msra.mxu0 0
        %950 = vmatprep.subr.bf16.mxu0 0
        %951 = vmatpush1.bf16.msra.mxu0 0
        %952 = vmatprep.subr.bf16.mxu0 0
        %953 = vmatpush1.bf16.msra.mxu0 0
        %954 = vmatprep.subr.bf16.mxu0 0
        %955 = vmatpush1.bf16.msra.mxu0 0
        %956 = vmatprep.subr.bf16.mxu0 0
        %957 = vmatpush1.bf16.msra.mxu0 0
        %958 = vmatprep.mubr.bf16.mxu0 0
        %959 = vmatmul.mubr.bf16.gmra.mrb[0].mxu0 %v924
        %v960 = vpop.f32.mrb[0].mxu0
        %v961 = vadd.f32 %v917, %v960
        %v962 = vpop.f32.mrb[0].mxu0
        %v963 = vpop.f32.mrb[0].mxu0
        %v964 = vadd.f32 %v921, %v963
        %v965 = vpop.f32.mrb[0].mxu0
        %966 = vdwg.mxu0
        %v967 = vlaneseq
        %v968 = vshrl.u32 %v967, 7
        %v969 = vsub.s32 4, %v968
        %v970 = vrot.slane %v605, %v969
        %v971 = vadd.f32 %v961, %v970
        %v972 = vadd.f32 %v964, %v970
        %v973 = vsel %vm631, %v971, -1e+12
        %v974 = vsel %vm632, %v972, -1e+12
        %v975 = vsub.f32 %v973, %v644
        %v976 = vsub.f32 %v974, %v645
        %s977 = scalar_lea.vmem %s375, 64 [#allocation2]
        %978 = vst.msk [vmem:[%s977] sm:$0xff] %vm710, %v975
        %979 = vst.msk [vmem:[%s977 + $0x8] sm:$0xff] %vm710, %v976
        %980 = vset.pattern.permute.xlu0 5
        %981 = vperm.xlu0 %980, %v549
        %v982 = vpop.permute.xlu0 %981
        %984 = vset.pattern.permute.xlu0 5
        %985 = vperm.xlu0 %984, %v552
        %v986 = vpop.permute.xlu0 %985
        %989 = vrot.lane.b32.xlu0 %v495, 96
        %v990 = vpop.permute.xlu0 %989
        %v992 = vsel %vm447, %v990, 0
        %994 = vmatprep.subr.bf16.mxu0 0
        %995 = vmatpush1.bf16.msra.mxu0 %v563
        %996 = vmatprep.subr.bf16.mxu0 0
        %997 = vmatpush1.bf16.msra.mxu0 %v564
        %998 = vmatprep.subr.bf16.mxu0 0
        %999 = vmatpush1.bf16.msra.mxu0 0
        %1000 = vmatprep.subr.bf16.mxu0 0
        %1001 = vmatpush1.bf16.msra.mxu0 0
        %1002 = vmatprep.subr.bf16.mxu0 0
        %1003 = vmatpush1.bf16.msra.mxu0 0
        %1004 = vmatprep.subr.bf16.mxu0 0
        %1005 = vmatpush1.bf16.msra.mxu0 0
        %1006 = vmatprep.subr.bf16.mxu0 0
        %1007 = vmatpush1.bf16.msra.mxu0 0
        %1008 = vmatprep.subr.bf16.mxu0 0
        %1009 = vmatpush1.bf16.msra.mxu0 0
        %1010 = vmatprep.subr.bf16.mxu0 0
        %1011 = vmatpush1.bf16.msra.mxu0 0
        %1012 = vmatprep.subr.bf16.mxu0 0
        %1013 = vmatpush1.bf16.msra.mxu0 0
        %1014 = vmatprep.subr.bf16.mxu0 0
        %1015 = vmatpush1.bf16.msra.mxu0 0
        %1016 = vmatprep.subr.bf16.mxu0 0
        %1017 = vmatpush1.bf16.msra.mxu0 0
        %1018 = vmatprep.subr.bf16.mxu0 0
        %1019 = vmatpush1.bf16.msra.mxu0 0
        %1020 = vmatprep.subr.bf16.mxu0 0
        %1021 = vmatpush1.bf16.msra.mxu0 0
        %1022 = vmatprep.subr.bf16.mxu0 0
        %1023 = vmatpush1.bf16.msra.mxu0 0
        %1024 = vmatprep.subr.bf16.mxu0 0
        %1025 = vmatpush1.bf16.msra.mxu0 0
        %1026 = vmatprep.mubr.bf16.mxu0 0
        %1027 = vmatmul.mubr.bf16.gmra.mrb[0].mxu0 %v992
        %v1028 = vpop.f32.mrb[0].mxu0
        %v1029 = vadd.f32 %v982, %v1028
        %v1030 = vpop.f32.mrb[0].mxu0
        %v1031 = vpop.f32.mrb[0].mxu0
        %v1032 = vadd.f32 %v986, %v1031
        %v1033 = vpop.f32.mrb[0].mxu0
        %1034 = vdwg.mxu0
        %v1035 = vlaneseq
        %v1036 = vshrl.u32 %v1035, 7
        %v1037 = vsub.s32 5, %v1036
        %v1038 = vrot.slane %v605, %v1037
        %v1039 = vadd.f32 %v1029, %v1038
        %v1040 = vadd.f32 %v1032, %v1038
        %v1041 = vsel %vm631, %v1039, -1e+12
        %v1042 = vsel %vm632, %v1040, -1e+12
        %v1043 = vsub.f32 %v1041, %v644
        %v1044 = vsub.f32 %v1042, %v645
        %s1045 = scalar_lea.vmem %s375, 80 [#allocation2]
        %1046 = vst.msk [vmem:[%s1045] sm:$0xff] %vm710, %v1043
        %1047 = vst.msk [vmem:[%s1045 + $0x8] sm:$0xff] %vm710, %v1044
        %1048 = vset.pattern.permute.xlu0 6
        %1049 = vperm.xlu0 %1048, %v549
        %v1050 = vpop.permute.xlu0 %1049
        %1052 = vset.pattern.permute.xlu0 6
        %1053 = vperm.xlu0 %1052, %v552
        %v1054 = vpop.permute.xlu0 %1053
        %1056 = vrot.lane.b32.xlu0 %v495, 64
        %v1057 = vpop.permute.xlu0 %1056
        %v1059 = vsel %vm447, %v1057, 0
        %1061 = vmatprep.subr.bf16.mxu0 0
        %1062 = vmatpush1.bf16.msra.mxu0 %v563
        %1063 = vmatprep.subr.bf16.mxu0 0
        %1064 = vmatpush1.bf16.msra.mxu0 %v564
        %1065 = vmatprep.subr.bf16.mxu0 0
        %1066 = vmatpush1.bf16.msra.mxu0 0
        %1067 = vmatprep.subr.bf16.mxu0 0
        %1068 = vmatpush1.bf16.msra.mxu0 0
        %1069 = vmatprep.subr.bf16.mxu0 0
        %1070 = vmatpush1.bf16.msra.mxu0 0
        %1071 = vmatprep.subr.bf16.mxu0 0
        %1072 = vmatpush1.bf16.msra.mxu0 0
        %1073 = vmatprep.subr.bf16.mxu0 0
        %1074 = vmatpush1.bf16.msra.mxu0 0
        %1075 = vmatprep.subr.bf16.mxu0 0
        %1076 = vmatpush1.bf16.msra.mxu0 0
        %1077 = vmatprep.subr.bf16.mxu0 0
        %1078 = vmatpush1.bf16.msra.mxu0 0
        %1079 = vmatprep.subr.bf16.mxu0 0
        %1080 = vmatpush1.bf16.msra.mxu0 0
        %1081 = vmatprep.subr.bf16.mxu0 0
        %1082 = vmatpush1.bf16.msra.mxu0 0
        %1083 = vmatprep.subr.bf16.mxu0 0
        %1084 = vmatpush1.bf16.msra.mxu0 0
        %1085 = vmatprep.subr.bf16.mxu0 0
        %1086 = vmatpush1.bf16.msra.mxu0 0
        %1087 = vmatprep.subr.bf16.mxu0 0
        %1088 = vmatpush1.bf16.msra.mxu0 0
        %1089 = vmatprep.subr.bf16.mxu0 0
        %1090 = vmatpush1.bf16.msra.mxu0 0
        %1091 = vmatprep.subr.bf16.mxu0 0
        %1092 = vmatpush1.bf16.msra.mxu0 0
        %1093 = vmatprep.mubr.bf16.mxu0 0
        %1094 = vmatmul.mubr.bf16.gmra.mrb[0].mxu0 %v1059
        %v1095 = vpop.f32.mrb[0].mxu0
        %v1096 = vadd.f32 %v1050, %v1095
        %v1097 = vpop.f32.mrb[0].mxu0
        %v1098 = vpop.f32.mrb[0].mxu0
        %v1099 = vadd.f32 %v1054, %v1098
        %v1100 = vpop.f32.mrb[0].mxu0
        %1101 = vdwg.mxu0
        %v1102 = vlaneseq
        %v1103 = vshrl.u32 %v1102, 7
        %v1104 = vsub.s32 6, %v1103
        %v1105 = vrot.slane %v605, %v1104
        %v1106 = vadd.f32 %v1096, %v1105
        %v1107 = vadd.f32 %v1099, %v1105
        %v1108 = vsel %vm631, %v1106, -1e+12
        %v1109 = vsel %vm632, %v1107, -1e+12
        %v1110 = vsub.f32 %v1108, %v644
        %v1111 = vsub.f32 %v1109, %v645
        %s1112 = scalar_lea.vmem %s375, 96 [#allocation2]
        %1113 = vst.msk [vmem:[%s1112] sm:$0xff] %vm710, %v1110
        %1114 = vst.msk [vmem:[%s1112 + $0x8] sm:$0xff] %vm710, %v1111
        %1115 = vset.pattern.permute.xlu0 7
        %1116 = vperm.xlu0 %1115, %v549
        %v1117 = vpop.permute.xlu0 %1116
        %1119 = vset.pattern.permute.xlu0 7
        %1120 = vperm.xlu0 %1119, %v552
        %v1121 = vpop.permute.xlu0 %1120
        %1123 = vrot.lane.b32.xlu0 %v495, 32
        %v1124 = vpop.permute.xlu0 %1123
        %v1126 = vsel %vm447, %v1124, 0
        %1128 = vmatprep.subr.bf16.mxu0 0
        %1129 = vmatpush1.bf16.msra.mxu0 %v563
        %1130 = vmatprep.subr.bf16.mxu0 0
        %1131 = vmatpush1.bf16.msra.mxu0 %v564
        %1132 = vmatprep.subr.bf16.mxu0 0
        %1133 = vmatpush1.bf16.msra.mxu0 0
        %1134 = vmatprep.subr.bf16.mxu0 0
        %1135 = vmatpush1.bf16.msra.mxu0 0
        %1136 = vmatprep.subr.bf16.mxu0 0
        %1137 = vmatpush1.bf16.msra.mxu0 0
        %1138 = vmatprep.subr.bf16.mxu0 0
        %1139 = vmatpush1.bf16.msra.mxu0 0
        %1140 = vmatprep.subr.bf16.mxu0 0
        %1141 = vmatpush1.bf16.msra.mxu0 0
        %1142 = vmatprep.subr.bf16.mxu0 0
        %1143 = vmatpush1.bf16.msra.mxu0 0
        %1144 = vmatprep.subr.bf16.mxu0 0
        %1145 = vmatpush1.bf16.msra.mxu0 0
        %1146 = vmatprep.subr.bf16.mxu0 0
        %1147 = vmatpush1.bf16.msra.mxu0 0
        %1148 = vmatprep.subr.bf16.mxu0 0
        %1149 = vmatpush1.bf16.msra.mxu0 0
        %1150 = vmatprep.subr.bf16.mxu0 0
        %1151 = vmatpush1.bf16.msra.mxu0 0
        %1152 = vmatprep.subr.bf16.mxu0 0
        %1153 = vmatpush1.bf16.msra.mxu0 0
        %1154 = vmatprep.subr.bf16.mxu0 0
        %1155 = vmatpush1.bf16.msra.mxu0 0
        %1156 = vmatprep.subr.bf16.mxu0 0
        %1157 = vmatpush1.bf16.msra.mxu0 0
        %1158 = vmatprep.subr.bf16.mxu0 0
        %1159 = vmatpush1.bf16.msra.mxu0 0
        %1160 = vmatprep.mubr.bf16.mxu0 0
        %1161 = vmatmul.mubr.bf16.gmra.mrb[0].mxu0 %v1126
        %v1162 = vpop.f32.mrb[0].mxu0
        %v1163 = vadd.f32 %v1117, %v1162
        %v1164 = vpop.f32.mrb[0].mxu0
        %v1165 = vpop.f32.mrb[0].mxu0
        %v1166 = vadd.f32 %v1121, %v1165
        %v1167 = vpop.f32.mrb[0].mxu0
        %1168 = vdwg.mxu0
        %v1169 = vlaneseq
        %v1170 = vshrl.u32 %v1169, 7
        %v1171 = vsub.s32 7, %v1170
        %v1172 = vrot.slane %v605, %v1171
        %v1173 = vadd.f32 %v1163, %v1172
        %v1174 = vadd.f32 %v1166, %v1172
        %v1175 = vsel %vm631, %v1173, -1e+12
        %v1176 = vsel %vm632, %v1174, -1e+12
        %v1177 = vsub.f32 %v1175, %v644
        %v1178 = vsub.f32 %v1176, %v645
        %s1179 = scalar_lea.vmem %s375, 112 [#allocation2]
        %1180 = vst.msk [vmem:[%s1179] sm:$0xff] %vm710, %v1177
        %1181 = vst.msk [vmem:[%s1179 + $0x8] sm:$0xff] %vm710, %v1178
        %s1182 = sand.u32 %s236, 1
        %s1183 = scalar_lea.sflag [#allocation3], %s1182
        %s1184 = sand.u32 %s236, 1
        %s1185 = smul.addr %s1184, 128
        %s1186 = scalar_lea.vmem [#allocation2], %s1185
        // Predicated region
        $region53: #{tpu_custom_call.1} parent=51 // pred_check
          %p1187 = pneg %p246
        $region54: #{tpu_custom_call.1} parent=51 // pred_check_branch
          %1189 = sbr.rel (%p1187) target = $region56
        $region55: #{tpu_custom_call.1} parent=51 // pred_region
          %s1190 = smul.u32 2, %s27
          %s1192 = ssub.s32 2048, 2048
          %1193 = vsyncadd %s1183, %s1192
          %s1194 = smul.addr %s26, 16
          %s1195 = sadd.s32 %s1190, %s1194
          %s1196 = smul.addr %s1195, 128
          %s1197 = scalar_lea.hbm %s8, %s1196
          %s1198 = sshll.u32 %s1186, 4
          %s1199 = int_to_ptr.vmem [resolvable:$true] %s1198
          %1204 = dma.vmem_to_hbm [thread:$0]  %s1199, 2048, %s1197, %s1183, 128, 128, 8
        $region56: #{tpu_custom_call.1} parent=51 // pred_fallthru
          _
      $region52: #{tpu_custom_call.1} parent=5 // pred_fallthru
        _
      %p1205 = scmp.le.s32.totalorder 2, %s17
      // Predicated region
      $region57: #{tpu_custom_call.1} parent=5 // pred_check
        %p1206 = pneg %p1205
      $region58: #{tpu_custom_call.1} parent=5 // pred_check_branch
        %1208 = sbr.rel (%p1206) target = $region60
      $region59: #{tpu_custom_call.1} parent=5 // pred_region
        %s1209 = ssub.s32 %s17, 2
        // Predicated region
        $region61: #{tpu_custom_call.1} parent=59 // pred_check
          %p1210 = pneg %p252
        $region62: #{tpu_custom_call.1} parent=59 // pred_check_branch
          %1212 = sbr.rel (%p1210) target = $region64
        $region63: #{tpu_custom_call.1} parent=59 // pred_region
          %s1213 = sand.u32 %s237, 1
          %s1214 = scalar_lea.sflag [#allocation3], %s1213
          %s1215 = sand.u32 %s237, 1
          %s1216 = smul.addr %s1215, 128
          %s1217 = scalar_lea.vmem [#allocation2], %s1216
          %1218 = dma.done %s1214, 2048
        $region64: #{tpu_custom_call.1} parent=59 // pred_fallthru
          _
      $region60: #{tpu_custom_call.1} parent=5 // pred_fallthru
        _
    $region6: #{tpu_custom_call.1} parent=1 // loop_footer
      %s21 = sadd.s32 1, %s17
    $region7: #{tpu_custom_call.1} parent=1 // loop_footer_branch
      %16 = sbr.rel target = $region3
    $region8: #{tpu_custom_call.1} parent=1 // loop_exit
      _
    %1219 = vsyncpa [#allocation3], 1
    %s1220 = scalar_lea.sflag [#allocation3], 1
    %1221 = vsyncpa %s1220, 1

// kernel: tpu_custom_call.1
$region0: #{tpu_custom_call.1}
  #allocation0 [shape = 'u32[]', space=smem, size = 0x4, offset = 0x4, fixed_abs, tag = 'smem constant byte address 0x4 - core index']
  #allocation1 [shape = 'u32[144,128]{1,0:T(1,128)}', space=vmem, size = 0x12000, scoped, tag = 'internal scratch']
  %s0 = inlined_call_operand.vmem [shape: bf16[2,16,32], index: 0, kind: input, shape index: {}]
  %s1 = inlined_call_operand.vmem [shape: bf16[2,32,16], index: 1, kind: input, shape index: {}]
  %s2 = inlined_call_operand.vmem [shape: bf16[32,256], index: 2, kind: input, shape index: {}]
  %s3 = inlined_call_operand.vmem [shape: bf16[32,8], index: 3, kind: input, shape index: {}]
  %s4 = inlined_call_operand.vmem [shape: bf16[8,32], index: 4, kind: input, shape index: {}]
  %s5 = inlined_call_operand.vmem [shape: f32[1,8], index: 5, kind: input, shape index: {}]
  %s6 = inlined_call_operand.vmem [shape: f32[2,1,16], index: 6, kind: input, shape index: {}]
  %s7 = inlined_call_operand.vmem [shape: f32[2,16,1], index: 7, kind: input, shape index: {}]
  %s8 = inlined_call_operand.hbm [shape: f32[2,8,16,16], index: 8, kind: output, shape index: {}]
  %s9 = sld [smem:[#allocation0]]
  $region65: #{tpu_custom_call.1} parent=0
    _
  %s11 = ssub.s32 1, %s9
  %s12 = scalar_select 0, %s11, %s9
  $region1: #{tpu_custom_call.1} parent=0
    #allocation2 [shape = 'u8[131072]{0}', space=vmem, size = 0x20000, scoped, tag = 'output window, operand 0']
    #allocation3 [shape = 's32[2]{0}', space=sflag, size = 0x8, scoped, tag = 'scoped memory for tpu_custom_call.1']
    %13 = vsyncpa [#allocation3], 0
    %s14 = scalar_lea.sflag [#allocation3], 1
    %15 = vsyncpa %s14, 0
    loop: start=0, step=1, limit=4
    $region2: #{tpu_custom_call.1} parent=1 // loop_pre_header
      _
    $region3: #{tpu_custom_call.1} parent=1 // loop_header
      %s17 = sphi 0, %s21
      %p18 = scmp.ge.s32.totalorder %s17, 4
      %s24 = sphi 0, %s36
      %s25 = sphi 0, %s32
      %s26 = sphi 0, %s24
      %s27 = sphi 0, %s25
      %s28 = sphi 0, %s26
      %s29 = sphi 0, %s27
      %s41 = sphi 0, %s43
      %s44 = sphi 0, %s41
      %s45 = sphi 0, %s44
      %s61 = sphi 0, %s45
      %s67 = sphi 0, %s69
      %s70 = sphi 0, %s67
      %s71 = sphi 0, %s70
      %s87 = sphi 0, %s71
      %s91 = sphi 0, %s91
      %s93 = sphi 0, %s91
      %s94 = sphi 0, %s93
      %s108 = sphi 0, %s94
      %s112 = sphi 0, %s112
      %s114 = sphi 0, %s112
      %s115 = sphi 0, %s114
      %s129 = sphi 0, %s115
      %s133 = sphi 0, %s133
      %s135 = sphi 0, %s133
      %s136 = sphi 0, %s135
      %s150 = sphi 0, %s136
      %s154 = sphi 0, %s154
      %s156 = sphi 0, %s154
      %s157 = sphi 0, %s156
      %s171 = sphi 0, %s157
      %s177 = sphi 0, %s179
      %s180 = sphi 0, %s177
      %s181 = sphi 0, %s180
      %s197 = sphi 0, %s181
      %s205 = sphi 0, %s207
      %s208 = sphi 0, %s205
      %s209 = sphi 0, %s208
      %s225 = sphi 0, %s209
      %s233 = sphi 0, %s235
      %s236 = sphi 0, %s233
      %s237 = sphi 0, %s236
      %s253 = sphi 0, %s237
    $region4: #{tpu_custom_call.1} parent=1 // loop_header_branch
      %20 = sbr.rel (%p18) target = $region8
    $region5: #{tpu_custom_call.1} parent=1 // loop_body
      %s22 = ssub.s32 %s17, 1
      %s23 = ssub.s32 %s17, 2
      %s30 = sadd.s32 1, %s25
      %p31 = scmp.ge.s32.totalorder %s30, 1
      %s32 = scalar_select %p31, 0, %s30
      %s33 = sadd.s32 1, %s24
      %s34 = scalar_select %p31, %s33, %s24
      %p35 = scmp.ge.s32.totalorder %s34, 2
      %s36 = scalar_select %p35, 0, %s34
      %s37 = ssub.s32 %s24, %s36
      %s38 = ssub.s32 %s25, %s32
      %s39 = sor.u32 %s37, %s38
      %p40 = scmp.eq.s32.totalorder %s39, 0
      %s42 = sadd.s32 %s41, 1
      %s43 = scalar_select %p40, %s41, %s42
      %p46 = pneg %p40
      %p47 = scmp.eq.s32.totalorder %s17, 1
      %p48 = por %p46, %p47
      %p49 = scmp.ne.s32.totalorder %s41, %s44
      %p50 = scmp.eq.s32.totalorder %s17, 0
      %p51 = por %p49, %p50
      %p52 = scmp.ne.s32.totalorder %s41, %s44
      %p53 = scmp.eq.s32.totalorder %s22, 1
      %p54 = por %p52, %p53
      %p55 = scmp.ne.s32.totalorder %s44, %s45
      %p56 = scmp.eq.s32.totalorder %s22, 0
      %p57 = por %p55, %p56
      %p58 = scmp.ne.s32.totalorder %s44, %s45
      %p59 = scmp.eq.s32.totalorder %s23, 1
      %p60 = por %p58, %p59
      %p62 = scmp.ne.s32.totalorder %s45, %s61
      %p63 = scmp.eq.s32.totalorder %s23, 0
      %p64 = por %p62, %p63
      %s65 = ssub.s32 %s24, %s36
      %p66 = scmp.eq.s32.totalorder %s65, 0
      %s68 = sadd.s32 %s67, 1
      %s69 = scalar_select %p66, %s67, %s68
      %p72 = pneg %p66
      %p73 = scmp.eq.s32.totalorder %s17, 1
      %p74 = por %p72, %p73
      %p75 = scmp.ne.s32.totalorder %s67, %s70
      %p76 = scmp.eq.s32.totalorder %s17, 0
      %p77 = por %p75, %p76
      %p78 = scmp.ne.s32.totalorder %s67, %s70
      %p79 = scmp.eq.s32.totalorder %s22, 1
      %p80 = por %p78, %p79
      %p81 = scmp.ne.s32.totalorder %s70, %s71
      %p82 = scmp.eq.s32.totalorder %s22, 0
      %p83 = por %p81, %p82
      %p84 = scmp.ne.s32.totalorder %s70, %s71
      %p85 = scmp.eq.s32.totalorder %s23, 1
      %p86 = por %p84, %p85
      %p88 = scmp.ne.s32.totalorder %s71, %s87
      %p89 = scmp.eq.s32.totalorder %s23, 0
      %p90 = por %p88, %p89
      %s92 = sadd.s32 %s91, 1
      %p95 = scmp.eq.s32.totalorder %s17, 1
      %p96 = scmp.ne.s32.totalorder %s91, %s93
      %p97 = scmp.eq.s32.totalorder %s17, 0
      %p98 = por %p96, %p97
      %p99 = scmp.ne.s32.totalorder %s91, %s93
      %p100 = scmp.eq.s32.totalorder %s22, 1
      %p101 = por %p99, %p100
      %p102 = scmp.ne.s32.totalorder %s93, %s94
      %p103 = scmp.eq.s32.totalorder %s22, 0
      %p104 = por %p102, %p103
      %p105 = scmp.ne.s32.totalorder %s93, %s94
      %p106 = scmp.eq.s32.totalorder %s23, 1
      %p107 = por %p105, %p106
      %p109 = scmp.ne.s32.totalorder %s94, %s108
      %p110 = scmp.eq.s32.totalorder %s23, 0
      %p111 = por %p109, %p110
      %s113 = sadd.s32 %s112, 1
      %p116 = scmp.eq.s32.totalorder %s17, 1
      %p117 = scmp.ne.s32.totalorder %s112, %s114
      %p118 = scmp.eq.s32.totalorder %s17, 0
      %p119 = por %p117, %p118
      %p120 = scmp.ne.s32.totalorder %s112, %s114
      %p121 = scmp.eq.s32.totalorder %s22, 1
      %p122 = por %p120, %p121
      %p123 = scmp.ne.s32.totalorder %s114, %s115
      %p124 = scmp.eq.s32.totalorder %s22, 0
      %p125 = por %p123, %p124
      %p126 = scmp.ne.s32.totalorder %s114, %s115
      %p127 = scmp.eq.s32.totalorder %s23, 1
      %p128 = por %p126, %p127
      %p130 = scmp.ne.s32.totalorder %s115, %s129
      %p131 = scmp.eq.s32.totalorder %s23, 0
      %p132 = por %p130, %p131
      %s134 = sadd.s32 %s133, 1
      %p137 = scmp.eq.s32.totalorder %s17, 1
      %p138 = scmp.ne.s32.totalorder %s133, %s135
      %p139 = scmp.eq.s32.totalorder %s17, 0
      %p140 = por %p138, %p139
      %p141 = scmp.ne.s32.totalorder %s133, %s135
      %p142 = scmp.eq.s32.totalorder %s22, 1
      %p143 = por %p141, %p142
      %p144 = scmp.ne.s32.totalorder %s135, %s136
      %p145 = scmp.eq.s32.totalorder %s22, 0
      %p146 = por %p144, %p145
      %p147 = scmp.ne.s32.totalorder %s135, %s136
      %p148 = scmp.eq.s32.totalorder %s23, 1
      %p149 = por %p147, %p148
      %p151 = scmp.ne.s32.totalorder %s136, %s150
      %p152 = scmp.eq.s32.totalorder %s23, 0
      %p153 = por %p151, %p152
      %s155 = sadd.s32 %s154, 1
      %p158 = scmp.eq.s32.totalorder %s17, 1
      %p159 = scmp.ne.s32.totalorder %s154, %s156
      %p160 = scmp.eq.s32.totalorder %s17, 0
      %p161 = por %p159, %p160
      %p162 = scmp.ne.s32.totalorder %s154, %s156
      %p163 = scmp.eq.s32.totalorder %s22, 1
      %p164 = por %p162, %p163
      %p165 = scmp.ne.s32.totalorder %s156, %s157
      %p166 = scmp.eq.s32.totalorder %s22, 0
      %p167 = por %p165, %p166
      %p168 = scmp.ne.s32.totalorder %s156, %s157
      %p169 = scmp.eq.s32.totalorder %s23, 1
      %p170 = por %p168, %p169
      %p172 = scmp.ne.s32.totalorder %s157, %s171
      %p173 = scmp.eq.s32.totalorder %s23, 0
      %p174 = por %p172, %p173
      %s175 = ssub.s32 %s24, %s36
      %p176 = scmp.eq.s32.totalorder %s175, 0
      %s178 = sadd.s32 %s177, 1
      %s179 = scalar_select %p176, %s177, %s178
      %p182 = pneg %p176
      %p183 = scmp.eq.s32.totalorder %s17, 1
      %p184 = por %p182, %p183
      %p185 = scmp.ne.s32.totalorder %s177, %s180
      %p186 = scmp.eq.s32.totalorder %s17, 0
      %p187 = por %p185, %p186
      %p188 = scmp.ne.s32.totalorder %s177, %s180
      %p189 = scmp.eq.s32.totalorder %s22, 1
      %p190 = por %p188, %p189
      %p191 = scmp.ne.s32.totalorder %s180, %s181
      %p192 = scmp.eq.s32.totalorder %s22, 0
      %p193 = por %p191, %p192
      %p194 = scmp.ne.s32.totalorder %s180, %s181
      %p195 = scmp.eq.s32.totalorder %s23, 1
      %p196 = por %p194, %p195
      %p198 = scmp.ne.s32.totalorder %s181, %s197
      %p199 = scmp.eq.s32.totalorder %s23, 0
      %p200 = por %p198, %p199
      %s201 = ssub.s32 %s24, %s36
      %s202 = ssub.s32 %s25, %s32
      %s203 = sor.u32 %s201, %s202
      %p204 = scmp.eq.s32.totalorder %s203, 0
      %s206 = sadd.s32 %s205, 1
      %s207 = scalar_select %p204, %s205, %s206
      %p210 = pneg %p204
      %p211 = scmp.eq.s32.totalorder %s17, 1
      %p212 = por %p210, %p211
      %p213 = scmp.ne.s32.totalorder %s205, %s208
      %p214 = scmp.eq.s32.totalorder %s17, 0
      %p215 = por %p213, %p214
      %p216 = scmp.ne.s32.totalorder %s205, %s208
      %p217 = scmp.eq.s32.totalorder %s22, 1
      %p218 = por %p216, %p217
      %p219 = scmp.ne.s32.totalorder %s208, %s209
      %p220 = scmp.eq.s32.totalorder %s22, 0
      %p221 = por %p219, %p220
      %p222 = scmp.ne.s32.totalorder %s208, %s209
      %p223 = scmp.eq.s32.totalorder %s23, 1
      %p224 = por %p222, %p223
      %p226 = scmp.ne.s32.totalorder %s209, %s225
      %p227 = scmp.eq.s32.totalorder %s23, 0
      %p228 = por %p226, %p227
      %s229 = ssub.s32 %s24, %s36
      %s230 = ssub.s32 %s25, %s32
      %s231 = sor.u32 %s229, %s230
      %p232 = scmp.eq.s32.totalorder %s231, 0
      %s234 = sadd.s32 %s233, 1
      %s235 = scalar_select %p232, %s233, %s234
      %p238 = pneg %p232
      %p239 = scmp.eq.s32.totalorder %s17, 1
      %p240 = por %p238, %p239
      %p241 = scmp.ne.s32.totalorder %s233, %s236
      %p242 = scmp.eq.s32.totalorder %s17, 0
      %p243 = por %p241, %p242
      %p244 = scmp.ne.s32.totalorder %s233, %s236
      %p245 = scmp.eq.s32.totalorder %s22, 1
      %p246 = por %p244, %p245
      %p247 = scmp.ne.s32.totalorder %s236, %s237
      %p248 = scmp.eq.s32.totalorder %s22, 0
      %p249 = por %p247, %p248
      %p250 = scmp.ne.s32.totalorder %s236, %s237
      %p251 = scmp.eq.s32.totalorder %s23, 1
      %p252 = por %p250, %p251
      %p254 = scmp.ne.s32.totalorder %s237, %s253
      %p255 = scmp.eq.s32.totalorder %s23, 0
      %p256 = por %p254, %p255
      %p257 = scmp.le.s32.totalorder 1, %s17
      %p258 = scmp.lt.s32.totalorder %s17, 3
      %p259 = pnand %p257, %p258
      %p260 = pneg %p259
      // Predicated region
      $region9: #{tpu_custom_call.1} parent=5 // pred_check
        _
      $region10: #{tpu_custom_call.1} parent=5 // pred_check_branch
        %262 = sbr.rel (%p259) target = $region12
      $region11: #{tpu_custom_call.1} parent=5 // pred_region
        %s263 = ssub.s32 %s17, 1
        // Predicated region
        $region13: #{tpu_custom_call.1} parent=11 // pred_check
          %p264 = pneg %p104
        $region14: #{tpu_custom_call.1} parent=11 // pred_check_branch
          %266 = sbr.rel (%p264) target = $region16
        $region15: #{tpu_custom_call.1} parent=11 // pred_region
          _
        $region16: #{tpu_custom_call.1} parent=11 // pred_fallthru
          _
        // Predicated region
        $region17: #{tpu_custom_call.1} parent=11 // pred_check
          %p267 = pneg %p125
        $region18: #{tpu_custom_call.1} parent=11 // pred_check_branch
          %269 = sbr.rel (%p267) target = $region20
        $region19: #{tpu_custom_call.1} parent=11 // pred_region
          _
        $region20: #{tpu_custom_call.1} parent=11 // pred_fallthru
          _
        // Predicated region
        $region21: #{tpu_custom_call.1} parent=11 // pred_check
          %p270 = pneg %p146
        $region22: #{tpu_custom_call.1} parent=11 // pred_check_branch
          %272 = sbr.rel (%p270) target = $region24
        $region23: #{tpu_custom_call.1} parent=11 // pred_region
          _
        $region24: #{tpu_custom_call.1} parent=11 // pred_fallthru
          _
        // Predicated region
        $region25: #{tpu_custom_call.1} parent=11 // pred_check
          %p273 = pneg %p167
        $region26: #{tpu_custom_call.1} parent=11 // pred_check_branch
          %275 = sbr.rel (%p273) target = $region28
        $region27: #{tpu_custom_call.1} parent=11 // pred_region
          _
        $region28: #{tpu_custom_call.1} parent=11 // pred_fallthru
          _
      $region12: #{tpu_custom_call.1} parent=5 // pred_fallthru
        _
      %p276 = scmp.lt.s32.totalorder %s17, 2
      // Predicated region
      $region29: #{tpu_custom_call.1} parent=5 // pred_check
        %p277 = pneg %p276
      $region30: #{tpu_custom_call.1} parent=5 // pred_check_branch
        %279 = sbr.rel (%p277) target = $region32
      $region31: #{tpu_custom_call.1} parent=5 // pred_region
        // Predicated region
        $region33: #{tpu_custom_call.1} parent=31 // pred_check
          %p280 = pneg %p51
        $region34: #{tpu_custom_call.1} parent=31 // pred_check_branch
          %282 = sbr.rel (%p280) target = $region36
        $region35: #{tpu_custom_call.1} parent=31 // pred_region
          %s283 = smul.u32 2, %s25
          %p284 = scmp.lt.s32.totalorder %s24, 1
          %s285 = scalar_select %p284, %s24, 1
          %p286 = scmp.lt.s32.totalorder %s283, 1
          %s287 = scalar_select %p286, %s283, 1
          %s288 = smul.addr %s285, 2
          %s289 = sadd.s32 %s287, %s288
          %s290 = smul.addr %s289, 4
          %s291 = scalar_lea.vmem %s0, %s290
          %s292 = smul.u32 2, %s25
        $region36: #{tpu_custom_call.1} parent=31 // pred_fallthru
          _
        // Predicated region
        $region37: #{tpu_custom_call.1} parent=31 // pred_check
          %p293 = pneg %p77
        $region38: #{tpu_custom_call.1} parent=31 // pred_check_branch
          %295 = sbr.rel (%p293) target = $region40
        $region39: #{tpu_custom_call.1} parent=31 // pred_region
          %p296 = scmp.lt.s32.totalorder %s24, 1
          %s297 = scalar_select %p296, %s24, 1
          %s298 = smul.addr %s297, 4
          %s299 = smul.addr %s298, 4
          %s300 = scalar_lea.vmem %s1, %s299
        $region40: #{tpu_custom_call.1} parent=31 // pred_fallthru
          _
        // Predicated region
        $region41: #{tpu_custom_call.1} parent=31 // pred_check
          %p301 = pneg %p187
        $region42: #{tpu_custom_call.1} parent=31 // pred_check_branch
          %303 = sbr.rel (%p301) target = $region44
        $region43: #{tpu_custom_call.1} parent=31 // pred_region
          %p304 = scmp.lt.s32.totalorder %s24, 1
          %s305 = scalar_select %p304, %s24, 1
          %s306 = scalar_lea.vmem %s6, %s305
        $region44: #{tpu_custom_call.1} parent=31 // pred_fallthru
          _
        // Predicated region
        $region45: #{tpu_custom_call.1} parent=31 // pred_check
          %p307 = pneg %p215
        $region46: #{tpu_custom_call.1} parent=31 // pred_check_branch
          %309 = sbr.rel (%p307) target = $region48
        $region47: #{tpu_custom_call.1} parent=31 // pred_region
          %s310 = smul.u32 2, %s25
          %p311 = scmp.lt.s32.totalorder %s24, 1
          %s312 = scalar_select %p311, %s24, 1
          %p313 = scmp.lt.s32.totalorder %s310, 1
          %s314 = scalar_select %p313, %s310, 1
          %s315 = smul.addr %s312, 2
          %s316 = sadd.s32 %s314, %s315
          %s317 = smul.addr %s316, 8
          %s318 = scalar_lea.vmem %s7, %s317
          %s319 = smul.u32 2, %s25
        $region48: #{tpu_custom_call.1} parent=31 // pred_fallthru
          _
      $region32: #{tpu_custom_call.1} parent=5 // pred_fallthru
        _
      %p320 = scmp.le.s32.totalorder 1, %s17
      %p321 = scmp.lt.s32.totalorder %s17, 3
      %p322 = pnand %p320, %p321
      %p323 = pneg %p322
      // Predicated region
      $region49: #{tpu_custom_call.1} parent=5 // pred_check
        _
      $region50: #{tpu_custom_call.1} parent=5 // pred_check_branch
        %325 = sbr.rel (%p322) target = $region52
      $region51: #{tpu_custom_call.1} parent=5 // pred_region
        %s326 = ssub.s32 %s17, 1
        %s327 = smul.u32 2, %s27
        %p328 = scmp.lt.s32.totalorder %s26, 1
        %s329 = scalar_select %p328, %s26, 1
        %p330 = scmp.lt.s32.totalorder %s327, 1
        %s331 = scalar_select %p330, %s327, 1
        %s332 = smul.addr %s329, 2
        %s333 = sadd.s32 %s331, %s332
        %s334 = smul.addr %s333, 4
        %s335 = scalar_lea.vmem %s0, %s334
        %p336 = pneg %p57
        %p337 = pneg %p54
        %p338 = scmp.lt.s32.totalorder %s26, 1
        %s339 = scalar_select %p338, %s26, 1
        %s340 = smul.addr %s339, 4
        %s341 = smul.addr %s340, 4
        %s342 = scalar_lea.vmem %s1, %s341
        %p343 = pneg %p83
        %p344 = pneg %p80
        %p345 = pneg %p104
        %p346 = pneg %p101
        %p347 = pneg %p125
        %p348 = pneg %p122
        %p349 = pneg %p146
        %p350 = pneg %p143
        %p351 = pneg %p167
        %p352 = pneg %p164
        %p353 = scmp.lt.s32.totalorder %s26, 1
        %s354 = scalar_select %p353, %s26, 1
        %s355 = scalar_lea.vmem %s6, %s354
        %p356 = pneg %p193
        %p357 = pneg %p190
        %s358 = smul.u32 2, %s27
        %p359 = scmp.lt.s32.totalorder %s26, 1
        %s360 = scalar_select %p359, %s26, 1
        %p361 = scmp.lt.s32.totalorder %s358, 1
        %s362 = scalar_select %p361, %s358, 1
        %s363 = smul.addr %s360, 2
        %s364 = sadd.s32 %s362, %s363
        %s365 = smul.addr %s364, 8
        %s366 = scalar_lea.vmem %s7, %s365
        %p367 = pneg %p221
        %p368 = pneg %p218
        %p369 = pneg %p249
        %p370 = pneg %p246
        %s371 = sand.u32 %s236, 1
        %s372 = scalar_lea.sflag [#allocation3], %s371
        %s373 = sand.u32 %s236, 1
        %s374 = smul.addr %s373, 128
        %s375 = scalar_lea.vmem [#allocation2], %s374
        %s376 = smul.u32 2, %s27
        %p377 = scmp.lt.s32.totalorder %s26, 1
        %s378 = scalar_select %p377, %s26, 1
        %p379 = scmp.lt.s32.totalorder %s376, 1
        %s380 = scalar_select %p379, %s376, 1
        %s381 = smul.addr %s378, 2
        %s382 = sadd.s32 %s380, %s381
        %s383 = smul.addr %s382, 4
        %s384 = scalar_lea.vmem %s0, %s383
        %s385 = smul.u32 2, %s27
        %p386 = scmp.lt.s32.totalorder %s26, 1
        %s387 = scalar_select %p386, %s26, 1
        %s388 = smul.addr %s387, 4
        %s389 = smul.addr %s388, 4
        %s390 = scalar_lea.vmem %s1, %s389
        %p391 = scmp.lt.s32.totalorder %s26, 1
        %s392 = scalar_select %p391, %s26, 1
        %s393 = scalar_lea.vmem %s6, %s392
        %s394 = smul.u32 2, %s27
        %p395 = scmp.lt.s32.totalorder %s26, 1
        %s396 = scalar_select %p395, %s26, 1
        %p397 = scmp.lt.s32.totalorder %s394, 1
        %s398 = scalar_select %p397, %s394, 1
        %s399 = smul.addr %s396, 2
        %s400 = sadd.s32 %s398, %s399
        %s401 = smul.addr %s400, 8
        %s402 = scalar_lea.vmem %s7, %s401
        %s403 = smul.u32 2, %s27
        %s404 = smul.u32 2, %s27
        %v406 = vld [vmem:[%s384] sm:$0xf]
        %v407 = vld [vmem:[%s384 + $0x4] sm:$0xf]
        %v408 = vld [vmem:[%s390] sm:$0xf]
        %v409 = vld [vmem:[%s390 + $0x4] sm:$0xf]
        %v410 = vld [vmem:[%s390 + $0x8] sm:$0xf]
        %v411 = vld [vmem:[%s390 + $0xc] sm:$0xf]
        %v412 = vld [vmem:[%s2] sm:$0xff]
        %v413 = vld [vmem:[%s2 + $0x8] sm:$0xff]
        %v414 = vld [vmem:[%s2 + $0x10] sm:$0xff]
        %v415 = vld [vmem:[%s2 + $0x18] sm:$0xff]
        %v416 = vld [vmem:[%s3] sm:$0xf]
        %v417 = vld [vmem:[%s3 + $0x4] sm:$0xf]
        %v418 = vld [vmem:[%s3 + $0x8] sm:$0xf]
        %v419 = vld [vmem:[%s3 + $0xc] sm:$0xf]
        %v420 = vld [vmem:[%s4] sm:$0xf]
        %v421 = vld [vmem:[%s5] sm:$0x1]
        %v424 = vunpack.c.l.b16 %v406
        %v425 = vunpack.c.l.b16 %v407
        %v426 = vpack.c.b16 %v425, %v424
        %v431 = vunpack.c.l.b16 %v412
        %v432 = vunpack.c.h.b16 %v412
        %v433 = vunpack.c.l.b16 %v413
        %v434 = vunpack.c.h.b16 %v413
        %v435 = vunpack.c.l.b16 %v414
        %v436 = vunpack.c.h.b16 %v414
        %v437 = vunpack.c.l.b16 %v415
        %v438 = vunpack.c.h.b16 %v415
        %v439 = vpack.c.b16 %v433, %v431
        %v440 = vpack.c.b16 %v434, %v432
        %v441 = vpack.c.b16 %v437, %v435
        %v442 = vpack.c.b16 %v438, %v436
        %vm447 = vcmask 261120
        %v449 = vsel %vm447, %v426, 0
        %451 = vmatprep.subr.bf16.mxu0 %v440
        %452 = vmatpush1.bf16.msra.mxu0 %v439
        %453 = vmatprep.subr.bf16.mxu0 %v442
        %454 = vmatpush1.bf16.msra.mxu0 %v441
        %455 = vmatprep.subr.bf16.mxu0 0
        %456 = vmatpush1.bf16.msra.mxu0 0
        %457 = vmatprep.subr.bf16.mxu0 0
        %458 = vmatpush1.bf16.msra.mxu0 0
        %459 = vmatprep.subr.bf16.mxu0 0
        %460 = vmatpush1.bf16.msra.mxu0 0
        %461 = vmatprep.subr.bf16.mxu0 0
        %462 = vmatpush1.bf16.msra.mxu0 0
        %463 = vmatprep.subr.bf16.mxu0 0
        %464 = vmatpush1.bf16.msra.mxu0 0
        %465 = vmatprep.subr.bf16.mxu0 0
        %466 = vmatpush1.bf16.msra.mxu0 0
        %467 = vmatprep.subr.bf16.mxu0 0
        %468 = vmatpush1.bf16.msra.mxu0 0
        %469 = vmatprep.subr.bf16.mxu0 0
        %470 = vmatpush1.bf16.msra.mxu0 0
        %471 = vmatprep.subr.bf16.mxu0 0
        %472 = vmatpush1.bf16.msra.mxu0 0
        %473 = vmatprep.subr.bf16.mxu0 0
        %474 = vmatpush1.bf16.msra.mxu0 0
        %475 = vmatprep.subr.bf16.mxu0 0
        %476 = vmatpush1.bf16.msra.mxu0 0
        %477 = vmatprep.subr.bf16.mxu0 0
        %478 = vmatpush1.bf16.msra.mxu0 0
        %479 = vmatprep.subr.bf16.mxu0 0
        %480 = vmatpush1.bf16.msra.mxu0 0
        %481 = vmatprep.subr.bf16.mxu0 0
        %482 = vmatpush1.bf16.msra.mxu0 0
        %483 = vmatprep.mubr.bf16.mxu0 0
        %484 = vmatmul.mubr.bf16.gmra.mrb[0].mxu0 %v449
        %v485 = vpop.f32.mrb[0].mxu0
        %v486 = vadd.f32 0.0, %v485
        %v487 = vpop.f32.mrb[0].mxu0
        %v488 = vadd.f32 0.0, %v487
        %v489 = vpop.f32.mrb[0].mxu0
        %v490 = vadd.f32 0.0, %v489
        %v491 = vpop.f32.mrb[0].mxu0
        %v492 = vadd.f32 0.0, %v491
        %493 = vdwg.mxu0
        %v494 = vpack.c.bf16 %v490, %v486
        %v495 = vpack.c.bf16 %v492, %v488
        %v497 = vlaneseq
        %v498 = vshrl.u32 %v497, 7
        %v499 = vsub.s32 0, %v498
        %v500 = vrot.slane %v421, %v499
        %v506 = vunpack.c.l.b16 %v416
        %v507 = vunpack.c.l.b16 %v417
        %v508 = vunpack.c.l.b16 %v418
        %v509 = vunpack.c.l.b16 %v419
        %v510 = vpack.c.b16 %v507, %v506
        %v511 = vpack.c.b16 %v509, %v508
        %514 = vmatprep.subr.bf16.mxu0 0
        %515 = vmatpush1.bf16.msra.mxu0 %v510
        %516 = vmatprep.subr.bf16.mxu0 0
        %517 = vmatpush1.bf16.msra.mxu0 %v511
        %518 = vmatprep.subr.bf16.mxu0 0
        %519 = vmatpush1.bf16.msra.mxu0 0
        %520 = vmatprep.subr.bf16.mxu0 0
        %521 = vmatpush1.bf16.msra.mxu0 0
        %522 = vmatprep.subr.bf16.mxu0 0
        %523 = vmatpush1.bf16.msra.mxu0 0
        %524 = vmatprep.subr.bf16.mxu0 0
        %525 = vmatpush1.bf16.msra.mxu0 0
        %526 = vmatprep.subr.bf16.mxu0 0
        %527 = vmatpush1.bf16.msra.mxu0 0
        %528 = vmatprep.subr.bf16.mxu0 0
        %529 = vmatpush1.bf16.msra.mxu0 0
        %530 = vmatprep.subr.bf16.mxu0 0
        %531 = vmatpush1.bf16.msra.mxu0 0
        %532 = vmatprep.subr.bf16.mxu0 0
        %533 = vmatpush1.bf16.msra.mxu0 0
        %534 = vmatprep.subr.bf16.mxu0 0
        %535 = vmatpush1.bf16.msra.mxu0 0
        %536 = vmatprep.subr.bf16.mxu0 0
        %537 = vmatpush1.bf16.msra.mxu0 0
        %538 = vmatprep.subr.bf16.mxu0 0
        %539 = vmatpush1.bf16.msra.mxu0 0
        %540 = vmatprep.subr.bf16.mxu0 0
        %541 = vmatpush1.bf16.msra.mxu0 0
        %542 = vmatprep.subr.bf16.mxu0 0
        %543 = vmatpush1.bf16.msra.mxu0 0
        %544 = vmatprep.subr.bf16.mxu0 0
        %545 = vmatpush1.bf16.msra.mxu0 0
        %546 = vmatprep.mubr.bf16.mxu0 0
        %547 = vmatmul.mubr.bf16.gmra.mrb[0].mxu0 %v449
        %v548 = vpop.f32.mrb[0].mxu0
        %v549 = vadd.f32 %v500, %v548
        %v550 = vpop.f32.mrb[0].mxu0
        %v551 = vpop.f32.mrb[0].mxu0
        %v552 = vadd.f32 %v500, %v551
        %v553 = vpop.f32.mrb[0].mxu0
        %554 = vdwg.mxu0
        %v559 = vunpack.c.l.b16 %v408
        %v560 = vunpack.c.l.b16 %v409
        %v561 = vunpack.c.l.b16 %v410
        %v562 = vunpack.c.l.b16 %v411
        %v563 = vpack.c.b16 %v560, %v559
        %v564 = vpack.c.b16 %v562, %v561
        %v568 = vsel %vm447, %v420, 0
        %570 = vmatprep.subr.bf16.mxu0 0
        %571 = vmatpush1.bf16.msra.mxu0 %v563
        %572 = vmatprep.subr.bf16.mxu0 0
        %573 = vmatpush1.bf16.msra.mxu0 %v564
        %574 = vmatprep.subr.bf16.mxu0 0
        %575 = vmatpush1.bf16.msra.mxu0 0
        %576 = vmatprep.subr.bf16.mxu0 0
        %577 = vmatpush1.bf16.msra.mxu0 0
        %578 = vmatprep.subr.bf16.mxu0 0
        %579 = vmatpush1.bf16.msra.mxu0 0
        %580 = vmatprep.subr.bf16.mxu0 0
        %581 = vmatpush1.bf16.msra.mxu0 0
        %582 = vmatprep.subr.bf16.mxu0 0
        %583 = vmatpush1.bf16.msra.mxu0 0
        %584 = vmatprep.subr.bf16.mxu0 0
        %585 = vmatpush1.bf16.msra.mxu0 0
        %586 = vmatprep.subr.bf16.mxu0 0
        %587 = vmatpush1.bf16.msra.mxu0 0
        %588 = vmatprep.subr.bf16.mxu0 0
        %589 = vmatpush1.bf16.msra.mxu0 0
        %590 = vmatprep.subr.bf16.mxu0 0
        %591 = vmatpush1.bf16.msra.mxu0 0
        %592 = vmatprep.subr.bf16.mxu0 0
        %593 = vmatpush1.bf16.msra.mxu0 0
        %594 = vmatprep.subr.bf16.mxu0 0
        %595 = vmatpush1.bf16.msra.mxu0 0
        %596 = vmatprep.subr.bf16.mxu0 0
        %597 = vmatpush1.bf16.msra.mxu0 0
        %598 = vmatprep.subr.bf16.mxu0 0
        %599 = vmatpush1.bf16.msra.mxu0 0
        %600 = vmatprep.subr.bf16.mxu0 0
        %601 = vmatpush1.bf16.msra.mxu0 0
        %602 = vmatprep.mubr.bf16.mxu0 0
        %603 = vmatmul.mubr.bf16.gmra.mrb[0].mxu0 %v568
        %v604 = vpop.f32.mrb[0].mxu0
        %v605 = vadd.f32 0.0, %v604
        %v606 = vpop.f32.mrb[0].mxu0
        %v607 = vpop.f32.mrb[0].mxu0
        %v608 = vpop.f32.mrb[0].mxu0
        %609 = vdwg.mxu0
        %v610 = vld [vmem:[%s402] sm:$0xff]
        %v611 = vld [vmem:[%s402 + $0x8] sm:$0xff]
        %v612 = vld [vmem:[%s393] sm:$0x1]
        %614 = vset.pattern.permute.xlu0 0
        %615 = vperm.xlu0 %614, %v610
        %v616 = vpop.permute.xlu0 %615
        %619 = vset.pattern.permute.xlu0 0
        %620 = vperm.xlu0 %619, %v611
        %v621 = vpop.permute.xlu0 %620
        %v624 = vlaneseq
        %v625 = vshrl.u32 %v624, 7
        %v626 = vsub.s32 0, %v625
        %v627 = vrot.slane %v612, %v626
        %v629 = vmul.f32 %v616, %v627
        %v630 = vmul.f32 %v621, %v627
        %vm631 = vcmp.gt.f32.partialorder %v629, 0.5
        %vm632 = vcmp.gt.f32.partialorder %v630, 0.5
        %v633 = vlaneseq
        %v634 = vshrl.u32 %v633, 7
        %v635 = vadd.s32 %v634, 8
        %s636 = smul.u32 %s27, 16
        %v637 = vstv %s636
        %v638 = vadd.s32 %v634, %v637
        %v639 = vadd.s32 %v635, %v637
        %v640 = vlaneseq
        %v641 = vand.u32 %v640, 127
        %vm642 = vcmp.gt.s32.totalorder %v638, %v641
        %vm643 = vcmp.gt.s32.totalorder %v639, %v641
        %v644 = vsel %vm642, 1e+12, 0.0
        %v645 = vsel %vm643, 1e+12, 0.0
        %647 = vset.pattern.permute.xlu0 0
        %648 = vperm.xlu0 %647, %v549
        %v649 = vpop.permute.xlu0 %648
        %652 = vset.pattern.permute.xlu0 0
        %653 = vperm.xlu0 %652, %v552
        %v654 = vpop.permute.xlu0 %653
        %v657 = vsel %vm447, %v494, 0
        %659 = vmatprep.subr.bf16.mxu0 0
        %660 = vmatpush1.bf16.msra.mxu0 %v563
        %661 = vmatprep.subr.bf16.mxu0 0
        %662 = vmatpush1.bf16.msra.mxu0 %v564
        %663 = vmatprep.subr.bf16.mxu0 0
        %664 = vmatpush1.bf16.msra.mxu0 0
        %665 = vmatprep.subr.bf16.mxu0 0
        %666 = vmatpush1.bf16.msra.mxu0 0
        %667 = vmatprep.subr.bf16.mxu0 0
        %668 = vmatpush1.bf16.msra.mxu0 0
        %669 = vmatprep.subr.bf16.mxu0 0
        %670 = vmatpush1.bf16.msra.mxu0 0
        %671 = vmatprep.subr.bf16.mxu0 0
        %672 = vmatpush1.bf16.msra.mxu0 0
        %673 = vmatprep.subr.bf16.mxu0 0
        %674 = vmatpush1.bf16.msra.mxu0 0
        %675 = vmatprep.subr.bf16.mxu0 0
        %676 = vmatpush1.bf16.msra.mxu0 0
        %677 = vmatprep.subr.bf16.mxu0 0
        %678 = vmatpush1.bf16.msra.mxu0 0
        %679 = vmatprep.subr.bf16.mxu0 0
        %680 = vmatpush1.bf16.msra.mxu0 0
        %681 = vmatprep.subr.bf16.mxu0 0
        %682 = vmatpush1.bf16.msra.mxu0 0
        %683 = vmatprep.subr.bf16.mxu0 0
        %684 = vmatpush1.bf16.msra.mxu0 0
        %685 = vmatprep.subr.bf16.mxu0 0
        %686 = vmatpush1.bf16.msra.mxu0 0
        %687 = vmatprep.subr.bf16.mxu0 0
        %688 = vmatpush1.bf16.msra.mxu0 0
        %689 = vmatprep.subr.bf16.mxu0 0
        %690 = vmatpush1.bf16.msra.mxu0 0
        %691 = vmatprep.mubr.bf16.mxu0 0
        %692 = vmatmul.mubr.bf16.gmra.mrb[0].mxu0 %v657
        %v693 = vpop.f32.mrb[0].mxu0
        %v694 = vadd.f32 %v649, %v693
        %v695 = vpop.f32.mrb[0].mxu0
        %v696 = vpop.f32.mrb[0].mxu0
        %v697 = vadd.f32 %v654, %v696
        %v698 = vpop.f32.mrb[0].mxu0
        %699 = vdwg.mxu0
        %v700 = vlaneseq
        %v701 = vshrl.u32 %v700, 7
        %v702 = vsub.s32 0, %v701
        %v703 = vrot.slane %v605, %v702
        %v704 = vadd.f32 %v694, %v703
        %v705 = vadd.f32 %v697, %v703
        %v706 = vsel %vm631, %v704, -1e+12
        %v707 = vsel %vm632, %v705, -1e+12
        %v708 = vsub.f32 %v706, %v644
        %v709 = vsub.f32 %v707, %v645
        %vm710 = vcmask 130048
        %711 = vst.msk [vmem:[%s375] sm:$0xff] %vm710, %v708
        %712 = vst.msk [vmem:[%s375 + $0x8] sm:$0xff] %vm710, %v709
        %713 = vset.pattern.permute.xlu0 1
        %714 = vperm.xlu0 %713, %v549
        %v715 = vpop.permute.xlu0 %714
        %717 = vset.pattern.permute.xlu0 1
        %718 = vperm.xlu0 %717, %v552
        %v719 = vpop.permute.xlu0 %718
        %722 = vrot.lane.b32.xlu0 %v494, 96
        %v723 = vpop.permute.xlu0 %722
        %v725 = vsel %vm447, %v723, 0
        %727 = vmatprep.subr.bf16.mxu0 0
        %728 = vmatpush1.bf16.msra.mxu0 %v563
        %729 = vmatprep.subr.bf16.mxu0 0
        %730 = vmatpush1.bf16.msra.mxu0 %v564
        %731 = vmatprep.subr.bf16.mxu0 0
        %732 = vmatpush1.bf16.msra.mxu0 0
        %733 = vmatprep.subr.bf16.mxu0 0
        %734 = vmatpush1.bf16.msra.mxu0 0
        %735 = vmatprep.subr.bf16.mxu0 0
        %736 = vmatpush1.bf16.msra.mxu0 0
        %737 = vmatprep.subr.bf16.mxu0 0
        %738 = vmatpush1.bf16.msra.mxu0 0
        %739 = vmatprep.subr.bf16.mxu0 0
        %740 = vmatpush1.bf16.msra.mxu0 0
        %741 = vmatprep.subr.bf16.mxu0 0
        %742 = vmatpush1.bf16.msra.mxu0 0
        %743 = vmatprep.subr.bf16.mxu0 0
        %744 = vmatpush1.bf16.msra.mxu0 0
        %745 = vmatprep.subr.bf16.mxu0 0
        %746 = vmatpush1.bf16.msra.mxu0 0
        %747 = vmatprep.subr.bf16.mxu0 0
        %748 = vmatpush1.bf16.msra.mxu0 0
        %749 = vmatprep.subr.bf16.mxu0 0
        %750 = vmatpush1.bf16.msra.mxu0 0
        %751 = vmatprep.subr.bf16.mxu0 0
        %752 = vmatpush1.bf16.msra.mxu0 0
        %753 = vmatprep.subr.bf16.mxu0 0
        %754 = vmatpush1.bf16.msra.mxu0 0
        %755 = vmatprep.subr.bf16.mxu0 0
        %756 = vmatpush1.bf16.msra.mxu0 0
        %757 = vmatprep.subr.bf16.mxu0 0
        %758 = vmatpush1.bf16.msra.mxu0 0
        %759 = vmatprep.mubr.bf16.mxu0 0
        %760 = vmatmul.mubr.bf16.gmra.mrb[0].mxu0 %v725
        %v761 = vpop.f32.mrb[0].mxu0
        %v762 = vadd.f32 %v715, %v761
        %v763 = vpop.f32.mrb[0].mxu0
        %v764 = vpop.f32.mrb[0].mxu0
        %v765 = vadd.f32 %v719, %v764
        %v766 = vpop.f32.mrb[0].mxu0
        %767 = vdwg.mxu0
        %v768 = vlaneseq
        %v769 = vshrl.u32 %v768, 7
        %v770 = vsub.s32 1, %v769
        %v771 = vrot.slane %v605, %v770
        %v772 = vadd.f32 %v762, %v771
        %v773 = vadd.f32 %v765, %v771
        %v774 = vsel %vm631, %v772, -1e+12
        %v775 = vsel %vm632, %v773, -1e+12
        %v776 = vsub.f32 %v774, %v644
        %v777 = vsub.f32 %v775, %v645
        %s778 = scalar_lea.vmem %s375, 16 [#allocation2]
        %779 = vst.msk [vmem:[%s778] sm:$0xff] %vm710, %v776
        %780 = vst.msk [vmem:[%s778 + $0x8] sm:$0xff] %vm710, %v777
        %781 = vset.pattern.permute.xlu0 2
        %782 = vperm.xlu0 %781, %v549
        %v783 = vpop.permute.xlu0 %782
        %785 = vset.pattern.permute.xlu0 2
        %786 = vperm.xlu0 %785, %v552
        %v787 = vpop.permute.xlu0 %786
        %789 = vrot.lane.b32.xlu0 %v494, 64
        %v790 = vpop.permute.xlu0 %789
        %v792 = vsel %vm447, %v790, 0
        %794 = vmatprep.subr.bf16.mxu0 0
        %795 = vmatpush1.bf16.msra.mxu0 %v563
        %796 = vmatprep.subr.bf16.mxu0 0
        %797 = vmatpush1.bf16.msra.mxu0 %v564
        %798 = vmatprep.subr.bf16.mxu0 0
        %799 = vmatpush1.bf16.msra.mxu0 0
        %800 = vmatprep.subr.bf16.mxu0 0
        %801 = vmatpush1.bf16.msra.mxu0 0
        %802 = vmatprep.subr.bf16.mxu0 0
        %803 = vmatpush1.bf16.msra.mxu0 0
        %804 = vmatprep.subr.bf16.mxu0 0
        %805 = vmatpush1.bf16.msra.mxu0 0
        %806 = vmatprep.subr.bf16.mxu0 0
        %807 = vmatpush1.bf16.msra.mxu0 0
        %808 = vmatprep.subr.bf16.mxu0 0
        %809 = vmatpush1.bf16.msra.mxu0 0
        %810 = vmatprep.subr.bf16.mxu0 0
        %811 = vmatpush1.bf16.msra.mxu0 0
        %812 = vmatprep.subr.bf16.mxu0 0
        %813 = vmatpush1.bf16.msra.mxu0 0
        %814 = vmatprep.subr.bf16.mxu0 0
        %815 = vmatpush1.bf16.msra.mxu0 0
        %816 = vmatprep.subr.bf16.mxu0 0
        %817 = vmatpush1.bf16.msra.mxu0 0
        %818 = vmatprep.subr.bf16.mxu0 0
        %819 = vmatpush1.bf16.msra.mxu0 0
        %820 = vmatprep.subr.bf16.mxu0 0
        %821 = vmatpush1.bf16.msra.mxu0 0
        %822 = vmatprep.subr.bf16.mxu0 0
        %823 = vmatpush1.bf16.msra.mxu0 0
        %824 = vmatprep.subr.bf16.mxu0 0
        %825 = vmatpush1.bf16.msra.mxu0 0
        %826 = vmatprep.mubr.bf16.mxu0 0
        %827 = vmatmul.mubr.bf16.gmra.mrb[0].mxu0 %v792
        %v828 = vpop.f32.mrb[0].mxu0
        %v829 = vadd.f32 %v783, %v828
        %v830 = vpop.f32.mrb[0].mxu0
        %v831 = vpop.f32.mrb[0].mxu0
        %v832 = vadd.f32 %v787, %v831
        %v833 = vpop.f32.mrb[0].mxu0
        %834 = vdwg.mxu0
        %v835 = vlaneseq
        %v836 = vshrl.u32 %v835, 7
        %v837 = vsub.s32 2, %v836
        %v838 = vrot.slane %v605, %v837
        %v839 = vadd.f32 %v829, %v838
        %v840 = vadd.f32 %v832, %v838
        %v841 = vsel %vm631, %v839, -1e+12
        %v842 = vsel %vm632, %v840, -1e+12
        %v843 = vsub.f32 %v841, %v644
        %v844 = vsub.f32 %v842, %v645
        %s845 = scalar_lea.vmem %s375, 32 [#allocation2]
        %846 = vst.msk [vmem:[%s845] sm:$0xff] %vm710, %v843
        %847 = vst.msk [vmem:[%s845 + $0x8] sm:$0xff] %vm710, %v844
        %848 = vset.pattern.permute.xlu0 3
        %849 = vperm.xlu0 %848, %v549
        %v850 = vpop.permute.xlu0 %849
        %852 = vset.pattern.permute.xlu0 3
        %853 = vperm.xlu0 %852, %v552
        %v854 = vpop.permute.xlu0 %853
        %856 = vrot.lane.b32.xlu0 %v494, 32
        %v857 = vpop.permute.xlu0 %856
        %v859 = vsel %vm447, %v857, 0
        %861 = vmatprep.subr.bf16.mxu0 0
        %862 = vmatpush1.bf16.msra.mxu0 %v563
        %863 = vmatprep.subr.bf16.mxu0 0
        %864 = vmatpush1.bf16.msra.mxu0 %v564
        %865 = vmatprep.subr.bf16.mxu0 0
        %866 = vmatpush1.bf16.msra.mxu0 0
        %867 = vmatprep.subr.bf16.mxu0 0
        %868 = vmatpush1.bf16.msra.mxu0 0
        %869 = vmatprep.subr.bf16.mxu0 0
        %870 = vmatpush1.bf16.msra.mxu0 0
        %871 = vmatprep.subr.bf16.mxu0 0
        %872 = vmatpush1.bf16.msra.mxu0 0
        %873 = vmatprep.subr.bf16.mxu0 0
        %874 = vmatpush1.bf16.msra.mxu0 0
        %875 = vmatprep.subr.bf16.mxu0 0
        %876 = vmatpush1.bf16.msra.mxu0 0
        %877 = vmatprep.subr.bf16.mxu0 0
        %878 = vmatpush1.bf16.msra.mxu0 0
        %879 = vmatprep.subr.bf16.mxu0 0
        %880 = vmatpush1.bf16.msra.mxu0 0
        %881 = vmatprep.subr.bf16.mxu0 0
        %882 = vmatpush1.bf16.msra.mxu0 0
        %883 = vmatprep.subr.bf16.mxu0 0
        %884 = vmatpush1.bf16.msra.mxu0 0
        %885 = vmatprep.subr.bf16.mxu0 0
        %886 = vmatpush1.bf16.msra.mxu0 0
        %887 = vmatprep.subr.bf16.mxu0 0
        %888 = vmatpush1.bf16.msra.mxu0 0
        %889 = vmatprep.subr.bf16.mxu0 0
        %890 = vmatpush1.bf16.msra.mxu0 0
        %891 = vmatprep.subr.bf16.mxu0 0
        %892 = vmatpush1.bf16.msra.mxu0 0
        %893 = vmatprep.mubr.bf16.mxu0 0
        %894 = vmatmul.mubr.bf16.gmra.mrb[0].mxu0 %v859
        %v895 = vpop.f32.mrb[0].mxu0
        %v896 = vadd.f32 %v850, %v895
        %v897 = vpop.f32.mrb[0].mxu0
        %v898 = vpop.f32.mrb[0].mxu0
        %v899 = vadd.f32 %v854, %v898
        %v900 = vpop.f32.mrb[0].mxu0
        %901 = vdwg.mxu0
        %v902 = vlaneseq
        %v903 = vshrl.u32 %v902, 7
        %v904 = vsub.s32 3, %v903
        %v905 = vrot.slane %v605, %v904
        %v906 = vadd.f32 %v896, %v905
        %v907 = vadd.f32 %v899, %v905
        %v908 = vsel %vm631, %v906, -1e+12
        %v909 = vsel %vm632, %v907, -1e+12
        %v910 = vsub.f32 %v908, %v644
        %v911 = vsub.f32 %v909, %v645
        %s912 = scalar_lea.vmem %s375, 48 [#allocation2]
        %913 = vst.msk [vmem:[%s912] sm:$0xff] %vm710, %v910
        %914 = vst.msk [vmem:[%s912 + $0x8] sm:$0xff] %vm710, %v911
        %915 = vset.pattern.permute.xlu0 4
        %916 = vperm.xlu0 %915, %v549
        %v917 = vpop.permute.xlu0 %916
        %919 = vset.pattern.permute.xlu0 4
        %920 = vperm.xlu0 %919, %v552
        %v921 = vpop.permute.xlu0 %920
        %v924 = vsel %vm447, %v495, 0
        %926 = vmatprep.subr.bf16.mxu0 0
        %927 = vmatpush1.bf16.msra.mxu0 %v563
        %928 = vmatprep.subr.bf16.mxu0 0
        %929 = vmatpush1.bf16.msra.mxu0 %v564
        %930 = vmatprep.subr.bf16.mxu0 0
        %931 = vmatpush1.bf16.msra.mxu0 0
        %932 = vmatprep.subr.bf16.mxu0 0
        %933 = vmatpush1.bf16.msra.mxu0 0
        %934 = vmatprep.subr.bf16.mxu0 0
        %935 = vmatpush1.bf16.msra.mxu0 0
        %936 = vmatprep.subr.bf16.mxu0 0
        %937 = vmatpush1.bf16.msra.mxu0 0
        %938 = vmatprep.subr.bf16.mxu0 0
        %939 = vmatpush1.bf16.msra.mxu0 0
        %940 = vmatprep.subr.bf16.mxu0 0
        %941 = vmatpush1.bf16.msra.mxu0 0
        %942 = vmatprep.subr.bf16.mxu0 0
        %943 = vmatpush1.bf16.msra.mxu0 0
        %944 = vmatprep.subr.bf16.mxu0 0
        %945 = vmatpush1.bf16.msra.mxu0 0
        %946 = vmatprep.subr.bf16.mxu0 0
        %947 = vmatpush1.bf16.msra.mxu0 0
        %948 = vmatprep.subr.bf16.mxu0 0
        %949 = vmatpush1.bf16.msra.mxu0 0
        %950 = vmatprep.subr.bf16.mxu0 0
        %951 = vmatpush1.bf16.msra.mxu0 0
        %952 = vmatprep.subr.bf16.mxu0 0
        %953 = vmatpush1.bf16.msra.mxu0 0
        %954 = vmatprep.subr.bf16.mxu0 0
        %955 = vmatpush1.bf16.msra.mxu0 0
        %956 = vmatprep.subr.bf16.mxu0 0
        %957 = vmatpush1.bf16.msra.mxu0 0
        %958 = vmatprep.mubr.bf16.mxu0 0
        %959 = vmatmul.mubr.bf16.gmra.mrb[0].mxu0 %v924
        %v960 = vpop.f32.mrb[0].mxu0
        %v961 = vadd.f32 %v917, %v960
        %v962 = vpop.f32.mrb[0].mxu0
        %v963 = vpop.f32.mrb[0].mxu0
        %v964 = vadd.f32 %v921, %v963
        %v965 = vpop.f32.mrb[0].mxu0
        %966 = vdwg.mxu0
        %v967 = vlaneseq
        %v968 = vshrl.u32 %v967, 7
        %v969 = vsub.s32 4, %v968
        %v970 = vrot.slane %v605, %v969
        %v971 = vadd.f32 %v961, %v970
        %v972 = vadd.f32 %v964, %v970
        %v973 = vsel %vm631, %v971, -1e+12
        %v974 = vsel %vm632, %v972, -1e+12
        %v975 = vsub.f32 %v973, %v644
        %v976 = vsub.f32 %v974, %v645
        %s977 = scalar_lea.vmem %s375, 64 [#allocation2]
        %978 = vst.msk [vmem:[%s977] sm:$0xff] %vm710, %v975
        %979 = vst.msk [vmem:[%s977 + $0x8] sm:$0xff] %vm710, %v976
        %980 = vset.pattern.permute.xlu0 5
        %981 = vperm.xlu0 %980, %v549
        %v982 = vpop.permute.xlu0 %981
        %984 = vset.pattern.permute.xlu0 5
        %985 = vperm.xlu0 %984, %v552
        %v986 = vpop.permute.xlu0 %985
        %989 = vrot.lane.b32.xlu0 %v495, 96
        %v990 = vpop.permute.xlu0 %989
        %v992 = vsel %vm447, %v990, 0
        %994 = vmatprep.subr.bf16.mxu0 0
        %995 = vmatpush1.bf16.msra.mxu0 %v563
        %996 = vmatprep.subr.bf16.mxu0 0
        %997 = vmatpush1.bf16.msra.mxu0 %v564
        %998 = vmatprep.subr.bf16.mxu0 0
        %999 = vmatpush1.bf16.msra.mxu0 0
        %1000 = vmatprep.subr.bf16.mxu0 0
        %1001 = vmatpush1.bf16.msra.mxu0 0
        %1002 = vmatprep.subr.bf16.mxu0 0
        %1003 = vmatpush1.bf16.msra.mxu0 0
        %1004 = vmatprep.subr.bf16.mxu0 0
        %1005 = vmatpush1.bf16.msra.mxu0 0
        %1006 = vmatprep.subr.bf16.mxu0 0
        %1007 = vmatpush1.bf16.msra.mxu0 0
        %1008 = vmatprep.subr.bf16.mxu0 0
        %1009 = vmatpush1.bf16.msra.mxu0 0
        %1010 = vmatprep.subr.bf16.mxu0 0
        %1011 = vmatpush1.bf16.msra.mxu0 0
        %1012 = vmatprep.subr.bf16.mxu0 0
        %1013 = vmatpush1.bf16.msra.mxu0 0
        %1014 = vmatprep.subr.bf16.mxu0 0
        %1015 = vmatpush1.bf16.msra.mxu0 0
        %1016 = vmatprep.subr.bf16.mxu0 0
        %1017 = vmatpush1.bf16.msra.mxu0 0
        %1018 = vmatprep.subr.bf16.mxu0 0
        %1019 = vmatpush1.bf16.msra.mxu0 0
        %1020 = vmatprep.subr.bf16.mxu0 0
        %1021 = vmatpush1.bf16.msra.mxu0 0
        %1022 = vmatprep.subr.bf16.mxu0 0
        %1023 = vmatpush1.bf16.msra.mxu0 0
        %1024 = vmatprep.subr.bf16.mxu0 0
        %1025 = vmatpush1.bf16.msra.mxu0 0
        %1026 = vmatprep.mubr.bf16.mxu0 0
        %1027 = vmatmul.mubr.bf16.gmra.mrb[0].mxu0 %v992
        %v1028 = vpop.f32.mrb[0].mxu0
        %v1029 = vadd.f32 %v982, %v1028
        %v1030 = vpop.f32.mrb[0].mxu0
        %v1031 = vpop.f32.mrb[0].mxu0
        %v1032 = vadd.f32 %v986, %v1031
        %v1033 = vpop.f32.mrb[0].mxu0
        %1034 = vdwg.mxu0
        %v1035 = vlaneseq
        %v1036 = vshrl.u32 %v1035, 7
        %v1037 = vsub.s32 5, %v1036
        %v1038 = vrot.slane %v605, %v1037
        %v1039 = vadd.f32 %v1029, %v1038
        %v1040 = vadd.f32 %v1032, %v1038
        %v1041 = vsel %vm631, %v1039, -1e+12
        %v1042 = vsel %vm632, %v1040, -1e+12
        %v1043 = vsub.f32 %v1041, %v644
        %v1044 = vsub.f32 %v1042, %v645
        %s1045 = scalar_lea.vmem %s375, 80 [#allocation2]
        %1046 = vst.msk [vmem:[%s1045] sm:$0xff] %vm710, %v1043
        %1047 = vst.msk [vmem:[%s1045 + $0x8] sm:$0xff] %vm710, %v1044
        %1048 = vset.pattern.permute.xlu0 6
        %1049 = vperm.xlu0 %1048, %v549
        %v1050 = vpop.permute.xlu0 %1049
        %1052 = vset.pattern.permute.xlu0 6
        %1053 = vperm.xlu0 %1052, %v552
        %v1054 = vpop.permute.xlu0 %1053
        %1056 = vrot.lane.b32.xlu0 %v495, 64
        %v1057 = vpop.permute.xlu0 %1056
        %v1059 = vsel %vm447, %v1057, 0
        %1061 = vmatprep.subr.bf16.mxu0 0
        %1062 = vmatpush1.bf16.msra.mxu0 %v563
        %1063 = vmatprep.subr.bf16.mxu0 0
        %1064 = vmatpush1.bf16.msra.mxu0 %v564
        %1065 = vmatprep.subr.bf16.mxu0 0
        %1066 = vmatpush1.bf16.msra.mxu0 0
        %1067 = vmatprep.subr.bf16.mxu0 0
        %1068 = vmatpush1.bf16.msra.mxu0 0
        %1069 = vmatprep.subr.bf16.mxu0 0
        %1070 = vmatpush1.bf16.msra.mxu0 0
        %1071 = vmatprep.subr.bf16.mxu0 0
        %1072 = vmatpush1.bf16.msra.mxu0 0
        %1073 = vmatprep.subr.bf16.mxu0 0
        %1074 = vmatpush1.bf16.msra.mxu0 0
        %1075 = vmatprep.subr.bf16.mxu0 0
        %1076 = vmatpush1.bf16.msra.mxu0 0
        %1077 = vmatprep.subr.bf16.mxu0 0
        %1078 = vmatpush1.bf16.msra.mxu0 0
        %1079 = vmatprep.subr.bf16.mxu0 0
        %1080 = vmatpush1.bf16.msra.mxu0 0
        %1081 = vmatprep.subr.bf16.mxu0 0
        %1082 = vmatpush1.bf16.msra.mxu0 0
        %1083 = vmatprep.subr.bf16.mxu0 0
        %1084 = vmatpush1.bf16.msra.mxu0 0
        %1085 = vmatprep.subr.bf16.mxu0 0
        %1086 = vmatpush1.bf16.msra.mxu0 0
        %1087 = vmatprep.subr.bf16.mxu0 0
        %1088 = vmatpush1.bf16.msra.mxu0 0
        %1089 = vmatprep.subr.bf16.mxu0 0
        %1090 = vmatpush1.bf16.msra.mxu0 0
        %1091 = vmatprep.subr.bf16.mxu0 0
        %1092 = vmatpush1.bf16.msra.mxu0 0
        %1093 = vmatprep.mubr.bf16.mxu0 0
        %1094 = vmatmul.mubr.bf16.gmra.mrb[0].mxu0 %v1059
        %v1095 = vpop.f32.mrb[0].mxu0
        %v1096 = vadd.f32 %v1050, %v1095
        %v1097 = vpop.f32.mrb[0].mxu0
        %v1098 = vpop.f32.mrb[0].mxu0
        %v1099 = vadd.f32 %v1054, %v1098
        %v1100 = vpop.f32.mrb[0].mxu0
        %1101 = vdwg.mxu0
        %v1102 = vlaneseq
        %v1103 = vshrl.u32 %v1102, 7
        %v1104 = vsub.s32 6, %v1103
        %v1105 = vrot.slane %v605, %v1104
        %v1106 = vadd.f32 %v1096, %v1105
        %v1107 = vadd.f32 %v1099, %v1105
        %v1108 = vsel %vm631, %v1106, -1e+12
        %v1109 = vsel %vm632, %v1107, -1e+12
        %v1110 = vsub.f32 %v1108, %v644
        %v1111 = vsub.f32 %v1109, %v645
        %s1112 = scalar_lea.vmem %s375, 96 [#allocation2]
        %1113 = vst.msk [vmem:[%s1112] sm:$0xff] %vm710, %v1110
        %1114 = vst.msk [vmem:[%s1112 + $0x8] sm:$0xff] %vm710, %v1111
        %1115 = vset.pattern.permute.xlu0 7
        %1116 = vperm.xlu0 %1115, %v549
        %v1117 = vpop.permute.xlu0 %1116
        %1119 = vset.pattern.permute.xlu0 7
        %1120 = vperm.xlu0 %1119, %v552
        %v1121 = vpop.permute.xlu0 %1120
        %1123 = vrot.lane.b32.xlu0 %v495, 32
        %v1124 = vpop.permute.xlu0 %1123
        %v1126 = vsel %vm447, %v1124, 0
        %1128 = vmatprep.subr.bf16.mxu0 0
        %1129 = vmatpush1.bf16.msra.mxu0 %v563
        %1130 = vmatprep.subr.bf16.mxu0 0
        %1131 = vmatpush1.bf16.msra.mxu0 %v564
        %1132 = vmatprep.subr.bf16.mxu0 0
        %1133 = vmatpush1.bf16.msra.mxu0 0
        %1134 = vmatprep.subr.bf16.mxu0 0
        %1135 = vmatpush1.bf16.msra.mxu0 0
        %1136 = vmatprep.subr.bf16.mxu0 0
        %1137 = vmatpush1.bf16.msra.mxu0 0
        %1138 = vmatprep.subr.bf16.mxu0 0
        %1139 = vmatpush1.bf16.msra.mxu0 0
        %1140 = vmatprep.subr.bf16.mxu0 0
        %1141 = vmatpush1.bf16.msra.mxu0 0
        %1142 = vmatprep.subr.bf16.mxu0 0
        %1143 = vmatpush1.bf16.msra.mxu0 0
        %1144 = vmatprep.subr.bf16.mxu0 0
        %1145 = vmatpush1.bf16.msra.mxu0 0
        %1146 = vmatprep.subr.bf16.mxu0 0
        %1147 = vmatpush1.bf16.msra.mxu0 0
        %1148 = vmatprep.subr.bf16.mxu0 0
        %1149 = vmatpush1.bf16.msra.mxu0 0
        %1150 = vmatprep.subr.bf16.mxu0 0
        %1151 = vmatpush1.bf16.msra.mxu0 0
        %1152 = vmatprep.subr.bf16.mxu0 0
        %1153 = vmatpush1.bf16.msra.mxu0 0
        %1154 = vmatprep.subr.bf16.mxu0 0
        %1155 = vmatpush1.bf16.msra.mxu0 0
        %1156 = vmatprep.subr.bf16.mxu0 0
        %1157 = vmatpush1.bf16.msra.mxu0 0
        %1158 = vmatprep.subr.bf16.mxu0 0
        %1159 = vmatpush1.bf16.msra.mxu0 0
        %1160 = vmatprep.mubr.bf16.mxu0 0
        %1161 = vmatmul.mubr.bf16.gmra.mrb[0].mxu0 %v1126
        %v1162 = vpop.f32.mrb[0].mxu0
        %v1163 = vadd.f32 %v1117, %v1162
        %v1164 = vpop.f32.mrb[0].mxu0
        %v1165 = vpop.f32.mrb[0].mxu0
        %v1166 = vadd.f32 %v1121, %v1165
        %v1167 = vpop.f32.mrb[0].mxu0
        %1168 = vdwg.mxu0
        %v1169 = vlaneseq
        %v1170 = vshrl.u32 %v1169, 7
        %v1171 = vsub.s32 7, %v1170
        %v1172 = vrot.slane %v605, %v1171
        %v1173 = vadd.f32 %v1163, %v1172
        %v1174 = vadd.f32 %v1166, %v1172
        %v1175 = vsel %vm631, %v1173, -1e+12
        %v1176 = vsel %vm632, %v1174, -1e+12
        %v1177 = vsub.f32 %v1175, %v644
        %v1178 = vsub.f32 %v1176, %v645
        %s1179 = scalar_lea.vmem %s375, 112 [#allocation2]
        %1180 = vst.msk [vmem:[%s1179] sm:$0xff] %vm710, %v1177
        %1181 = vst.msk [vmem:[%s1179 + $0x8] sm:$0xff] %vm710, %v1178
        %s1182 = sand.u32 %s236, 1
        %s1183 = scalar_lea.sflag [#allocation3], %s1182
        %s1184 = sand.u32 %s236, 1
        %s1185 = smul.addr %s1184, 128
        %s1186 = scalar_lea.vmem [#allocation2], %s1185
        // Predicated region
        $region53: #{tpu_custom_call.1} parent=51 // pred_check
          %p1187 = pneg %p246
        $region54: #{tpu_custom_call.1} parent=51 // pred_check_branch
          %1189 = sbr.rel (%p1187) target = $region56
        $region55: #{tpu_custom_call.1} parent=51 // pred_region
          %s1190 = smul.u32 2, %s27
          %s1192 = ssub.s32 2048, 2048
          %1193 = vsyncadd %s1183, %s1192
          %s1194 = smul.addr %s26, 16
          %s1195 = sadd.s32 %s1190, %s1194
          %s1196 = smul.addr %s1195, 128
          %s1197 = scalar_lea.hbm %s8, %s1196
          %s1198 = sshll.u32 %s1186, 4
          %s1199 = int_to_ptr.vmem [resolvable:$true] %s1198
          %1204 = dma.vmem_to_hbm [thread:$0]  %s1199, 2048, %s1197, %s1183, 128, 128, 8
        $region56: #{tpu_custom_call.1} parent=51 // pred_fallthru
          _
      $region52: #{tpu_custom_call.1} parent=5 // pred_fallthru
        _
      %p1205 = scmp.le.s32.totalorder 2, %s17
      // Predicated region
      $region57: #{tpu_custom_call.1} parent=5 // pred_check
        %p1206 = pneg %p1205
      $region58: #{tpu_custom_call.1} parent=5 // pred_check_branch
        %1208 = sbr.rel (%p1206) target = $region60
      $region59: #{tpu_custom_call.1} parent=5 // pred_region
        %s1209 = ssub.s32 %s17, 2
        // Predicated region
        $region61: #{tpu_custom_call.1} parent=59 // pred_check
          %p1210 = pneg %p252
        $region62: #{tpu_custom_call.1} parent=59 // pred_check_branch
          %1212 = sbr.rel (%p1210) target = $region64
        $region63: #{tpu_custom_call.1} parent=59 // pred_region
          %s1213 = sand.u32 %s237, 1
          %s1214 = scalar_lea.sflag [#allocation3], %s1213
          %s1215 = sand.u32 %s237, 1
          %s1216 = smul.addr %s1215, 128
          %s1217 = scalar_lea.vmem [#allocation2], %s1216
          %1218 = dma.done %s1214, 2048
        $region64: #{tpu_custom_call.1} parent=59 // pred_fallthru
          _
      $region60: #{tpu_custom_call.1} parent=5 // pred_fallthru
        _
    $region6: #{tpu_custom_call.1} parent=1 // loop_footer
      %s21 = sadd.s32 1, %s17
    $region7: #{tpu_custom_call.1} parent=1 // loop_footer_branch
      %16 = sbr.rel target = $region3
    $region8: #{tpu_custom_call.1} parent=1 // loop_exit
      _
    %1219 = vsyncpa [#allocation3], 1
    %s1220 = scalar_lea.sflag [#allocation3], 1
    %1221 = vsyncpa %s1220, 1

</llo_original>
